<compile_context>
chip_gen: v6e
topology: v6e:2x2x1
jax: 0.10.0
libtpu: 0.0.40
codegen_flags: <defaults>
</compile_context>

<pallas_src>
import math

import jax
import jax.numpy as jnp
from jax.experimental import pallas as pl
from jax.experimental.pallas import tpu as pltpu


def conv2d_permute_pallas(x_nchw, w_oihw, bias):
    """Valid (no padding, stride 1) Conv2d + permute([0,2,1,3]); returns (v1, v2)."""
    N, Cin, H, W = x_nchw.shape
    Cout, _, KH, KW = w_oihw.shape
    OH, OW = H - KH + 1, W - KW + 1

    M = N * H * W                                    # flattened (n, h, w) -> lane axis
    M_pad = ((M + 127) // 128) * 128                 # 512 here -> no actual padding
    Cin_pad = (((Cin + 1) + 7) // 8) * 8             # +1 leaves room for the all-ones bias row
    Cout_pad = ((Cout + 7) // 8) * 8
    max_shift = (KH - 1) * W + (KW - 1)
    assert max_shift < M                             # rolled reads stay inside the slab

    # ---- x as one lane-flat slab (Cin_pad, M_pad); row Cin is all-ones (bias lane) ----
    x_t = jnp.transpose(x_nchw, (1, 0, 2, 3)).reshape(Cin, M).astype(jnp.float32)
    x_slab = jnp.concatenate(
        [x_t,
         jnp.ones((1, M), jnp.float32),
         jnp.zeros((Cin_pad - Cin - 1, M), jnp.float32)], axis=0)
    if M_pad != M:
        x_slab = jnp.pad(x_slab, ((0, 0), (0, M_pad - M)))

    # ---- weight as (KH*KW, Cout_pad, Cin_pad) blocks; bias folded into block 0, col Cin ----
    w_t = jnp.transpose(w_oihw, (2, 3, 0, 1)).astype(jnp.float32)       # (KH, KW, Cout, Cin)
    w_t = jnp.pad(w_t, ((0, 0), (0, 0), (0, Cout_pad - Cout), (0, Cin_pad - Cin)))
    w_stack = w_t.reshape(KH * KW, Cout_pad, Cin_pad)
    w_stack = w_stack.at[0, :Cout, Cin].set(bias.astype(jnp.float32))   # bias * ones-row

    def conv_kernel(x_ref, w_ref, o_ref):
        # x_ref: (Cin_pad, M_pad)  lane-flat input slab (row Cin == 1.0 everywhere)
        # w_ref: (KH*KW, Cout_pad, Cin_pad) per-tap weight blocks (bias folded in block 0)
        # o_ref: (Cout_pad, M_pad) lane-dense output slab
        x = x_ref[...]
        acc = None
        for kh in range(KH):
            for kw in range(KW):
                s = kh * W + kw
                # left-shift lanes by s: rolled[c, i] == x[c, i + s]  (XLU, overlaps MXU)
                xk = x if s == 0 else pltpu.roll(x, shift=(-s) % M_pad, axis=1)
                wk = w_ref[kh * KW + kw]                       # (Cout_pad, Cin_pad)
                d = jnp.dot(wk, xk, preferred_element_type=jnp.float32,
                            precision=jax.lax.Precision.HIGHEST)
                acc = d if acc is None else acc + d
        o_ref[...] = acc                                       # unmasked lane-dense store

    out_slab = pl.pallas_call(
        conv_kernel,
        out_shape=jax.ShapeDtypeStruct((Cout_pad, M_pad), jnp.float32),
        in_specs=[
            pl.BlockSpec((Cin_pad, M_pad), lambda: (0, 0)),
            pl.BlockSpec((KH * KW, Cout_pad, Cin_pad), lambda: (0, 0, 0)),
        ],
        out_specs=pl.BlockSpec((Cout_pad, M_pad), lambda: (0, 0)),
    )(x_slab, w_stack)

    # ---- unpack lane-dense slab back into the PyTorch-facing shapes (layout plumbing) ----
    out_r = out_slab[:Cout, :M].reshape(Cout, N, H, W)[:, :, :OH, :OW]  # (Cout, N, OH, OW)
    v1 = jnp.transpose(out_r, (1, 0, 2, 3))   # (N, Cout, OH, OW)  == conv(x)
    v2 = jnp.transpose(out_r, (1, 2, 0, 3))   # (N, OH, Cout, OW)  == v1.permute([0,2,1,3])
    return v1, v2


if __name__ == "__main__":
    # Deterministic parameter / input construction (PyTorch-style conv init bounds).
    key = jax.random.PRNGKey(0)
    k_w, k_b, k_x = jax.random.split(key, 3)

    N, Cin, H, W = 2, 3, 16, 16
    Cout, KH, KW = 2, 2, 2

    fan_in = Cin * KH * KW
    bound = 1.0 / math.sqrt(float(fan_in))
    weight = jax.random.uniform(k_w, (Cout, Cin, KH, KW), jnp.float32, -bound, bound)
    bias = jax.random.uniform(k_b, (Cout,), jnp.float32, -bound, bound)
    x = jax.random.normal(k_x, (N, Cin, H, W), jnp.float32)

    fwd = jax.jit(conv2d_permute_pallas)      # fuses the small wrapper layout ops
    v1, v2 = fwd(x, weight, bias)
    jax.block_until_ready((v1, v2))

    # Internal correctness check against XLA's reference conv.
    ref = jax.lax.conv_general_dilated(
        x, weight, window_strides=(1, 1), padding="VALID",
        dimension_numbers=("NCHW", "OIHW", "NCHW")) + bias[None, :, None, None]
    assert v1.shape == (N, Cout, H - KH + 1, W - KW + 1)
    assert v2.shape == (N, H - KH + 1, Cout, W - KW + 1)
    assert jnp.allclose(v1, ref, atol=1e-5, rtol=1e-5)
    assert jnp.allclose(v2, jnp.transpose(ref, (0, 2, 1, 3)), atol=1e-5, rtol=1e-5)

    print("KERNEL_OK")
</pallas_src>

<mosaic_0001>
module attributes {stable_mosaic.version = 11 : i64} {
  func.func @conv_kernel(%arg0: memref<8x512xf32, #tpu.memory_space<vmem>>, %arg1: memref<4x8x8xf32, #tpu.memory_space<vmem>>, %arg2: memref<8x512xf32, #tpu.memory_space<vmem>>) attributes {dimension_semantics = [], scalar_prefetch = 0 : i64, scratch_operands = 0 : i64, tpu.core_type = #tpu.core_type<tc>} {
    %c0 = arith.constant 0 : index
    %c0_0 = arith.constant 0 : index
    %0 = vector.load %arg0[%c0, %c0_0] : memref<8x512xf32, #tpu.memory_space<vmem>>, vector<8x512xf32>
    %c0_1 = arith.constant 0 : index
    %c0_2 = arith.constant 0 : index
    %c0_3 = arith.constant 0 : index
    %1 = vector.load %arg1[%c0_1, %c0_2, %c0_3] : memref<4x8x8xf32, #tpu.memory_space<vmem>>, vector<1x8x8xf32>
    %2 = vector.shape_cast %1 : vector<1x8x8xf32> to vector<8x8xf32>
    %cst = arith.constant dense<0.000000e+00> : vector<8x512xf32>
    %3 = tpu.matmul %2, %0, %cst {dimension_numbers = #tpu.dot_dimension_numbers<[1], [0], [0], [1], [0, 0, 1, 1], [], []>, precision = #tpu.contract_precision<fp32>} : vector<8x8xf32>, vector<8x512xf32>, vector<8x512xf32> -> vector<8x512xf32>
    %c511_i32 = arith.constant 511 : i32
    %4 = tpu.dynamic_rotate %0 by %c511_i32 dim 1 : vector<8x512xf32>, i32 -> vector<8x512xf32>
    %c1 = arith.constant 1 : index
    %c0_4 = arith.constant 0 : index
    %c0_5 = arith.constant 0 : index
    %5 = vector.load %arg1[%c1, %c0_4, %c0_5] : memref<4x8x8xf32, #tpu.memory_space<vmem>>, vector<1x8x8xf32>
    %6 = vector.shape_cast %5 : vector<1x8x8xf32> to vector<8x8xf32>
    %cst_6 = arith.constant dense<0.000000e+00> : vector<8x512xf32>
    %7 = tpu.matmul %6, %4, %cst_6 {dimension_numbers = #tpu.dot_dimension_numbers<[1], [0], [0], [1], [0, 0, 1, 1], [], []>, precision = #tpu.contract_precision<fp32>} : vector<8x8xf32>, vector<8x512xf32>, vector<8x512xf32> -> vector<8x512xf32>
    %8 = arith.addf %3, %7 : vector<8x512xf32>
    %c496_i32 = arith.constant 496 : i32
    %9 = tpu.dynamic_rotate %0 by %c496_i32 dim 1 : vector<8x512xf32>, i32 -> vector<8x512xf32>
    %c2 = arith.constant 2 : index
    %c0_7 = arith.constant 0 : index
    %c0_8 = arith.constant 0 : index
    %10 = vector.load %arg1[%c2, %c0_7, %c0_8] : memref<4x8x8xf32, #tpu.memory_space<vmem>>, vector<1x8x8xf32>
    %11 = vector.shape_cast %10 : vector<1x8x8xf32> to vector<8x8xf32>
    %cst_9 = arith.constant dense<0.000000e+00> : vector<8x512xf32>
    %12 = tpu.matmul %11, %9, %cst_9 {dimension_numbers = #tpu.dot_dimension_numbers<[1], [0], [0], [1], [0, 0, 1, 1], [], []>, precision = #tpu.contract_precision<fp32>} : vector<8x8xf32>, vector<8x512xf32>, vector<8x512xf32> -> vector<8x512xf32>
    %13 = arith.addf %8, %12 : vector<8x512xf32>
    %c495_i32 = arith.constant 495 : i32
    %14 = tpu.dynamic_rotate %0 by %c495_i32 dim 1 : vector<8x512xf32>, i32 -> vector<8x512xf32>
    %c3 = arith.constant 3 : index
    %c0_10 = arith.constant 0 : index
    %c0_11 = arith.constant 0 : index
    %15 = vector.load %arg1[%c3, %c0_10, %c0_11] : memref<4x8x8xf32, #tpu.memory_space<vmem>>, vector<1x8x8xf32>
    %16 = vector.shape_cast %15 : vector<1x8x8xf32> to vector<8x8xf32>
    %cst_12 = arith.constant dense<0.000000e+00> : vector<8x512xf32>
    %17 = tpu.matmul %16, %14, %cst_12 {dimension_numbers = #tpu.dot_dimension_numbers<[1], [0], [0], [1], [0, 0, 1, 1], [], []>, precision = #tpu.contract_precision<fp32>} : vector<8x8xf32>, vector<8x512xf32>, vector<8x512xf32> -> vector<8x512xf32>
    %18 = arith.addf %13, %17 : vector<8x512xf32>
    %c0_13 = arith.constant 0 : index
    %c0_14 = arith.constant 0 : index
    %19 = vector.load %arg2[%c0_13, %c0_14] : memref<8x512xf32, #tpu.memory_space<vmem>>, vector<8x512xf32>
    tpu.vector_store %arg2[%c0_13, %c0_14], %18 {strides = array<i32>} : memref<8x512xf32, #tpu.memory_space<vmem>>, vector<8x512xf32>,
    return
  }
}

</mosaic_0001>

<llo_original>
// kernel: conv2d_permute_pallas.1
$region0: #{conv2d_permute_pallas.1}
  #allocation0 [shape = 'u32[]', space=smem, size = 0x4, offset = 0x4, fixed_abs, tag = 'smem constant byte address 0x4 - core index']
  #allocation1 [shape = 'u32[144,128]{1,0:T(1,128)}', space=vmem, size = 0x12000, scoped, tag = 'internal scratch']
  %s0 = inlined_call_operand.vmem [shape: f32[8,512], index: 0, kind: input, shape index: {}]
  %s1 = inlined_call_operand.vmem [shape: f32[4,8,8], index: 1, kind: input, shape index: {}]
  %s2 = inlined_call_operand.vmem [shape: f32[8,512], index: 2, kind: output, shape index: {}]
  %s3 = sld [smem:[#allocation0]]
  $region18: #{conv2d_permute_pallas.1} parent=0
    _
  %s5 = ssub.s32 1, %s3
  %s6 = scalar_select 0, %s5, %s3
  // Predicated region
  $region2: #{conv2d_permute_pallas.1} parent=0 // pred_check
    _
  $region3: #{conv2d_permute_pallas.1} parent=0 // pred_check_branch
    %8 = sbr.rel (0) target = $region5
  $region4: #{conv2d_permute_pallas.1} parent=0 // pred_region
    _
  $region5: #{conv2d_permute_pallas.1} parent=0 // pred_fallthru
    _
  // Predicated region
  $region6: #{conv2d_permute_pallas.1} parent=0 // pred_check
    _
  $region7: #{conv2d_permute_pallas.1} parent=0 // pred_check_branch
    %10 = sbr.rel (0) target = $region9
  $region8: #{conv2d_permute_pallas.1} parent=0 // pred_region
    _
  $region9: #{conv2d_permute_pallas.1} parent=0 // pred_fallthru
    _
  %v11 = vld [vmem:[%s0] sm:$0xff]
  %v12 = vld [vmem:[%s0 + $0x8] sm:$0xff]
  %v13 = vld [vmem:[%s0 + $0x10] sm:$0xff]
  %v14 = vld [vmem:[%s0 + $0x18] sm:$0xff]
  %v15 = vld [vmem:[%s1] sm:$0xff]
  %16 = vrot.lane.b32.xlu0 %v11, 127
  %v17 = vpop.permute.xlu0 %16
  %18 = vrot.lane.b32.xlu0 %v12, 127
  %v19 = vpop.permute.xlu0 %18
  %20 = vrot.lane.b32.xlu0 %v13, 127
  %v21 = vpop.permute.xlu0 %20
  %22 = vrot.lane.b32.xlu0 %v14, 127
  %v23 = vpop.permute.xlu0 %22
  %v24 = vlaneseq
  %v25 = vand.u32 %v24, 127
  %vm26 = vcmp.lt.s32.totalorder %v25, 127
  %v27 = vsel %vm26, %v21, %v23
  %v28 = vsel %vm26, %v19, %v21
  %v29 = vsel %vm26, %v17, %v19
  %v30 = vsel %vm26, %v23, %v17
  %s31 = scalar_lea.vmem %s1, 8
  %v32 = vld [vmem:[%s31] sm:$0xff]
  %vm33 = vcmask 64512
  %v35 = vsel %vm33, %v32, 0
  %37 = vmatprep.subr.mxu0 0.0
  %38 = vmatpush1.msra.mxu0 0.0
  %39 = vmatprep.subr.mxu0 0.0
  %40 = vmatpush1.msra.mxu0 0.0
  %41 = vmatprep.subr.mxu0 0.0
  %42 = vmatpush1.msra.mxu0 0.0
  %43 = vmatprep.subr.mxu0 0.0
  %44 = vmatpush1.msra.mxu0 0.0
  %45 = vmatprep.subr.mxu0 0.0
  %46 = vmatpush1.msra.mxu0 0.0
  %47 = vmatprep.subr.mxu0 0.0
  %48 = vmatpush1.msra.mxu0 0.0
  %49 = vmatprep.subr.mxu0 0.0
  %50 = vmatpush1.msra.mxu0 0.0
  %51 = vmatprep.subr.mxu0 0.0
  %52 = vmatpush1.msra.mxu0 0.0
  %53 = vmatprep.subr.mxu0 0.0
  %54 = vmatpush1.msra.mxu0 0.0
  %55 = vmatprep.subr.mxu0 0.0
  %56 = vmatpush1.msra.mxu0 0.0
  %57 = vmatprep.subr.mxu0 0.0
  %58 = vmatpush1.msra.mxu0 0.0
  %59 = vmatprep.subr.mxu0 0.0
  %60 = vmatpush1.msra.mxu0 0.0
  %61 = vmatprep.subr.mxu0 0.0
  %62 = vmatpush1.msra.mxu0 0.0
  %63 = vmatprep.subr.mxu0 0.0
  %64 = vmatpush1.msra.mxu0 0.0
  %65 = vmatprep.subr.mxu0 0.0
  %66 = vmatpush1.msra.mxu0 0.0
  %v67 = vand.u32 %v28, 4294901760
  %68 = vmatprep.subr.mxu0 %v67
  %v69 = vand.u32 %v29, 4294901760
  %70 = vmatpush1.msra.mxu0 %v69
  %71 = vmatprep.subr.mxu0 0.0
  %72 = vmatpush2.msra.mxu0 0.0
  %73 = vmatprep.subr.mxu0 0.0
  %74 = vmatpush2.msra.mxu0 0.0
  %75 = vmatprep.subr.mxu0 0.0
  %76 = vmatpush2.msra.mxu0 0.0
  %77 = vmatprep.subr.mxu0 0.0
  %78 = vmatpush2.msra.mxu0 0.0
  %79 = vmatprep.subr.mxu0 0.0
  %80 = vmatpush2.msra.mxu0 0.0
  %81 = vmatprep.subr.mxu0 0.0
  %82 = vmatpush2.msra.mxu0 0.0
  %83 = vmatprep.subr.mxu0 0.0
  %84 = vmatpush2.msra.mxu0 0.0
  %85 = vmatprep.subr.mxu0 0.0
  %86 = vmatpush2.msra.mxu0 0.0
  %87 = vmatprep.subr.mxu0 0.0
  %88 = vmatpush2.msra.mxu0 0.0
  %89 = vmatprep.subr.mxu0 0.0
  %90 = vmatpush2.msra.mxu0 0.0
  %91 = vmatprep.subr.mxu0 0.0
  %92 = vmatpush2.msra.mxu0 0.0
  %93 = vmatprep.subr.mxu0 0.0
  %94 = vmatpush2.msra.mxu0 0.0
  %95 = vmatprep.subr.mxu0 0.0
  %96 = vmatpush2.msra.mxu0 0.0
  %97 = vmatprep.subr.mxu0 0.0
  %98 = vmatpush2.msra.mxu0 0.0
  %99 = vmatprep.subr.mxu0 0.0
  %100 = vmatpush2.msra.mxu0 0.0
  %101 = vmatprep.subr.mxu0 0.0
  %102 = vmatpush2.msra.mxu0 0.0
  %103 = vmatprep.mubr.f32.mxu0 0.0
  %v104 = vand.u32 %v35, 4294901760
  %v105 = vsub.f32 %v35, %v104
  %v106 = vand.u32 %v105, 4294901760
  %v107 = vsub.f32 %v105, %v106
  %v108 = vand.u32 %v107, 4294901760
  %109 = vmatmul.mubr.f32.gmra.mxu0 %v108
  %v110 = vpop.f32.mrf.mxu0
  %v111 = vadd.f32 0.0, %v110
  %v112 = vpop.f32.mrf.mxu0
  %v113 = vadd.f32 0.0, %v112
  %114 = vdwg.mxu0
  %115 = vmatprep.subr.mxu0 0.0
  %116 = vmatpush1.msra.mxu0 0.0
  %117 = vmatprep.subr.mxu0 0.0
  %118 = vmatpush1.msra.mxu0 0.0
  %119 = vmatprep.subr.mxu0 0.0
  %120 = vmatpush1.msra.mxu0 0.0
  %121 = vmatprep.subr.mxu0 0.0
  %122 = vmatpush1.msra.mxu0 0.0
  %123 = vmatprep.subr.mxu0 0.0
  %124 = vmatpush1.msra.mxu0 0.0
  %125 = vmatprep.subr.mxu0 0.0
  %126 = vmatpush1.msra.mxu0 0.0
  %127 = vmatprep.subr.mxu0 0.0
  %128 = vmatpush1.msra.mxu0 0.0
  %129 = vmatprep.subr.mxu0 0.0
  %130 = vmatpush1.msra.mxu0 0.0
  %131 = vmatprep.subr.mxu0 0.0
  %132 = vmatpush1.msra.mxu0 0.0
  %133 = vmatprep.subr.mxu0 0.0
  %134 = vmatpush1.msra.mxu0 0.0
  %135 = vmatprep.subr.mxu0 0.0
  %136 = vmatpush1.msra.mxu0 0.0
  %137 = vmatprep.subr.mxu0 0.0
  %138 = vmatpush1.msra.mxu0 0.0
  %139 = vmatprep.subr.mxu0 0.0
  %140 = vmatpush1.msra.mxu0 0.0
  %141 = vmatprep.subr.mxu0 0.0
  %142 = vmatpush1.msra.mxu0 0.0
  %143 = vmatprep.subr.mxu0 0.0
  %144 = vmatpush1.msra.mxu0 0.0
  %v145 = vand.u32 %v28, 4294901760
  %v146 = vsub.f32 %v28, %v145
  %v147 = vand.u32 %v146, 4294901760
  %v148 = vsub.f32 %v146, %v147
  %v149 = vand.u32 %v148, 4294901760
  %150 = vmatprep.subr.mxu0 %v149
  %v151 = vand.u32 %v29, 4294901760
  %v152 = vsub.f32 %v29, %v151
  %v153 = vand.u32 %v152, 4294901760
  %v154 = vsub.f32 %v152, %v153
  %v155 = vand.u32 %v154, 4294901760
  %156 = vmatpush1.msra.mxu0 %v155
  %157 = vmatprep.subr.mxu0 0.0
  %158 = vmatpush2.msra.mxu0 0.0
  %159 = vmatprep.subr.mxu0 0.0
  %160 = vmatpush2.msra.mxu0 0.0
  %161 = vmatprep.subr.mxu0 0.0
  %162 = vmatpush2.msra.mxu0 0.0
  %163 = vmatprep.subr.mxu0 0.0
  %164 = vmatpush2.msra.mxu0 0.0
  %165 = vmatprep.subr.mxu0 0.0
  %166 = vmatpush2.msra.mxu0 0.0
  %167 = vmatprep.subr.mxu0 0.0
  %168 = vmatpush2.msra.mxu0 0.0
  %169 = vmatprep.subr.mxu0 0.0
  %170 = vmatpush2.msra.mxu0 0.0
  %171 = vmatprep.subr.mxu0 0.0
  %172 = vmatpush2.msra.mxu0 0.0
  %173 = vmatprep.subr.mxu0 0.0
  %174 = vmatpush2.msra.mxu0 0.0
  %175 = vmatprep.subr.mxu0 0.0
  %176 = vmatpush2.msra.mxu0 0.0
  %177 = vmatprep.subr.mxu0 0.0
  %178 = vmatpush2.msra.mxu0 0.0
  %179 = vmatprep.subr.mxu0 0.0
  %180 = vmatpush2.msra.mxu0 0.0
  %181 = vmatprep.subr.mxu0 0.0
  %182 = vmatpush2.msra.mxu0 0.0
  %183 = vmatprep.subr.mxu0 0.0
  %184 = vmatpush2.msra.mxu0 0.0
  %185 = vmatprep.subr.mxu0 0.0
  %186 = vmatpush2.msra.mxu0 0.0
  %187 = vmatprep.subr.mxu0 0.0
  %188 = vmatpush2.msra.mxu0 0.0
  %189 = vmatprep.mubr.f32.mxu0 0.0
  %v190 = vand.u32 %v35, 4294901760
  %191 = vmatmul.mubr.f32.gmra.mxu0 %v190
  %v192 = vpop.f32.mrf.mxu0
  %v193 = vadd.f32 %v111, %v192
  %v194 = vpop.f32.mrf.mxu0
  %v195 = vadd.f32 %v113, %v194
  %196 = vdwg.mxu0
  %197 = vmatprep.subr.mxu0 0.0
  %198 = vmatpush1.msra.mxu0 0.0
  %199 = vmatprep.subr.mxu0 0.0
  %200 = vmatpush1.msra.mxu0 0.0
  %201 = vmatprep.subr.mxu0 0.0
  %202 = vmatpush1.msra.mxu0 0.0
  %203 = vmatprep.subr.mxu0 0.0
  %204 = vmatpush1.msra.mxu0 0.0
  %205 = vmatprep.subr.mxu0 0.0
  %206 = vmatpush1.msra.mxu0 0.0
  %207 = vmatprep.subr.mxu0 0.0
  %208 = vmatpush1.msra.mxu0 0.0
  %209 = vmatprep.subr.mxu0 0.0
  %210 = vmatpush1.msra.mxu0 0.0
  %211 = vmatprep.subr.mxu0 0.0
  %212 = vmatpush1.msra.mxu0 0.0
  %213 = vmatprep.subr.mxu0 0.0
  %214 = vmatpush1.msra.mxu0 0.0
  %215 = vmatprep.subr.mxu0 0.0
  %216 = vmatpush1.msra.mxu0 0.0
  %217 = vmatprep.subr.mxu0 0.0
  %218 = vmatpush1.msra.mxu0 0.0
  %219 = vmatprep.subr.mxu0 0.0
  %220 = vmatpush1.msra.mxu0 0.0
  %221 = vmatprep.subr.mxu0 0.0
  %222 = vmatpush1.msra.mxu0 0.0
  %223 = vmatprep.subr.mxu0 0.0
  %224 = vmatpush1.msra.mxu0 0.0
  %225 = vmatprep.subr.mxu0 0.0
  %226 = vmatpush1.msra.mxu0 0.0
  %v227 = vand.u32 %v28, 4294901760
  %v228 = vsub.f32 %v28, %v227
  %229 = vmatprep.subr.mxu0 %v228
  %v230 = vand.u32 %v29, 4294901760
  %v231 = vsub.f32 %v29, %v230
  %232 = vmatpush1.msra.mxu0 %v231
  %233 = vmatprep.subr.mxu0 0.0
  %234 = vmatpush2.msra.mxu0 0.0
  %235 = vmatprep.subr.mxu0 0.0
  %236 = vmatpush2.msra.mxu0 0.0
  %237 = vmatprep.subr.mxu0 0.0
  %238 = vmatpush2.msra.mxu0 0.0
  %239 = vmatprep.subr.mxu0 0.0
  %240 = vmatpush2.msra.mxu0 0.0
  %241 = vmatprep.subr.mxu0 0.0
  %242 = vmatpush2.msra.mxu0 0.0
  %243 = vmatprep.subr.mxu0 0.0
  %244 = vmatpush2.msra.mxu0 0.0
  %245 = vmatprep.subr.mxu0 0.0
  %246 = vmatpush2.msra.mxu0 0.0
  %247 = vmatprep.subr.mxu0 0.0
  %248 = vmatpush2.msra.mxu0 0.0
  %249 = vmatprep.subr.mxu0 0.0
  %250 = vmatpush2.msra.mxu0 0.0
  %251 = vmatprep.subr.mxu0 0.0
  %252 = vmatpush2.msra.mxu0 0.0
  %253 = vmatprep.subr.mxu0 0.0
  %254 = vmatpush2.msra.mxu0 0.0
  %255 = vmatprep.subr.mxu0 0.0
  %256 = vmatpush2.msra.mxu0 0.0
  %257 = vmatprep.subr.mxu0 0.0
  %258 = vmatpush2.msra.mxu0 0.0
  %259 = vmatprep.subr.mxu0 0.0
  %260 = vmatpush2.msra.mxu0 0.0
  %261 = vmatprep.subr.mxu0 0.0
  %262 = vmatpush2.msra.mxu0 0.0
  %263 = vmatprep.subr.mxu0 0.0
  %264 = vmatpush2.msra.mxu0 0.0
  %265 = vmatprep.mubr.f32.mxu0 0.0
  %v266 = vand.u32 %v35, 4294901760
  %v267 = vsub.f32 %v35, %v266
  %268 = vmatmul.mubr.f32.gmra.mxu0 %v267
  %v269 = vpop.f32.mrf.mxu0
  %v270 = vadd.f32 %v193, %v269
  %v271 = vpop.f32.mrf.mxu0
  %v272 = vadd.f32 %v195, %v271
  %273 = vdwg.mxu0
  %274 = vmatprep.subr.mxu0 0.0
  %275 = vmatpush1.msra.mxu0 0.0
  %276 = vmatprep.subr.mxu0 0.0
  %277 = vmatpush1.msra.mxu0 0.0
  %278 = vmatprep.subr.mxu0 0.0
  %279 = vmatpush1.msra.mxu0 0.0
  %280 = vmatprep.subr.mxu0 0.0
  %281 = vmatpush1.msra.mxu0 0.0
  %282 = vmatprep.subr.mxu0 0.0
  %283 = vmatpush1.msra.mxu0 0.0
  %284 = vmatprep.subr.mxu0 0.0
  %285 = vmatpush1.msra.mxu0 0.0
  %286 = vmatprep.subr.mxu0 0.0
  %287 = vmatpush1.msra.mxu0 0.0
  %288 = vmatprep.subr.mxu0 0.0
  %289 = vmatpush1.msra.mxu0 0.0
  %290 = vmatprep.subr.mxu0 0.0
  %291 = vmatpush1.msra.mxu0 0.0
  %292 = vmatprep.subr.mxu0 0.0
  %293 = vmatpush1.msra.mxu0 0.0
  %294 = vmatprep.subr.mxu0 0.0
  %295 = vmatpush1.msra.mxu0 0.0
  %296 = vmatprep.subr.mxu0 0.0
  %297 = vmatpush1.msra.mxu0 0.0
  %298 = vmatprep.subr.mxu0 0.0
  %299 = vmatpush1.msra.mxu0 0.0
  %300 = vmatprep.subr.mxu0 0.0
  %301 = vmatpush1.msra.mxu0 0.0
  %302 = vmatprep.subr.mxu0 0.0
  %303 = vmatpush1.msra.mxu0 0.0
  %v304 = vand.u32 %v28, 4294901760
  %305 = vmatprep.subr.mxu0 %v304
  %v306 = vand.u32 %v29, 4294901760
  %307 = vmatpush1.msra.mxu0 %v306
  %308 = vmatprep.subr.mxu0 0.0
  %309 = vmatpush2.msra.mxu0 0.0
  %310 = vmatprep.subr.mxu0 0.0
  %311 = vmatpush2.msra.mxu0 0.0
  %312 = vmatprep.subr.mxu0 0.0
  %313 = vmatpush2.msra.mxu0 0.0
  %314 = vmatprep.subr.mxu0 0.0
  %315 = vmatpush2.msra.mxu0 0.0
  %316 = vmatprep.subr.mxu0 0.0
  %317 = vmatpush2.msra.mxu0 0.0
  %318 = vmatprep.subr.mxu0 0.0
  %319 = vmatpush2.msra.mxu0 0.0
  %320 = vmatprep.subr.mxu0 0.0
  %321 = vmatpush2.msra.mxu0 0.0
  %322 = vmatprep.subr.mxu0 0.0
  %323 = vmatpush2.msra.mxu0 0.0
  %324 = vmatprep.subr.mxu0 0.0
  %325 = vmatpush2.msra.mxu0 0.0
  %326 = vmatprep.subr.mxu0 0.0
  %327 = vmatpush2.msra.mxu0 0.0
  %328 = vmatprep.subr.mxu0 0.0
  %329 = vmatpush2.msra.mxu0 0.0
  %330 = vmatprep.subr.mxu0 0.0
  %331 = vmatpush2.msra.mxu0 0.0
  %332 = vmatprep.subr.mxu0 0.0
  %333 = vmatpush2.msra.mxu0 0.0
  %334 = vmatprep.subr.mxu0 0.0
  %335 = vmatpush2.msra.mxu0 0.0
  %336 = vmatprep.subr.mxu0 0.0
  %337 = vmatpush2.msra.mxu0 0.0
  %338 = vmatprep.subr.mxu0 0.0
  %339 = vmatpush2.msra.mxu0 0.0
  %340 = vmatprep.mubr.f32.mxu0 0.0
  %v341 = vand.u32 %v35, 4294901760
  %v342 = vsub.f32 %v35, %v341
  %v343 = vand.u32 %v342, 4294901760
  %344 = vmatmul.mubr.f32.gmra.mxu0 %v343
  %v345 = vpop.f32.mrf.mxu0
  %v346 = vadd.f32 %v270, %v345
  %v347 = vpop.f32.mrf.mxu0
  %v348 = vadd.f32 %v272, %v347
  %349 = vdwg.mxu0
  %350 = vmatprep.subr.mxu0 0.0
  %351 = vmatpush1.msra.mxu0 0.0
  %352 = vmatprep.subr.mxu0 0.0
  %353 = vmatpush1.msra.mxu0 0.0
  %354 = vmatprep.subr.mxu0 0.0
  %355 = vmatpush1.msra.mxu0 0.0
  %356 = vmatprep.subr.mxu0 0.0
  %357 = vmatpush1.msra.mxu0 0.0
  %358 = vmatprep.subr.mxu0 0.0
  %359 = vmatpush1.msra.mxu0 0.0
  %360 = vmatprep.subr.mxu0 0.0
  %361 = vmatpush1.msra.mxu0 0.0
  %362 = vmatprep.subr.mxu0 0.0
  %363 = vmatpush1.msra.mxu0 0.0
  %364 = vmatprep.subr.mxu0 0.0
  %365 = vmatpush1.msra.mxu0 0.0
  %366 = vmatprep.subr.mxu0 0.0
  %367 = vmatpush1.msra.mxu0 0.0
  %368 = vmatprep.subr.mxu0 0.0
  %369 = vmatpush1.msra.mxu0 0.0
  %370 = vmatprep.subr.mxu0 0.0
  %371 = vmatpush1.msra.mxu0 0.0
  %372 = vmatprep.subr.mxu0 0.0
  %373 = vmatpush1.msra.mxu0 0.0
  %374 = vmatprep.subr.mxu0 0.0
  %375 = vmatpush1.msra.mxu0 0.0
  %376 = vmatprep.subr.mxu0 0.0
  %377 = vmatpush1.msra.mxu0 0.0
  %378 = vmatprep.subr.mxu0 0.0
  %379 = vmatpush1.msra.mxu0 0.0
  %v380 = vand.u32 %v28, 4294901760
  %v381 = vsub.f32 %v28, %v380
  %v382 = vand.u32 %v381, 4294901760
  %383 = vmatprep.subr.mxu0 %v382
  %v384 = vand.u32 %v29, 4294901760
  %v385 = vsub.f32 %v29, %v384
  %v386 = vand.u32 %v385, 4294901760
  %387 = vmatpush1.msra.mxu0 %v386
  %388 = vmatprep.subr.mxu0 0.0
  %389 = vmatpush2.msra.mxu0 0.0
  %390 = vmatprep.subr.mxu0 0.0
  %391 = vmatpush2.msra.mxu0 0.0
  %392 = vmatprep.subr.mxu0 0.0
  %393 = vmatpush2.msra.mxu0 0.0
  %394 = vmatprep.subr.mxu0 0.0
  %395 = vmatpush2.msra.mxu0 0.0
  %396 = vmatprep.subr.mxu0 0.0
  %397 = vmatpush2.msra.mxu0 0.0
  %398 = vmatprep.subr.mxu0 0.0
  %399 = vmatpush2.msra.mxu0 0.0
  %400 = vmatprep.subr.mxu0 0.0
  %401 = vmatpush2.msra.mxu0 0.0
  %402 = vmatprep.subr.mxu0 0.0
  %403 = vmatpush2.msra.mxu0 0.0
  %404 = vmatprep.subr.mxu0 0.0
  %405 = vmatpush2.msra.mxu0 0.0
  %406 = vmatprep.subr.mxu0 0.0
  %407 = vmatpush2.msra.mxu0 0.0
  %408 = vmatprep.subr.mxu0 0.0
  %409 = vmatpush2.msra.mxu0 0.0
  %410 = vmatprep.subr.mxu0 0.0
  %411 = vmatpush2.msra.mxu0 0.0
  %412 = vmatprep.subr.mxu0 0.0
  %413 = vmatpush2.msra.mxu0 0.0
  %414 = vmatprep.subr.mxu0 0.0
  %415 = vmatpush2.msra.mxu0 0.0
  %416 = vmatprep.subr.mxu0 0.0
  %417 = vmatpush2.msra.mxu0 0.0
  %418 = vmatprep.subr.mxu0 0.0
  %419 = vmatpush2.msra.mxu0 0.0
  %420 = vmatprep.mubr.f32.mxu0 0.0
  %v421 = vand.u32 %v35, 4294901760
  %422 = vmatmul.mubr.f32.gmra.mxu0 %v421
  %v423 = vpop.f32.mrf.mxu0
  %v424 = vadd.f32 %v346, %v423
  %v425 = vpop.f32.mrf.mxu0
  %v426 = vadd.f32 %v348, %v425
  %427 = vdwg.mxu0
  %428 = vmatprep.subr.mxu0 0.0
  %429 = vmatpush1.msra.mxu0 0.0
  %430 = vmatprep.subr.mxu0 0.0
  %431 = vmatpush1.msra.mxu0 0.0
  %432 = vmatprep.subr.mxu0 0.0
  %433 = vmatpush1.msra.mxu0 0.0
  %434 = vmatprep.subr.mxu0 0.0
  %435 = vmatpush1.msra.mxu0 0.0
  %436 = vmatprep.subr.mxu0 0.0
  %437 = vmatpush1.msra.mxu0 0.0
  %438 = vmatprep.subr.mxu0 0.0
  %439 = vmatpush1.msra.mxu0 0.0
  %440 = vmatprep.subr.mxu0 0.0
  %441 = vmatpush1.msra.mxu0 0.0
  %442 = vmatprep.subr.mxu0 0.0
  %443 = vmatpush1.msra.mxu0 0.0
  %444 = vmatprep.subr.mxu0 0.0
  %445 = vmatpush1.msra.mxu0 0.0
  %446 = vmatprep.subr.mxu0 0.0
  %447 = vmatpush1.msra.mxu0 0.0
  %448 = vmatprep.subr.mxu0 0.0
  %449 = vmatpush1.msra.mxu0 0.0
  %450 = vmatprep.subr.mxu0 0.0
  %451 = vmatpush1.msra.mxu0 0.0
  %452 = vmatprep.subr.mxu0 0.0
  %453 = vmatpush1.msra.mxu0 0.0
  %454 = vmatprep.subr.mxu0 0.0
  %455 = vmatpush1.msra.mxu0 0.0
  %456 = vmatprep.subr.mxu0 0.0
  %457 = vmatpush1.msra.mxu0 0.0
  %v458 = vand.u32 %v28, 4294901760
  %459 = vmatprep.subr.mxu0 %v458
  %v460 = vand.u32 %v29, 4294901760
  %461 = vmatpush1.msra.mxu0 %v460
  %462 = vmatprep.subr.mxu0 0.0
  %463 = vmatpush2.msra.mxu0 0.0
  %464 = vmatprep.subr.mxu0 0.0
  %465 = vmatpush2.msra.mxu0 0.0
  %466 = vmatprep.subr.mxu0 0.0
  %467 = vmatpush2.msra.mxu0 0.0
  %468 = vmatprep.subr.mxu0 0.0
  %469 = vmatpush2.msra.mxu0 0.0
  %470 = vmatprep.subr.mxu0 0.0
  %471 = vmatpush2.msra.mxu0 0.0
  %472 = vmatprep.subr.mxu0 0.0
  %473 = vmatpush2.msra.mxu0 0.0
  %474 = vmatprep.subr.mxu0 0.0
  %475 = vmatpush2.msra.mxu0 0.0
  %476 = vmatprep.subr.mxu0 0.0
  %477 = vmatpush2.msra.mxu0 0.0
  %478 = vmatprep.subr.mxu0 0.0
  %479 = vmatpush2.msra.mxu0 0.0
  %480 = vmatprep.subr.mxu0 0.0
  %481 = vmatpush2.msra.mxu0 0.0
  %482 = vmatprep.subr.mxu0 0.0
  %483 = vmatpush2.msra.mxu0 0.0
  %484 = vmatprep.subr.mxu0 0.0
  %485 = vmatpush2.msra.mxu0 0.0
  %486 = vmatprep.subr.mxu0 0.0
  %487 = vmatpush2.msra.mxu0 0.0
  %488 = vmatprep.subr.mxu0 0.0
  %489 = vmatpush2.msra.mxu0 0.0
  %490 = vmatprep.subr.mxu0 0.0
  %491 = vmatpush2.msra.mxu0 0.0
  %492 = vmatprep.subr.mxu0 0.0
  %493 = vmatpush2.msra.mxu0 0.0
  %494 = vmatprep.mubr.f32.mxu0 0.0
  %v495 = vand.u32 %v35, 4294901760
  %496 = vmatmul.mubr.f32.gmra.mxu0 %v495
  %v497 = vpop.f32.mrf.mxu0
  %v498 = vadd.f32 %v424, %v497
  %v499 = vpop.f32.mrf.mxu0
  %v500 = vadd.f32 %v426, %v499
  %501 = vdwg.mxu0
  %502 = vmatprep.subr.mxu0 0.0
  %503 = vmatpush1.msra.mxu0 0.0
  %504 = vmatprep.subr.mxu0 0.0
  %505 = vmatpush1.msra.mxu0 0.0
  %506 = vmatprep.subr.mxu0 0.0
  %507 = vmatpush1.msra.mxu0 0.0
  %508 = vmatprep.subr.mxu0 0.0
  %509 = vmatpush1.msra.mxu0 0.0
  %510 = vmatprep.subr.mxu0 0.0
  %511 = vmatpush1.msra.mxu0 0.0
  %512 = vmatprep.subr.mxu0 0.0
  %513 = vmatpush1.msra.mxu0 0.0
  %514 = vmatprep.subr.mxu0 0.0
  %515 = vmatpush1.msra.mxu0 0.0
  %516 = vmatprep.subr.mxu0 0.0
  %517 = vmatpush1.msra.mxu0 0.0
  %518 = vmatprep.subr.mxu0 0.0
  %519 = vmatpush1.msra.mxu0 0.0
  %520 = vmatprep.subr.mxu0 0.0
  %521 = vmatpush1.msra.mxu0 0.0
  %522 = vmatprep.subr.mxu0 0.0
  %523 = vmatpush1.msra.mxu0 0.0
  %524 = vmatprep.subr.mxu0 0.0
  %525 = vmatpush1.msra.mxu0 0.0
  %526 = vmatprep.subr.mxu0 0.0
  %527 = vmatpush1.msra.mxu0 0.0
  %528 = vmatprep.subr.mxu0 0.0
  %529 = vmatpush1.msra.mxu0 0.0
  %530 = vmatprep.subr.mxu0 0.0
  %531 = vmatpush1.msra.mxu0 0.0
  %v532 = vand.u32 %v30, 4294901760
  %533 = vmatprep.subr.mxu0 %v532
  %v534 = vand.u32 %v27, 4294901760
  %535 = vmatpush1.msra.mxu0 %v534
  %536 = vmatprep.subr.mxu0 0.0
  %537 = vmatpush2.msra.mxu0 0.0
  %538 = vmatprep.subr.mxu0 0.0
  %539 = vmatpush2.msra.mxu0 0.0
  %540 = vmatprep.subr.mxu0 0.0
  %541 = vmatpush2.msra.mxu0 0.0
  %542 = vmatprep.subr.mxu0 0.0
  %543 = vmatpush2.msra.mxu0 0.0
  %544 = vmatprep.subr.mxu0 0.0
  %545 = vmatpush2.msra.mxu0 0.0
  %546 = vmatprep.subr.mxu0 0.0
  %547 = vmatpush2.msra.mxu0 0.0
  %548 = vmatprep.subr.mxu0 0.0
  %549 = vmatpush2.msra.mxu0 0.0
  %550 = vmatprep.subr.mxu0 0.0
  %551 = vmatpush2.msra.mxu0 0.0
  %552 = vmatprep.subr.mxu0 0.0
  %553 = vmatpush2.msra.mxu0 0.0
  %554 = vmatprep.subr.mxu0 0.0
  %555 = vmatpush2.msra.mxu0 0.0
  %556 = vmatprep.subr.mxu0 0.0
  %557 = vmatpush2.msra.mxu0 0.0
  %558 = vmatprep.subr.mxu0 0.0
  %559 = vmatpush2.msra.mxu0 0.0
  %560 = vmatprep.subr.mxu0 0.0
  %561 = vmatpush2.msra.mxu0 0.0
  %562 = vmatprep.subr.mxu0 0.0
  %563 = vmatpush2.msra.mxu0 0.0
  %564 = vmatprep.subr.mxu0 0.0
  %565 = vmatpush2.msra.mxu0 0.0
  %566 = vmatprep.subr.mxu0 0.0
  %567 = vmatpush2.msra.mxu0 0.0
  %568 = vmatprep.mubr.f32.mxu0 0.0
  %v569 = vand.u32 %v35, 4294901760
  %v570 = vsub.f32 %v35, %v569
  %v571 = vand.u32 %v570, 4294901760
  %v572 = vsub.f32 %v570, %v571
  %v573 = vand.u32 %v572, 4294901760
  %574 = vmatmul.mubr.f32.gmra.mxu0 %v573
  %v575 = vpop.f32.mrf.mxu0
  %v576 = vadd.f32 0.0, %v575
  %v577 = vpop.f32.mrf.mxu0
  %v578 = vadd.f32 0.0, %v577
  %579 = vdwg.mxu0
  %580 = vmatprep.subr.mxu0 0.0
  %581 = vmatpush1.msra.mxu0 0.0
  %582 = vmatprep.subr.mxu0 0.0
  %583 = vmatpush1.msra.mxu0 0.0
  %584 = vmatprep.subr.mxu0 0.0
  %585 = vmatpush1.msra.mxu0 0.0
  %586 = vmatprep.subr.mxu0 0.0
  %587 = vmatpush1.msra.mxu0 0.0
  %588 = vmatprep.subr.mxu0 0.0
  %589 = vmatpush1.msra.mxu0 0.0
  %590 = vmatprep.subr.mxu0 0.0
  %591 = vmatpush1.msra.mxu0 0.0
  %592 = vmatprep.subr.mxu0 0.0
  %593 = vmatpush1.msra.mxu0 0.0
  %594 = vmatprep.subr.mxu0 0.0
  %595 = vmatpush1.msra.mxu0 0.0
  %596 = vmatprep.subr.mxu0 0.0
  %597 = vmatpush1.msra.mxu0 0.0
  %598 = vmatprep.subr.mxu0 0.0
  %599 = vmatpush1.msra.mxu0 0.0
  %600 = vmatprep.subr.mxu0 0.0
  %601 = vmatpush1.msra.mxu0 0.0
  %602 = vmatprep.subr.mxu0 0.0
  %603 = vmatpush1.msra.mxu0 0.0
  %604 = vmatprep.subr.mxu0 0.0
  %605 = vmatpush1.msra.mxu0 0.0
  %606 = vmatprep.subr.mxu0 0.0
  %607 = vmatpush1.msra.mxu0 0.0
  %608 = vmatprep.subr.mxu0 0.0
  %609 = vmatpush1.msra.mxu0 0.0
  %v610 = vand.u32 %v30, 4294901760
  %v611 = vsub.f32 %v30, %v610
  %v612 = vand.u32 %v611, 4294901760
  %v613 = vsub.f32 %v611, %v612
  %v614 = vand.u32 %v613, 4294901760
  %615 = vmatprep.subr.mxu0 %v614
  %v616 = vand.u32 %v27, 4294901760
  %v617 = vsub.f32 %v27, %v616
  %v618 = vand.u32 %v617, 4294901760
  %v619 = vsub.f32 %v617, %v618
  %v620 = vand.u32 %v619, 4294901760
  %621 = vmatpush1.msra.mxu0 %v620
  %622 = vmatprep.subr.mxu0 0.0
  %623 = vmatpush2.msra.mxu0 0.0
  %624 = vmatprep.subr.mxu0 0.0
  %625 = vmatpush2.msra.mxu0 0.0
  %626 = vmatprep.subr.mxu0 0.0
  %627 = vmatpush2.msra.mxu0 0.0
  %628 = vmatprep.subr.mxu0 0.0
  %629 = vmatpush2.msra.mxu0 0.0
  %630 = vmatprep.subr.mxu0 0.0
  %631 = vmatpush2.msra.mxu0 0.0
  %632 = vmatprep.subr.mxu0 0.0
  %633 = vmatpush2.msra.mxu0 0.0
  %634 = vmatprep.subr.mxu0 0.0
  %635 = vmatpush2.msra.mxu0 0.0
  %636 = vmatprep.subr.mxu0 0.0
  %637 = vmatpush2.msra.mxu0 0.0
  %638 = vmatprep.subr.mxu0 0.0
  %639 = vmatpush2.msra.mxu0 0.0
  %640 = vmatprep.subr.mxu0 0.0
  %641 = vmatpush2.msra.mxu0 0.0
  %642 = vmatprep.subr.mxu0 0.0
  %643 = vmatpush2.msra.mxu0 0.0
  %644 = vmatprep.subr.mxu0 0.0
  %645 = vmatpush2.msra.mxu0 0.0
  %646 = vmatprep.subr.mxu0 0.0
  %647 = vmatpush2.msra.mxu0 0.0
  %648 = vmatprep.subr.mxu0 0.0
  %649 = vmatpush2.msra.mxu0 0.0
  %650 = vmatprep.subr.mxu0 0.0
  %651 = vmatpush2.msra.mxu0 0.0
  %652 = vmatprep.subr.mxu0 0.0
  %653 = vmatpush2.msra.mxu0 0.0
  %654 = vmatprep.mubr.f32.mxu0 0.0
  %v655 = vand.u32 %v35, 4294901760
  %656 = vmatmul.mubr.f32.gmra.mxu0 %v655
  %v657 = vpop.f32.mrf.mxu0
  %v658 = vadd.f32 %v576, %v657
  %v659 = vpop.f32.mrf.mxu0
  %v660 = vadd.f32 %v578, %v659
  %661 = vdwg.mxu0
  %662 = vmatprep.subr.mxu0 0.0
  %663 = vmatpush1.msra.mxu0 0.0
  %664 = vmatprep.subr.mxu0 0.0
  %665 = vmatpush1.msra.mxu0 0.0
  %666 = vmatprep.subr.mxu0 0.0
  %667 = vmatpush1.msra.mxu0 0.0
  %668 = vmatprep.subr.mxu0 0.0
  %669 = vmatpush1.msra.mxu0 0.0
  %670 = vmatprep.subr.mxu0 0.0
  %671 = vmatpush1.msra.mxu0 0.0
  %672 = vmatprep.subr.mxu0 0.0
  %673 = vmatpush1.msra.mxu0 0.0
  %674 = vmatprep.subr.mxu0 0.0
  %675 = vmatpush1.msra.mxu0 0.0
  %676 = vmatprep.subr.mxu0 0.0
  %677 = vmatpush1.msra.mxu0 0.0
  %678 = vmatprep.subr.mxu0 0.0
  %679 = vmatpush1.msra.mxu0 0.0
  %680 = vmatprep.subr.mxu0 0.0
  %681 = vmatpush1.msra.mxu0 0.0
  %682 = vmatprep.subr.mxu0 0.0
  %683 = vmatpush1.msra.mxu0 0.0
  %684 = vmatprep.subr.mxu0 0.0
  %685 = vmatpush1.msra.mxu0 0.0
  %686 = vmatprep.subr.mxu0 0.0
  %687 = vmatpush1.msra.mxu0 0.0
  %688 = vmatprep.subr.mxu0 0.0
  %689 = vmatpush1.msra.mxu0 0.0
  %690 = vmatprep.subr.mxu0 0.0
  %691 = vmatpush1.msra.mxu0 0.0
  %v692 = vand.u32 %v30, 4294901760
  %v693 = vsub.f32 %v30, %v692
  %694 = vmatprep.subr.mxu0 %v693
  %v695 = vand.u32 %v27, 4294901760
  %v696 = vsub.f32 %v27, %v695
  %697 = vmatpush1.msra.mxu0 %v696
  %698 = vmatprep.subr.mxu0 0.0
  %699 = vmatpush2.msra.mxu0 0.0
  %700 = vmatprep.subr.mxu0 0.0
  %701 = vmatpush2.msra.mxu0 0.0
  %702 = vmatprep.subr.mxu0 0.0
  %703 = vmatpush2.msra.mxu0 0.0
  %704 = vmatprep.subr.mxu0 0.0
  %705 = vmatpush2.msra.mxu0 0.0
  %706 = vmatprep.subr.mxu0 0.0
  %707 = vmatpush2.msra.mxu0 0.0
  %708 = vmatprep.subr.mxu0 0.0
  %709 = vmatpush2.msra.mxu0 0.0
  %710 = vmatprep.subr.mxu0 0.0
  %711 = vmatpush2.msra.mxu0 0.0
  %712 = vmatprep.subr.mxu0 0.0
  %713 = vmatpush2.msra.mxu0 0.0
  %714 = vmatprep.subr.mxu0 0.0
  %715 = vmatpush2.msra.mxu0 0.0
  %716 = vmatprep.subr.mxu0 0.0
  %717 = vmatpush2.msra.mxu0 0.0
  %718 = vmatprep.subr.mxu0 0.0
  %719 = vmatpush2.msra.mxu0 0.0
  %720 = vmatprep.subr.mxu0 0.0
  %721 = vmatpush2.msra.mxu0 0.0
  %722 = vmatprep.subr.mxu0 0.0
  %723 = vmatpush2.msra.mxu0 0.0
  %724 = vmatprep.subr.mxu0 0.0
  %725 = vmatpush2.msra.mxu0 0.0
  %726 = vmatprep.subr.mxu0 0.0
  %727 = vmatpush2.msra.mxu0 0.0
  %728 = vmatprep.subr.mxu0 0.0
  %729 = vmatpush2.msra.mxu0 0.0
  %730 = vmatprep.mubr.f32.mxu0 0.0
  %v731 = vand.u32 %v35, 4294901760
  %v732 = vsub.f32 %v35, %v731
  %733 = vmatmul.mubr.f32.gmra.mxu0 %v732
  %v734 = vpop.f32.mrf.mxu0
  %v735 = vadd.f32 %v658, %v734
  %v736 = vpop.f32.mrf.mxu0
  %v737 = vadd.f32 %v660, %v736
  %738 = vdwg.mxu0
  %739 = vmatprep.subr.mxu0 0.0
  %740 = vmatpush1.msra.mxu0 0.0
  %741 = vmatprep.subr.mxu0 0.0
  %742 = vmatpush1.msra.mxu0 0.0
  %743 = vmatprep.subr.mxu0 0.0
  %744 = vmatpush1.msra.mxu0 0.0
  %745 = vmatprep.subr.mxu0 0.0
  %746 = vmatpush1.msra.mxu0 0.0
  %747 = vmatprep.subr.mxu0 0.0
  %748 = vmatpush1.msra.mxu0 0.0
  %749 = vmatprep.subr.mxu0 0.0
  %750 = vmatpush1.msra.mxu0 0.0
  %751 = vmatprep.subr.mxu0 0.0
  %752 = vmatpush1.msra.mxu0 0.0
  %753 = vmatprep.subr.mxu0 0.0
  %754 = vmatpush1.msra.mxu0 0.0
  %755 = vmatprep.subr.mxu0 0.0
  %756 = vmatpush1.msra.mxu0 0.0
  %757 = vmatprep.subr.mxu0 0.0
  %758 = vmatpush1.msra.mxu0 0.0
  %759 = vmatprep.subr.mxu0 0.0
  %760 = vmatpush1.msra.mxu0 0.0
  %761 = vmatprep.subr.mxu0 0.0
  %762 = vmatpush1.msra.mxu0 0.0
  %763 = vmatprep.subr.mxu0 0.0
  %764 = vmatpush1.msra.mxu0 0.0
  %765 = vmatprep.subr.mxu0 0.0
  %766 = vmatpush1.msra.mxu0 0.0
  %767 = vmatprep.subr.mxu0 0.0
  %768 = vmatpush1.msra.mxu0 0.0
  %v769 = vand.u32 %v30, 4294901760
  %770 = vmatprep.subr.mxu0 %v769
  %v771 = vand.u32 %v27, 4294901760
  %772 = vmatpush1.msra.mxu0 %v771
  %773 = vmatprep.subr.mxu0 0.0
  %774 = vmatpush2.msra.mxu0 0.0
  %775 = vmatprep.subr.mxu0 0.0
  %776 = vmatpush2.msra.mxu0 0.0
  %777 = vmatprep.subr.mxu0 0.0
  %778 = vmatpush2.msra.mxu0 0.0
  %779 = vmatprep.subr.mxu0 0.0
  %780 = vmatpush2.msra.mxu0 0.0
  %781 = vmatprep.subr.mxu0 0.0
  %782 = vmatpush2.msra.mxu0 0.0
  %783 = vmatprep.subr.mxu0 0.0
  %784 = vmatpush2.msra.mxu0 0.0
  %785 = vmatprep.subr.mxu0 0.0
  %786 = vmatpush2.msra.mxu0 0.0
  %787 = vmatprep.subr.mxu0 0.0
  %788 = vmatpush2.msra.mxu0 0.0
  %789 = vmatprep.subr.mxu0 0.0
  %790 = vmatpush2.msra.mxu0 0.0
  %791 = vmatprep.subr.mxu0 0.0
  %792 = vmatpush2.msra.mxu0 0.0
  %793 = vmatprep.subr.mxu0 0.0
  %794 = vmatpush2.msra.mxu0 0.0
  %795 = vmatprep.subr.mxu0 0.0
  %796 = vmatpush2.msra.mxu0 0.0
  %797 = vmatprep.subr.mxu0 0.0
  %798 = vmatpush2.msra.mxu0 0.0
  %799 = vmatprep.subr.mxu0 0.0
  %800 = vmatpush2.msra.mxu0 0.0
  %801 = vmatprep.subr.mxu0 0.0
  %802 = vmatpush2.msra.mxu0 0.0
  %803 = vmatprep.subr.mxu0 0.0
  %804 = vmatpush2.msra.mxu0 0.0
  %805 = vmatprep.mubr.f32.mxu0 0.0
  %v806 = vand.u32 %v35, 4294901760
  %v807 = vsub.f32 %v35, %v806
  %v808 = vand.u32 %v807, 4294901760
  %809 = vmatmul.mubr.f32.gmra.mxu0 %v808
  %v810 = vpop.f32.mrf.mxu0
  %v811 = vadd.f32 %v735, %v810
  %v812 = vpop.f32.mrf.mxu0
  %v813 = vadd.f32 %v737, %v812
  %814 = vdwg.mxu0
  %815 = vmatprep.subr.mxu0 0.0
  %816 = vmatpush1.msra.mxu0 0.0
  %817 = vmatprep.subr.mxu0 0.0
  %818 = vmatpush1.msra.mxu0 0.0
  %819 = vmatprep.subr.mxu0 0.0
  %820 = vmatpush1.msra.mxu0 0.0
  %821 = vmatprep.subr.mxu0 0.0
  %822 = vmatpush1.msra.mxu0 0.0
  %823 = vmatprep.subr.mxu0 0.0
  %824 = vmatpush1.msra.mxu0 0.0
  %825 = vmatprep.subr.mxu0 0.0
  %826 = vmatpush1.msra.mxu0 0.0
  %827 = vmatprep.subr.mxu0 0.0
  %828 = vmatpush1.msra.mxu0 0.0
  %829 = vmatprep.subr.mxu0 0.0
  %830 = vmatpush1.msra.mxu0 0.0
  %831 = vmatprep.subr.mxu0 0.0
  %832 = vmatpush1.msra.mxu0 0.0
  %833 = vmatprep.subr.mxu0 0.0
  %834 = vmatpush1.msra.mxu0 0.0
  %835 = vmatprep.subr.mxu0 0.0
  %836 = vmatpush1.msra.mxu0 0.0
  %837 = vmatprep.subr.mxu0 0.0
  %838 = vmatpush1.msra.mxu0 0.0
  %839 = vmatprep.subr.mxu0 0.0
  %840 = vmatpush1.msra.mxu0 0.0
  %841 = vmatprep.subr.mxu0 0.0
  %842 = vmatpush1.msra.mxu0 0.0
  %843 = vmatprep.subr.mxu0 0.0
  %844 = vmatpush1.msra.mxu0 0.0
  %v845 = vand.u32 %v30, 4294901760
  %v846 = vsub.f32 %v30, %v845
  %v847 = vand.u32 %v846, 4294901760
  %848 = vmatprep.subr.mxu0 %v847
  %v849 = vand.u32 %v27, 4294901760
  %v850 = vsub.f32 %v27, %v849
  %v851 = vand.u32 %v850, 4294901760
  %852 = vmatpush1.msra.mxu0 %v851
  %853 = vmatprep.subr.mxu0 0.0
  %854 = vmatpush2.msra.mxu0 0.0
  %855 = vmatprep.subr.mxu0 0.0
  %856 = vmatpush2.msra.mxu0 0.0
  %857 = vmatprep.subr.mxu0 0.0
  %858 = vmatpush2.msra.mxu0 0.0
  %859 = vmatprep.subr.mxu0 0.0
  %860 = vmatpush2.msra.mxu0 0.0
  %861 = vmatprep.subr.mxu0 0.0
  %862 = vmatpush2.msra.mxu0 0.0
  %863 = vmatprep.subr.mxu0 0.0
  %864 = vmatpush2.msra.mxu0 0.0
  %865 = vmatprep.subr.mxu0 0.0
  %866 = vmatpush2.msra.mxu0 0.0
  %867 = vmatprep.subr.mxu0 0.0
  %868 = vmatpush2.msra.mxu0 0.0
  %869 = vmatprep.subr.mxu0 0.0
  %870 = vmatpush2.msra.mxu0 0.0
  %871 = vmatprep.subr.mxu0 0.0
  %872 = vmatpush2.msra.mxu0 0.0
  %873 = vmatprep.subr.mxu0 0.0
  %874 = vmatpush2.msra.mxu0 0.0
  %875 = vmatprep.subr.mxu0 0.0
  %876 = vmatpush2.msra.mxu0 0.0
  %877 = vmatprep.subr.mxu0 0.0
  %878 = vmatpush2.msra.mxu0 0.0
  %879 = vmatprep.subr.mxu0 0.0
  %880 = vmatpush2.msra.mxu0 0.0
  %881 = vmatprep.subr.mxu0 0.0
  %882 = vmatpush2.msra.mxu0 0.0
  %883 = vmatprep.subr.mxu0 0.0
  %884 = vmatpush2.msra.mxu0 0.0
  %885 = vmatprep.mubr.f32.mxu0 0.0
  %v886 = vand.u32 %v35, 4294901760
  %887 = vmatmul.mubr.f32.gmra.mxu0 %v886
  %v888 = vpop.f32.mrf.mxu0
  %v889 = vadd.f32 %v811, %v888
  %v890 = vpop.f32.mrf.mxu0
  %v891 = vadd.f32 %v813, %v890
  %892 = vdwg.mxu0
  %893 = vmatprep.subr.mxu0 0.0
  %894 = vmatpush1.msra.mxu0 0.0
  %895 = vmatprep.subr.mxu0 0.0
  %896 = vmatpush1.msra.mxu0 0.0
  %897 = vmatprep.subr.mxu0 0.0
  %898 = vmatpush1.msra.mxu0 0.0
  %899 = vmatprep.subr.mxu0 0.0
  %900 = vmatpush1.msra.mxu0 0.0
  %901 = vmatprep.subr.mxu0 0.0
  %902 = vmatpush1.msra.mxu0 0.0
  %903 = vmatprep.subr.mxu0 0.0
  %904 = vmatpush1.msra.mxu0 0.0
  %905 = vmatprep.subr.mxu0 0.0
  %906 = vmatpush1.msra.mxu0 0.0
  %907 = vmatprep.subr.mxu0 0.0
  %908 = vmatpush1.msra.mxu0 0.0
  %909 = vmatprep.subr.mxu0 0.0
  %910 = vmatpush1.msra.mxu0 0.0
  %911 = vmatprep.subr.mxu0 0.0
  %912 = vmatpush1.msra.mxu0 0.0
  %913 = vmatprep.subr.mxu0 0.0
  %914 = vmatpush1.msra.mxu0 0.0
  %915 = vmatprep.subr.mxu0 0.0
  %916 = vmatpush1.msra.mxu0 0.0
  %917 = vmatprep.subr.mxu0 0.0
  %918 = vmatpush1.msra.mxu0 0.0
  %919 = vmatprep.subr.mxu0 0.0
  %920 = vmatpush1.msra.mxu0 0.0
  %921 = vmatprep.subr.mxu0 0.0
  %922 = vmatpush1.msra.mxu0 0.0
  %v923 = vand.u32 %v30, 4294901760
  %924 = vmatprep.subr.mxu0 %v923
  %v925 = vand.u32 %v27, 4294901760
  %926 = vmatpush1.msra.mxu0 %v925
  %927 = vmatprep.subr.mxu0 0.0
  %928 = vmatpush2.msra.mxu0 0.0
  %929 = vmatprep.subr.mxu0 0.0
  %930 = vmatpush2.msra.mxu0 0.0
  %931 = vmatprep.subr.mxu0 0.0
  %932 = vmatpush2.msra.mxu0 0.0
  %933 = vmatprep.subr.mxu0 0.0
  %934 = vmatpush2.msra.mxu0 0.0
  %935 = vmatprep.subr.mxu0 0.0
  %936 = vmatpush2.msra.mxu0 0.0
  %937 = vmatprep.subr.mxu0 0.0
  %938 = vmatpush2.msra.mxu0 0.0
  %939 = vmatprep.subr.mxu0 0.0
  %940 = vmatpush2.msra.mxu0 0.0
  %941 = vmatprep.subr.mxu0 0.0
  %942 = vmatpush2.msra.mxu0 0.0
  %943 = vmatprep.subr.mxu0 0.0
  %944 = vmatpush2.msra.mxu0 0.0
  %945 = vmatprep.subr.mxu0 0.0
  %946 = vmatpush2.msra.mxu0 0.0
  %947 = vmatprep.subr.mxu0 0.0
  %948 = vmatpush2.msra.mxu0 0.0
  %949 = vmatprep.subr.mxu0 0.0
  %950 = vmatpush2.msra.mxu0 0.0
  %951 = vmatprep.subr.mxu0 0.0
  %952 = vmatpush2.msra.mxu0 0.0
  %953 = vmatprep.subr.mxu0 0.0
  %954 = vmatpush2.msra.mxu0 0.0
  %955 = vmatprep.subr.mxu0 0.0
  %956 = vmatpush2.msra.mxu0 0.0
  %957 = vmatprep.subr.mxu0 0.0
  %958 = vmatpush2.msra.mxu0 0.0
  %959 = vmatprep.mubr.f32.mxu0 0.0
  %v960 = vand.u32 %v35, 4294901760
  %961 = vmatmul.mubr.f32.gmra.mxu0 %v960
  %v962 = vpop.f32.mrf.mxu0
  %v963 = vadd.f32 %v889, %v962
  %v964 = vpop.f32.mrf.mxu0
  %v965 = vadd.f32 %v891, %v964
  %966 = vdwg.mxu0
  %v968 = vsel %vm33, %v15, 0
  %970 = vmatprep.subr.mxu0 0.0
  %971 = vmatpush1.msra.mxu0 0.0
  %972 = vmatprep.subr.mxu0 0.0
  %973 = vmatpush1.msra.mxu0 0.0
  %974 = vmatprep.subr.mxu0 0.0
  %975 = vmatpush1.msra.mxu0 0.0
  %976 = vmatprep.subr.mxu0 0.0
  %977 = vmatpush1.msra.mxu0 0.0
  %978 = vmatprep.subr.mxu0 0.0
  %979 = vmatpush1.msra.mxu0 0.0
  %980 = vmatprep.subr.mxu0 0.0
  %981 = vmatpush1.msra.mxu0 0.0
  %982 = vmatprep.subr.mxu0 0.0
  %983 = vmatpush1.msra.mxu0 0.0
  %984 = vmatprep.subr.mxu0 0.0
  %985 = vmatpush1.msra.mxu0 0.0
  %986 = vmatprep.subr.mxu0 0.0
  %987 = vmatpush1.msra.mxu0 0.0
  %988 = vmatprep.subr.mxu0 0.0
  %989 = vmatpush1.msra.mxu0 0.0
  %990 = vmatprep.subr.mxu0 0.0
  %991 = vmatpush1.msra.mxu0 0.0
  %992 = vmatprep.subr.mxu0 0.0
  %993 = vmatpush1.msra.mxu0 0.0
  %994 = vmatprep.subr.mxu0 0.0
  %995 = vmatpush1.msra.mxu0 0.0
  %996 = vmatprep.subr.mxu0 0.0
  %997 = vmatpush1.msra.mxu0 0.0
  %998 = vmatprep.subr.mxu0 0.0
  %999 = vmatpush1.msra.mxu0 0.0
  %v1000 = vand.u32 %v12, 4294901760
  %1001 = vmatprep.subr.mxu0 %v1000
  %v1002 = vand.u32 %v11, 4294901760
  %1003 = vmatpush1.msra.mxu0 %v1002
  %1004 = vmatprep.subr.mxu0 0.0
  %1005 = vmatpush2.msra.mxu0 0.0
  %1006 = vmatprep.subr.mxu0 0.0
  %1007 = vmatpush2.msra.mxu0 0.0
  %1008 = vmatprep.subr.mxu0 0.0
  %1009 = vmatpush2.msra.mxu0 0.0
  %1010 = vmatprep.subr.mxu0 0.0
  %1011 = vmatpush2.msra.mxu0 0.0
  %1012 = vmatprep.subr.mxu0 0.0
  %1013 = vmatpush2.msra.mxu0 0.0
  %1014 = vmatprep.subr.mxu0 0.0
  %1015 = vmatpush2.msra.mxu0 0.0
  %1016 = vmatprep.subr.mxu0 0.0
  %1017 = vmatpush2.msra.mxu0 0.0
  %1018 = vmatprep.subr.mxu0 0.0
  %1019 = vmatpush2.msra.mxu0 0.0
  %1020 = vmatprep.subr.mxu0 0.0
  %1021 = vmatpush2.msra.mxu0 0.0
  %1022 = vmatprep.subr.mxu0 0.0
  %1023 = vmatpush2.msra.mxu0 0.0
  %1024 = vmatprep.subr.mxu0 0.0
  %1025 = vmatpush2.msra.mxu0 0.0
  %1026 = vmatprep.subr.mxu0 0.0
  %1027 = vmatpush2.msra.mxu0 0.0
  %1028 = vmatprep.subr.mxu0 0.0
  %1029 = vmatpush2.msra.mxu0 0.0
  %1030 = vmatprep.subr.mxu0 0.0
  %1031 = vmatpush2.msra.mxu0 0.0
  %1032 = vmatprep.subr.mxu0 0.0
  %1033 = vmatpush2.msra.mxu0 0.0
  %1034 = vmatprep.subr.mxu0 0.0
  %1035 = vmatpush2.msra.mxu0 0.0
  %1036 = vmatprep.mubr.f32.mxu0 0.0
  %v1037 = vand.u32 %v968, 4294901760
  %v1038 = vsub.f32 %v968, %v1037
  %v1039 = vand.u32 %v1038, 4294901760
  %v1040 = vsub.f32 %v1038, %v1039
  %v1041 = vand.u32 %v1040, 4294901760
  %1042 = vmatmul.mubr.f32.gmra.mxu0 %v1041
  %v1043 = vpop.f32.mrf.mxu0
  %v1044 = vadd.f32 %v498, %v1043
  %v1045 = vpop.f32.mrf.mxu0
  %v1046 = vadd.f32 %v500, %v1045
  %1047 = vdwg.mxu0
  %1048 = vmatprep.subr.mxu0 0.0
  %1049 = vmatpush1.msra.mxu0 0.0
  %1050 = vmatprep.subr.mxu0 0.0
  %1051 = vmatpush1.msra.mxu0 0.0
  %1052 = vmatprep.subr.mxu0 0.0
  %1053 = vmatpush1.msra.mxu0 0.0
  %1054 = vmatprep.subr.mxu0 0.0
  %1055 = vmatpush1.msra.mxu0 0.0
  %1056 = vmatprep.subr.mxu0 0.0
  %1057 = vmatpush1.msra.mxu0 0.0
  %1058 = vmatprep.subr.mxu0 0.0
  %1059 = vmatpush1.msra.mxu0 0.0
  %1060 = vmatprep.subr.mxu0 0.0
  %1061 = vmatpush1.msra.mxu0 0.0
  %1062 = vmatprep.subr.mxu0 0.0
  %1063 = vmatpush1.msra.mxu0 0.0
  %1064 = vmatprep.subr.mxu0 0.0
  %1065 = vmatpush1.msra.mxu0 0.0
  %1066 = vmatprep.subr.mxu0 0.0
  %1067 = vmatpush1.msra.mxu0 0.0
  %1068 = vmatprep.subr.mxu0 0.0
  %1069 = vmatpush1.msra.mxu0 0.0
  %1070 = vmatprep.subr.mxu0 0.0
  %1071 = vmatpush1.msra.mxu0 0.0
  %1072 = vmatprep.subr.mxu0 0.0
  %1073 = vmatpush1.msra.mxu0 0.0
  %1074 = vmatprep.subr.mxu0 0.0
  %1075 = vmatpush1.msra.mxu0 0.0
  %1076 = vmatprep.subr.mxu0 0.0
  %1077 = vmatpush1.msra.mxu0 0.0
  %v1078 = vand.u32 %v12, 4294901760
  %v1079 = vsub.f32 %v12, %v1078
  %v1080 = vand.u32 %v1079, 4294901760
  %v1081 = vsub.f32 %v1079, %v1080
  %v1082 = vand.u32 %v1081, 4294901760
  %1083 = vmatprep.subr.mxu0 %v1082
  %v1084 = vand.u32 %v11, 4294901760
  %v1085 = vsub.f32 %v11, %v1084
  %v1086 = vand.u32 %v1085, 4294901760
  %v1087 = vsub.f32 %v1085, %v1086
  %v1088 = vand.u32 %v1087, 4294901760
  %1089 = vmatpush1.msra.mxu0 %v1088
  %1090 = vmatprep.subr.mxu0 0.0
  %1091 = vmatpush2.msra.mxu0 0.0
  %1092 = vmatprep.subr.mxu0 0.0
  %1093 = vmatpush2.msra.mxu0 0.0
  %1094 = vmatprep.subr.mxu0 0.0
  %1095 = vmatpush2.msra.mxu0 0.0
  %1096 = vmatprep.subr.mxu0 0.0
  %1097 = vmatpush2.msra.mxu0 0.0
  %1098 = vmatprep.subr.mxu0 0.0
  %1099 = vmatpush2.msra.mxu0 0.0
  %1100 = vmatprep.subr.mxu0 0.0
  %1101 = vmatpush2.msra.mxu0 0.0
  %1102 = vmatprep.subr.mxu0 0.0
  %1103 = vmatpush2.msra.mxu0 0.0
  %1104 = vmatprep.subr.mxu0 0.0
  %1105 = vmatpush2.msra.mxu0 0.0
  %1106 = vmatprep.subr.mxu0 0.0
  %1107 = vmatpush2.msra.mxu0 0.0
  %1108 = vmatprep.subr.mxu0 0.0
  %1109 = vmatpush2.msra.mxu0 0.0
  %1110 = vmatprep.subr.mxu0 0.0
  %1111 = vmatpush2.msra.mxu0 0.0
  %1112 = vmatprep.subr.mxu0 0.0
  %1113 = vmatpush2.msra.mxu0 0.0
  %1114 = vmatprep.subr.mxu0 0.0
  %1115 = vmatpush2.msra.mxu0 0.0
  %1116 = vmatprep.subr.mxu0 0.0
  %1117 = vmatpush2.msra.mxu0 0.0
  %1118 = vmatprep.subr.mxu0 0.0
  %1119 = vmatpush2.msra.mxu0 0.0
  %1120 = vmatprep.subr.mxu0 0.0
  %1121 = vmatpush2.msra.mxu0 0.0
  %1122 = vmatprep.mubr.f32.mxu0 0.0
  %v1123 = vand.u32 %v968, 4294901760
  %1124 = vmatmul.mubr.f32.gmra.mxu0 %v1123
  %v1125 = vpop.f32.mrf.mxu0
  %v1126 = vadd.f32 %v1044, %v1125
  %v1127 = vpop.f32.mrf.mxu0
  %v1128 = vadd.f32 %v1046, %v1127
  %1129 = vdwg.mxu0
  %1130 = vmatprep.subr.mxu0 0.0
  %1131 = vmatpush1.msra.mxu0 0.0
  %1132 = vmatprep.subr.mxu0 0.0
  %1133 = vmatpush1.msra.mxu0 0.0
  %1134 = vmatprep.subr.mxu0 0.0
  %1135 = vmatpush1.msra.mxu0 0.0
  %1136 = vmatprep.subr.mxu0 0.0
  %1137 = vmatpush1.msra.mxu0 0.0
  %1138 = vmatprep.subr.mxu0 0.0
  %1139 = vmatpush1.msra.mxu0 0.0
  %1140 = vmatprep.subr.mxu0 0.0
  %1141 = vmatpush1.msra.mxu0 0.0
  %1142 = vmatprep.subr.mxu0 0.0
  %1143 = vmatpush1.msra.mxu0 0.0
  %1144 = vmatprep.subr.mxu0 0.0
  %1145 = vmatpush1.msra.mxu0 0.0
  %1146 = vmatprep.subr.mxu0 0.0
  %1147 = vmatpush1.msra.mxu0 0.0
  %1148 = vmatprep.subr.mxu0 0.0
  %1149 = vmatpush1.msra.mxu0 0.0
  %1150 = vmatprep.subr.mxu0 0.0
  %1151 = vmatpush1.msra.mxu0 0.0
  %1152 = vmatprep.subr.mxu0 0.0
  %1153 = vmatpush1.msra.mxu0 0.0
  %1154 = vmatprep.subr.mxu0 0.0
  %1155 = vmatpush1.msra.mxu0 0.0
  %1156 = vmatprep.subr.mxu0 0.0
  %1157 = vmatpush1.msra.mxu0 0.0
  %1158 = vmatprep.subr.mxu0 0.0
  %1159 = vmatpush1.msra.mxu0 0.0
  %v1160 = vand.u32 %v12, 4294901760
  %v1161 = vsub.f32 %v12, %v1160
  %1162 = vmatprep.subr.mxu0 %v1161
  %v1163 = vand.u32 %v11, 4294901760
  %v1164 = vsub.f32 %v11, %v1163
  %1165 = vmatpush1.msra.mxu0 %v1164
  %1166 = vmatprep.subr.mxu0 0.0
  %1167 = vmatpush2.msra.mxu0 0.0
  %1168 = vmatprep.subr.mxu0 0.0
  %1169 = vmatpush2.msra.mxu0 0.0
  %1170 = vmatprep.subr.mxu0 0.0
  %1171 = vmatpush2.msra.mxu0 0.0
  %1172 = vmatprep.subr.mxu0 0.0
  %1173 = vmatpush2.msra.mxu0 0.0
  %1174 = vmatprep.subr.mxu0 0.0
  %1175 = vmatpush2.msra.mxu0 0.0
  %1176 = vmatprep.subr.mxu0 0.0
  %1177 = vmatpush2.msra.mxu0 0.0
  %1178 = vmatprep.subr.mxu0 0.0
  %1179 = vmatpush2.msra.mxu0 0.0
  %1180 = vmatprep.subr.mxu0 0.0
  %1181 = vmatpush2.msra.mxu0 0.0
  %1182 = vmatprep.subr.mxu0 0.0
  %1183 = vmatpush2.msra.mxu0 0.0
  %1184 = vmatprep.subr.mxu0 0.0
  %1185 = vmatpush2.msra.mxu0 0.0
  %1186 = vmatprep.subr.mxu0 0.0
  %1187 = vmatpush2.msra.mxu0 0.0
  %1188 = vmatprep.subr.mxu0 0.0
  %1189 = vmatpush2.msra.mxu0 0.0
  %1190 = vmatprep.subr.mxu0 0.0
  %1191 = vmatpush2.msra.mxu0 0.0
  %1192 = vmatprep.subr.mxu0 0.0
  %1193 = vmatpush2.msra.mxu0 0.0
  %1194 = vmatprep.subr.mxu0 0.0
  %1195 = vmatpush2.msra.mxu0 0.0
  %1196 = vmatprep.subr.mxu0 0.0
  %1197 = vmatpush2.msra.mxu0 0.0
  %1198 = vmatprep.mubr.f32.mxu0 0.0
  %v1199 = vand.u32 %v968, 4294901760
  %v1200 = vsub.f32 %v968, %v1199
  %1201 = vmatmul.mubr.f32.gmra.mxu0 %v1200
  %v1202 = vpop.f32.mrf.mxu0
  %v1203 = vadd.f32 %v1126, %v1202
  %v1204 = vpop.f32.mrf.mxu0
  %v1205 = vadd.f32 %v1128, %v1204
  %1206 = vdwg.mxu0
  %1207 = vmatprep.subr.mxu0 0.0
  %1208 = vmatpush1.msra.mxu0 0.0
  %1209 = vmatprep.subr.mxu0 0.0
  %1210 = vmatpush1.msra.mxu0 0.0
  %1211 = vmatprep.subr.mxu0 0.0
  %1212 = vmatpush1.msra.mxu0 0.0
  %1213 = vmatprep.subr.mxu0 0.0
  %1214 = vmatpush1.msra.mxu0 0.0
  %1215 = vmatprep.subr.mxu0 0.0
  %1216 = vmatpush1.msra.mxu0 0.0
  %1217 = vmatprep.subr.mxu0 0.0
  %1218 = vmatpush1.msra.mxu0 0.0
  %1219 = vmatprep.subr.mxu0 0.0
  %1220 = vmatpush1.msra.mxu0 0.0
  %1221 = vmatprep.subr.mxu0 0.0
  %1222 = vmatpush1.msra.mxu0 0.0
  %1223 = vmatprep.subr.mxu0 0.0
  %1224 = vmatpush1.msra.mxu0 0.0
  %1225 = vmatprep.subr.mxu0 0.0
  %1226 = vmatpush1.msra.mxu0 0.0
  %1227 = vmatprep.subr.mxu0 0.0
  %1228 = vmatpush1.msra.mxu0 0.0
  %1229 = vmatprep.subr.mxu0 0.0
  %1230 = vmatpush1.msra.mxu0 0.0
  %1231 = vmatprep.subr.mxu0 0.0
  %1232 = vmatpush1.msra.mxu0 0.0
  %1233 = vmatprep.subr.mxu0 0.0
  %1234 = vmatpush1.msra.mxu0 0.0
  %1235 = vmatprep.subr.mxu0 0.0
  %1236 = vmatpush1.msra.mxu0 0.0
  %v1237 = vand.u32 %v12, 4294901760
  %1238 = vmatprep.subr.mxu0 %v1237
  %v1239 = vand.u32 %v11, 4294901760
  %1240 = vmatpush1.msra.mxu0 %v1239
  %1241 = vmatprep.subr.mxu0 0.0
  %1242 = vmatpush2.msra.mxu0 0.0
  %1243 = vmatprep.subr.mxu0 0.0
  %1244 = vmatpush2.msra.mxu0 0.0
  %1245 = vmatprep.subr.mxu0 0.0
  %1246 = vmatpush2.msra.mxu0 0.0
  %1247 = vmatprep.subr.mxu0 0.0
  %1248 = vmatpush2.msra.mxu0 0.0
  %1249 = vmatprep.subr.mxu0 0.0
  %1250 = vmatpush2.msra.mxu0 0.0
  %1251 = vmatprep.subr.mxu0 0.0
  %1252 = vmatpush2.msra.mxu0 0.0
  %1253 = vmatprep.subr.mxu0 0.0
  %1254 = vmatpush2.msra.mxu0 0.0
  %1255 = vmatprep.subr.mxu0 0.0
  %1256 = vmatpush2.msra.mxu0 0.0
  %1257 = vmatprep.subr.mxu0 0.0
  %1258 = vmatpush2.msra.mxu0 0.0
  %1259 = vmatprep.subr.mxu0 0.0
  %1260 = vmatpush2.msra.mxu0 0.0
  %1261 = vmatprep.subr.mxu0 0.0
  %1262 = vmatpush2.msra.mxu0 0.0
  %1263 = vmatprep.subr.mxu0 0.0
  %1264 = vmatpush2.msra.mxu0 0.0
  %1265 = vmatprep.subr.mxu0 0.0
  %1266 = vmatpush2.msra.mxu0 0.0
  %1267 = vmatprep.subr.mxu0 0.0
  %1268 = vmatpush2.msra.mxu0 0.0
  %1269 = vmatprep.subr.mxu0 0.0
  %1270 = vmatpush2.msra.mxu0 0.0
  %1271 = vmatprep.subr.mxu0 0.0
  %1272 = vmatpush2.msra.mxu0 0.0
  %1273 = vmatprep.mubr.f32.mxu0 0.0
  %v1274 = vand.u32 %v968, 4294901760
  %v1275 = vsub.f32 %v968, %v1274
  %v1276 = vand.u32 %v1275, 4294901760
  %1277 = vmatmul.mubr.f32.gmra.mxu0 %v1276
  %v1278 = vpop.f32.mrf.mxu0
  %v1279 = vadd.f32 %v1203, %v1278
  %v1280 = vpop.f32.mrf.mxu0
  %v1281 = vadd.f32 %v1205, %v1280
  %1282 = vdwg.mxu0
  %1283 = vmatprep.subr.mxu0 0.0
  %1284 = vmatpush1.msra.mxu0 0.0
  %1285 = vmatprep.subr.mxu0 0.0
  %1286 = vmatpush1.msra.mxu0 0.0
  %1287 = vmatprep.subr.mxu0 0.0
  %1288 = vmatpush1.msra.mxu0 0.0
  %1289 = vmatprep.subr.mxu0 0.0
  %1290 = vmatpush1.msra.mxu0 0.0
  %1291 = vmatprep.subr.mxu0 0.0
  %1292 = vmatpush1.msra.mxu0 0.0
  %1293 = vmatprep.subr.mxu0 0.0
  %1294 = vmatpush1.msra.mxu0 0.0
  %1295 = vmatprep.subr.mxu0 0.0
  %1296 = vmatpush1.msra.mxu0 0.0
  %1297 = vmatprep.subr.mxu0 0.0
  %1298 = vmatpush1.msra.mxu0 0.0
  %1299 = vmatprep.subr.mxu0 0.0
  %1300 = vmatpush1.msra.mxu0 0.0
  %1301 = vmatprep.subr.mxu0 0.0
  %1302 = vmatpush1.msra.mxu0 0.0
  %1303 = vmatprep.subr.mxu0 0.0
  %1304 = vmatpush1.msra.mxu0 0.0
  %1305 = vmatprep.subr.mxu0 0.0
  %1306 = vmatpush1.msra.mxu0 0.0
  %1307 = vmatprep.subr.mxu0 0.0
  %1308 = vmatpush1.msra.mxu0 0.0
  %1309 = vmatprep.subr.mxu0 0.0
  %1310 = vmatpush1.msra.mxu0 0.0
  %1311 = vmatprep.subr.mxu0 0.0
  %1312 = vmatpush1.msra.mxu0 0.0
  %v1313 = vand.u32 %v12, 4294901760
  %v1314 = vsub.f32 %v12, %v1313
  %v1315 = vand.u32 %v1314, 4294901760
  %1316 = vmatprep.subr.mxu0 %v1315
  %v1317 = vand.u32 %v11, 4294901760
  %v1318 = vsub.f32 %v11, %v1317
  %v1319 = vand.u32 %v1318, 4294901760
  %1320 = vmatpush1.msra.mxu0 %v1319
  %1321 = vmatprep.subr.mxu0 0.0
  %1322 = vmatpush2.msra.mxu0 0.0
  %1323 = vmatprep.subr.mxu0 0.0
  %1324 = vmatpush2.msra.mxu0 0.0
  %1325 = vmatprep.subr.mxu0 0.0
  %1326 = vmatpush2.msra.mxu0 0.0
  %1327 = vmatprep.subr.mxu0 0.0
  %1328 = vmatpush2.msra.mxu0 0.0
  %1329 = vmatprep.subr.mxu0 0.0
  %1330 = vmatpush2.msra.mxu0 0.0
  %1331 = vmatprep.subr.mxu0 0.0
  %1332 = vmatpush2.msra.mxu0 0.0
  %1333 = vmatprep.subr.mxu0 0.0
  %1334 = vmatpush2.msra.mxu0 0.0
  %1335 = vmatprep.subr.mxu0 0.0
  %1336 = vmatpush2.msra.mxu0 0.0
  %1337 = vmatprep.subr.mxu0 0.0
  %1338 = vmatpush2.msra.mxu0 0.0
  %1339 = vmatprep.subr.mxu0 0.0
  %1340 = vmatpush2.msra.mxu0 0.0
  %1341 = vmatprep.subr.mxu0 0.0
  %1342 = vmatpush2.msra.mxu0 0.0
  %1343 = vmatprep.subr.mxu0 0.0
  %1344 = vmatpush2.msra.mxu0 0.0
  %1345 = vmatprep.subr.mxu0 0.0
  %1346 = vmatpush2.msra.mxu0 0.0
  %1347 = vmatprep.subr.mxu0 0.0
  %1348 = vmatpush2.msra.mxu0 0.0
  %1349 = vmatprep.subr.mxu0 0.0
  %1350 = vmatpush2.msra.mxu0 0.0
  %1351 = vmatprep.subr.mxu0 0.0
  %1352 = vmatpush2.msra.mxu0 0.0
  %1353 = vmatprep.mubr.f32.mxu0 0.0
  %v1354 = vand.u32 %v968, 4294901760
  %1355 = vmatmul.mubr.f32.gmra.mxu0 %v1354
  %v1356 = vpop.f32.mrf.mxu0
  %v1357 = vadd.f32 %v1279, %v1356
  %v1358 = vpop.f32.mrf.mxu0
  %v1359 = vadd.f32 %v1281, %v1358
  %1360 = vdwg.mxu0
  %1361 = vmatprep.subr.mxu0 0.0
  %1362 = vmatpush1.msra.mxu0 0.0
  %1363 = vmatprep.subr.mxu0 0.0
  %1364 = vmatpush1.msra.mxu0 0.0
  %1365 = vmatprep.subr.mxu0 0.0
  %1366 = vmatpush1.msra.mxu0 0.0
  %1367 = vmatprep.subr.mxu0 0.0
  %1368 = vmatpush1.msra.mxu0 0.0
  %1369 = vmatprep.subr.mxu0 0.0
  %1370 = vmatpush1.msra.mxu0 0.0
  %1371 = vmatprep.subr.mxu0 0.0
  %1372 = vmatpush1.msra.mxu0 0.0
  %1373 = vmatprep.subr.mxu0 0.0
  %1374 = vmatpush1.msra.mxu0 0.0
  %1375 = vmatprep.subr.mxu0 0.0
  %1376 = vmatpush1.msra.mxu0 0.0
  %1377 = vmatprep.subr.mxu0 0.0
  %1378 = vmatpush1.msra.mxu0 0.0
  %1379 = vmatprep.subr.mxu0 0.0
  %1380 = vmatpush1.msra.mxu0 0.0
  %1381 = vmatprep.subr.mxu0 0.0
  %1382 = vmatpush1.msra.mxu0 0.0
  %1383 = vmatprep.subr.mxu0 0.0
  %1384 = vmatpush1.msra.mxu0 0.0
  %1385 = vmatprep.subr.mxu0 0.0
  %1386 = vmatpush1.msra.mxu0 0.0
  %1387 = vmatprep.subr.mxu0 0.0
  %1388 = vmatpush1.msra.mxu0 0.0
  %1389 = vmatprep.subr.mxu0 0.0
  %1390 = vmatpush1.msra.mxu0 0.0
  %v1391 = vand.u32 %v12, 4294901760
  %1392 = vmatprep.subr.mxu0 %v1391
  %v1393 = vand.u32 %v11, 4294901760
  %1394 = vmatpush1.msra.mxu0 %v1393
  %1395 = vmatprep.subr.mxu0 0.0
  %1396 = vmatpush2.msra.mxu0 0.0
  %1397 = vmatprep.subr.mxu0 0.0
  %1398 = vmatpush2.msra.mxu0 0.0
  %1399 = vmatprep.subr.mxu0 0.0
  %1400 = vmatpush2.msra.mxu0 0.0
  %1401 = vmatprep.subr.mxu0 0.0
  %1402 = vmatpush2.msra.mxu0 0.0
  %1403 = vmatprep.subr.mxu0 0.0
  %1404 = vmatpush2.msra.mxu0 0.0
  %1405 = vmatprep.subr.mxu0 0.0
  %1406 = vmatpush2.msra.mxu0 0.0
  %1407 = vmatprep.subr.mxu0 0.0
  %1408 = vmatpush2.msra.mxu0 0.0
  %1409 = vmatprep.subr.mxu0 0.0
  %1410 = vmatpush2.msra.mxu0 0.0
  %1411 = vmatprep.subr.mxu0 0.0
  %1412 = vmatpush2.msra.mxu0 0.0
  %1413 = vmatprep.subr.mxu0 0.0
  %1414 = vmatpush2.msra.mxu0 0.0
  %1415 = vmatprep.subr.mxu0 0.0
  %1416 = vmatpush2.msra.mxu0 0.0
  %1417 = vmatprep.subr.mxu0 0.0
  %1418 = vmatpush2.msra.mxu0 0.0
  %1419 = vmatprep.subr.mxu0 0.0
  %1420 = vmatpush2.msra.mxu0 0.0
  %1421 = vmatprep.subr.mxu0 0.0
  %1422 = vmatpush2.msra.mxu0 0.0
  %1423 = vmatprep.subr.mxu0 0.0
  %1424 = vmatpush2.msra.mxu0 0.0
  %1425 = vmatprep.subr.mxu0 0.0
  %1426 = vmatpush2.msra.mxu0 0.0
  %1427 = vmatprep.mubr.f32.mxu0 0.0
  %v1428 = vand.u32 %v968, 4294901760
  %1429 = vmatmul.mubr.f32.gmra.mxu0 %v1428
  %v1430 = vpop.f32.mrf.mxu0
  %v1431 = vadd.f32 %v1357, %v1430
  %v1432 = vpop.f32.mrf.mxu0
  %v1433 = vadd.f32 %v1359, %v1432
  %1434 = vdwg.mxu0
  %1435 = vmatprep.subr.mxu0 0.0
  %1436 = vmatpush1.msra.mxu0 0.0
  %1437 = vmatprep.subr.mxu0 0.0
  %1438 = vmatpush1.msra.mxu0 0.0
  %1439 = vmatprep.subr.mxu0 0.0
  %1440 = vmatpush1.msra.mxu0 0.0
  %1441 = vmatprep.subr.mxu0 0.0
  %1442 = vmatpush1.msra.mxu0 0.0
  %1443 = vmatprep.subr.mxu0 0.0
  %1444 = vmatpush1.msra.mxu0 0.0
  %1445 = vmatprep.subr.mxu0 0.0
  %1446 = vmatpush1.msra.mxu0 0.0
  %1447 = vmatprep.subr.mxu0 0.0
  %1448 = vmatpush1.msra.mxu0 0.0
  %1449 = vmatprep.subr.mxu0 0.0
  %1450 = vmatpush1.msra.mxu0 0.0
  %1451 = vmatprep.subr.mxu0 0.0
  %1452 = vmatpush1.msra.mxu0 0.0
  %1453 = vmatprep.subr.mxu0 0.0
  %1454 = vmatpush1.msra.mxu0 0.0
  %1455 = vmatprep.subr.mxu0 0.0
  %1456 = vmatpush1.msra.mxu0 0.0
  %1457 = vmatprep.subr.mxu0 0.0
  %1458 = vmatpush1.msra.mxu0 0.0
  %1459 = vmatprep.subr.mxu0 0.0
  %1460 = vmatpush1.msra.mxu0 0.0
  %1461 = vmatprep.subr.mxu0 0.0
  %1462 = vmatpush1.msra.mxu0 0.0
  %1463 = vmatprep.subr.mxu0 0.0
  %1464 = vmatpush1.msra.mxu0 0.0
  %v1465 = vand.u32 %v14, 4294901760
  %1466 = vmatprep.subr.mxu0 %v1465
  %v1467 = vand.u32 %v13, 4294901760
  %1468 = vmatpush1.msra.mxu0 %v1467
  %1469 = vmatprep.subr.mxu0 0.0
  %1470 = vmatpush2.msra.mxu0 0.0
  %1471 = vmatprep.subr.mxu0 0.0
  %1472 = vmatpush2.msra.mxu0 0.0
  %1473 = vmatprep.subr.mxu0 0.0
  %1474 = vmatpush2.msra.mxu0 0.0
  %1475 = vmatprep.subr.mxu0 0.0
  %1476 = vmatpush2.msra.mxu0 0.0
  %1477 = vmatprep.subr.mxu0 0.0
  %1478 = vmatpush2.msra.mxu0 0.0
  %1479 = vmatprep.subr.mxu0 0.0
  %1480 = vmatpush2.msra.mxu0 0.0
  %1481 = vmatprep.subr.mxu0 0.0
  %1482 = vmatpush2.msra.mxu0 0.0
  %1483 = vmatprep.subr.mxu0 0.0
  %1484 = vmatpush2.msra.mxu0 0.0
  %1485 = vmatprep.subr.mxu0 0.0
  %1486 = vmatpush2.msra.mxu0 0.0
  %1487 = vmatprep.subr.mxu0 0.0
  %1488 = vmatpush2.msra.mxu0 0.0
  %1489 = vmatprep.subr.mxu0 0.0
  %1490 = vmatpush2.msra.mxu0 0.0
  %1491 = vmatprep.subr.mxu0 0.0
  %1492 = vmatpush2.msra.mxu0 0.0
  %1493 = vmatprep.subr.mxu0 0.0
  %1494 = vmatpush2.msra.mxu0 0.0
  %1495 = vmatprep.subr.mxu0 0.0
  %1496 = vmatpush2.msra.mxu0 0.0
  %1497 = vmatprep.subr.mxu0 0.0
  %1498 = vmatpush2.msra.mxu0 0.0
  %1499 = vmatprep.subr.mxu0 0.0
  %1500 = vmatpush2.msra.mxu0 0.0
  %1501 = vmatprep.mubr.f32.mxu0 0.0
  %v1502 = vand.u32 %v968, 4294901760
  %v1503 = vsub.f32 %v968, %v1502
  %v1504 = vand.u32 %v1503, 4294901760
  %v1505 = vsub.f32 %v1503, %v1504
  %v1506 = vand.u32 %v1505, 4294901760
  %1507 = vmatmul.mubr.f32.gmra.mxu0 %v1506
  %v1508 = vpop.f32.mrf.mxu0
  %v1509 = vadd.f32 %v963, %v1508
  %v1510 = vpop.f32.mrf.mxu0
  %v1511 = vadd.f32 %v965, %v1510
  %1512 = vdwg.mxu0
  %1513 = vmatprep.subr.mxu0 0.0
  %1514 = vmatpush1.msra.mxu0 0.0
  %1515 = vmatprep.subr.mxu0 0.0
  %1516 = vmatpush1.msra.mxu0 0.0
  %1517 = vmatprep.subr.mxu0 0.0
  %1518 = vmatpush1.msra.mxu0 0.0
  %1519 = vmatprep.subr.mxu0 0.0
  %1520 = vmatpush1.msra.mxu0 0.0
  %1521 = vmatprep.subr.mxu0 0.0
  %1522 = vmatpush1.msra.mxu0 0.0
  %1523 = vmatprep.subr.mxu0 0.0
  %1524 = vmatpush1.msra.mxu0 0.0
  %1525 = vmatprep.subr.mxu0 0.0
  %1526 = vmatpush1.msra.mxu0 0.0
  %1527 = vmatprep.subr.mxu0 0.0
  %1528 = vmatpush1.msra.mxu0 0.0
  %1529 = vmatprep.subr.mxu0 0.0
  %1530 = vmatpush1.msra.mxu0 0.0
  %1531 = vmatprep.subr.mxu0 0.0
  %1532 = vmatpush1.msra.mxu0 0.0
  %1533 = vmatprep.subr.mxu0 0.0
  %1534 = vmatpush1.msra.mxu0 0.0
  %1535 = vmatprep.subr.mxu0 0.0
  %1536 = vmatpush1.msra.mxu0 0.0
  %1537 = vmatprep.subr.mxu0 0.0
  %1538 = vmatpush1.msra.mxu0 0.0
  %1539 = vmatprep.subr.mxu0 0.0
  %1540 = vmatpush1.msra.mxu0 0.0
  %1541 = vmatprep.subr.mxu0 0.0
  %1542 = vmatpush1.msra.mxu0 0.0
  %v1543 = vand.u32 %v14, 4294901760
  %v1544 = vsub.f32 %v14, %v1543
  %v1545 = vand.u32 %v1544, 4294901760
  %v1546 = vsub.f32 %v1544, %v1545
  %v1547 = vand.u32 %v1546, 4294901760
  %1548 = vmatprep.subr.mxu0 %v1547
  %v1549 = vand.u32 %v13, 4294901760
  %v1550 = vsub.f32 %v13, %v1549
  %v1551 = vand.u32 %v1550, 4294901760
  %v1552 = vsub.f32 %v1550, %v1551
  %v1553 = vand.u32 %v1552, 4294901760
  %1554 = vmatpush1.msra.mxu0 %v1553
  %1555 = vmatprep.subr.mxu0 0.0
  %1556 = vmatpush2.msra.mxu0 0.0
  %1557 = vmatprep.subr.mxu0 0.0
  %1558 = vmatpush2.msra.mxu0 0.0
  %1559 = vmatprep.subr.mxu0 0.0
  %1560 = vmatpush2.msra.mxu0 0.0
  %1561 = vmatprep.subr.mxu0 0.0
  %1562 = vmatpush2.msra.mxu0 0.0
  %1563 = vmatprep.subr.mxu0 0.0
  %1564 = vmatpush2.msra.mxu0 0.0
  %1565 = vmatprep.subr.mxu0 0.0
  %1566 = vmatpush2.msra.mxu0 0.0
  %1567 = vmatprep.subr.mxu0 0.0
  %1568 = vmatpush2.msra.mxu0 0.0
  %1569 = vmatprep.subr.mxu0 0.0
  %1570 = vmatpush2.msra.mxu0 0.0
  %1571 = vmatprep.subr.mxu0 0.0
  %1572 = vmatpush2.msra.mxu0 0.0
  %1573 = vmatprep.subr.mxu0 0.0
  %1574 = vmatpush2.msra.mxu0 0.0
  %1575 = vmatprep.subr.mxu0 0.0
  %1576 = vmatpush2.msra.mxu0 0.0
  %1577 = vmatprep.subr.mxu0 0.0
  %1578 = vmatpush2.msra.mxu0 0.0
  %1579 = vmatprep.subr.mxu0 0.0
  %1580 = vmatpush2.msra.mxu0 0.0
  %1581 = vmatprep.subr.mxu0 0.0
  %1582 = vmatpush2.msra.mxu0 0.0
  %1583 = vmatprep.subr.mxu0 0.0
  %1584 = vmatpush2.msra.mxu0 0.0
  %1585 = vmatprep.subr.mxu0 0.0
  %1586 = vmatpush2.msra.mxu0 0.0
  %1587 = vmatprep.mubr.f32.mxu0 0.0
  %v1588 = vand.u32 %v968, 4294901760
  %1589 = vmatmul.mubr.f32.gmra.mxu0 %v1588
  %v1590 = vpop.f32.mrf.mxu0
  %v1591 = vadd.f32 %v1509, %v1590
  %v1592 = vpop.f32.mrf.mxu0
  %v1593 = vadd.f32 %v1511, %v1592
  %1594 = vdwg.mxu0
  %1595 = vmatprep.subr.mxu0 0.0
  %1596 = vmatpush1.msra.mxu0 0.0
  %1597 = vmatprep.subr.mxu0 0.0
  %1598 = vmatpush1.msra.mxu0 0.0
  %1599 = vmatprep.subr.mxu0 0.0
  %1600 = vmatpush1.msra.mxu0 0.0
  %1601 = vmatprep.subr.mxu0 0.0
  %1602 = vmatpush1.msra.mxu0 0.0
  %1603 = vmatprep.subr.mxu0 0.0
  %1604 = vmatpush1.msra.mxu0 0.0
  %1605 = vmatprep.subr.mxu0 0.0
  %1606 = vmatpush1.msra.mxu0 0.0
  %1607 = vmatprep.subr.mxu0 0.0
  %1608 = vmatpush1.msra.mxu0 0.0
  %1609 = vmatprep.subr.mxu0 0.0
  %1610 = vmatpush1.msra.mxu0 0.0
  %1611 = vmatprep.subr.mxu0 0.0
  %1612 = vmatpush1.msra.mxu0 0.0
  %1613 = vmatprep.subr.mxu0 0.0
  %1614 = vmatpush1.msra.mxu0 0.0
  %1615 = vmatprep.subr.mxu0 0.0
  %1616 = vmatpush1.msra.mxu0 0.0
  %1617 = vmatprep.subr.mxu0 0.0
  %1618 = vmatpush1.msra.mxu0 0.0
  %1619 = vmatprep.subr.mxu0 0.0
  %1620 = vmatpush1.msra.mxu0 0.0
  %1621 = vmatprep.subr.mxu0 0.0
  %1622 = vmatpush1.msra.mxu0 0.0
  %1623 = vmatprep.subr.mxu0 0.0
  %1624 = vmatpush1.msra.mxu0 0.0
  %v1625 = vand.u32 %v14, 4294901760
  %v1626 = vsub.f32 %v14, %v1625
  %1627 = vmatprep.subr.mxu0 %v1626
  %v1628 = vand.u32 %v13, 4294901760
  %v1629 = vsub.f32 %v13, %v1628
  %1630 = vmatpush1.msra.mxu0 %v1629
  %1631 = vmatprep.subr.mxu0 0.0
  %1632 = vmatpush2.msra.mxu0 0.0
  %1633 = vmatprep.subr.mxu0 0.0
  %1634 = vmatpush2.msra.mxu0 0.0
  %1635 = vmatprep.subr.mxu0 0.0
  %1636 = vmatpush2.msra.mxu0 0.0
  %1637 = vmatprep.subr.mxu0 0.0
  %1638 = vmatpush2.msra.mxu0 0.0
  %1639 = vmatprep.subr.mxu0 0.0
  %1640 = vmatpush2.msra.mxu0 0.0
  %1641 = vmatprep.subr.mxu0 0.0
  %1642 = vmatpush2.msra.mxu0 0.0
  %1643 = vmatprep.subr.mxu0 0.0
  %1644 = vmatpush2.msra.mxu0 0.0
  %1645 = vmatprep.subr.mxu0 0.0
  %1646 = vmatpush2.msra.mxu0 0.0
  %1647 = vmatprep.subr.mxu0 0.0
  %1648 = vmatpush2.msra.mxu0 0.0
  %1649 = vmatprep.subr.mxu0 0.0
  %1650 = vmatpush2.msra.mxu0 0.0
  %1651 = vmatprep.subr.mxu0 0.0
  %1652 = vmatpush2.msra.mxu0 0.0
  %1653 = vmatprep.subr.mxu0 0.0
  %1654 = vmatpush2.msra.mxu0 0.0
  %1655 = vmatprep.subr.mxu0 0.0
  %1656 = vmatpush2.msra.mxu0 0.0
  %1657 = vmatprep.subr.mxu0 0.0
  %1658 = vmatpush2.msra.mxu0 0.0
  %1659 = vmatprep.subr.mxu0 0.0
  %1660 = vmatpush2.msra.mxu0 0.0
  %1661 = vmatprep.subr.mxu0 0.0
  %1662 = vmatpush2.msra.mxu0 0.0
  %1663 = vmatprep.mubr.f32.mxu0 0.0
  %v1664 = vand.u32 %v968, 4294901760
  %v1665 = vsub.f32 %v968, %v1664
  %1666 = vmatmul.mubr.f32.gmra.mxu0 %v1665
  %v1667 = vpop.f32.mrf.mxu0
  %v1668 = vadd.f32 %v1591, %v1667
  %v1669 = vpop.f32.mrf.mxu0
  %v1670 = vadd.f32 %v1593, %v1669
  %1671 = vdwg.mxu0
  %1672 = vmatprep.subr.mxu0 0.0
  %1673 = vmatpush1.msra.mxu0 0.0
  %1674 = vmatprep.subr.mxu0 0.0
  %1675 = vmatpush1.msra.mxu0 0.0
  %1676 = vmatprep.subr.mxu0 0.0
  %1677 = vmatpush1.msra.mxu0 0.0
  %1678 = vmatprep.subr.mxu0 0.0
  %1679 = vmatpush1.msra.mxu0 0.0
  %1680 = vmatprep.subr.mxu0 0.0
  %1681 = vmatpush1.msra.mxu0 0.0
  %1682 = vmatprep.subr.mxu0 0.0
  %1683 = vmatpush1.msra.mxu0 0.0
  %1684 = vmatprep.subr.mxu0 0.0
  %1685 = vmatpush1.msra.mxu0 0.0
  %1686 = vmatprep.subr.mxu0 0.0
  %1687 = vmatpush1.msra.mxu0 0.0
  %1688 = vmatprep.subr.mxu0 0.0
  %1689 = vmatpush1.msra.mxu0 0.0
  %1690 = vmatprep.subr.mxu0 0.0
  %1691 = vmatpush1.msra.mxu0 0.0
  %1692 = vmatprep.subr.mxu0 0.0
  %1693 = vmatpush1.msra.mxu0 0.0
  %1694 = vmatprep.subr.mxu0 0.0
  %1695 = vmatpush1.msra.mxu0 0.0
  %1696 = vmatprep.subr.mxu0 0.0
  %1697 = vmatpush1.msra.mxu0 0.0
  %1698 = vmatprep.subr.mxu0 0.0
  %1699 = vmatpush1.msra.mxu0 0.0
  %1700 = vmatprep.subr.mxu0 0.0
  %1701 = vmatpush1.msra.mxu0 0.0
  %v1702 = vand.u32 %v14, 4294901760
  %1703 = vmatprep.subr.mxu0 %v1702
  %v1704 = vand.u32 %v13, 4294901760
  %1705 = vmatpush1.msra.mxu0 %v1704
  %1706 = vmatprep.subr.mxu0 0.0
  %1707 = vmatpush2.msra.mxu0 0.0
  %1708 = vmatprep.subr.mxu0 0.0
  %1709 = vmatpush2.msra.mxu0 0.0
  %1710 = vmatprep.subr.mxu0 0.0
  %1711 = vmatpush2.msra.mxu0 0.0
  %1712 = vmatprep.subr.mxu0 0.0
  %1713 = vmatpush2.msra.mxu0 0.0
  %1714 = vmatprep.subr.mxu0 0.0
  %1715 = vmatpush2.msra.mxu0 0.0
  %1716 = vmatprep.subr.mxu0 0.0
  %1717 = vmatpush2.msra.mxu0 0.0
  %1718 = vmatprep.subr.mxu0 0.0
  %1719 = vmatpush2.msra.mxu0 0.0
  %1720 = vmatprep.subr.mxu0 0.0
  %1721 = vmatpush2.msra.mxu0 0.0
  %1722 = vmatprep.subr.mxu0 0.0
  %1723 = vmatpush2.msra.mxu0 0.0
  %1724 = vmatprep.subr.mxu0 0.0
  %1725 = vmatpush2.msra.mxu0 0.0
  %1726 = vmatprep.subr.mxu0 0.0
  %1727 = vmatpush2.msra.mxu0 0.0
  %1728 = vmatprep.subr.mxu0 0.0
  %1729 = vmatpush2.msra.mxu0 0.0
  %1730 = vmatprep.subr.mxu0 0.0
  %1731 = vmatpush2.msra.mxu0 0.0
  %1732 = vmatprep.subr.mxu0 0.0
  %1733 = vmatpush2.msra.mxu0 0.0
  %1734 = vmatprep.subr.mxu0 0.0
  %1735 = vmatpush2.msra.mxu0 0.0
  %1736 = vmatprep.subr.mxu0 0.0
  %1737 = vmatpush2.msra.mxu0 0.0
  %1738 = vmatprep.mubr.f32.mxu0 0.0
  %v1739 = vand.u32 %v968, 4294901760
  %v1740 = vsub.f32 %v968, %v1739
  %v1741 = vand.u32 %v1740, 4294901760
  %1742 = vmatmul.mubr.f32.gmra.mxu0 %v1741
  %v1743 = vpop.f32.mrf.mxu0
  %v1744 = vadd.f32 %v1668, %v1743
  %v1745 = vpop.f32.mrf.mxu0
  %v1746 = vadd.f32 %v1670, %v1745
  %1747 = vdwg.mxu0
  %1748 = vmatprep.subr.mxu0 0.0
  %1749 = vmatpush1.msra.mxu0 0.0
  %1750 = vmatprep.subr.mxu0 0.0
  %1751 = vmatpush1.msra.mxu0 0.0
  %1752 = vmatprep.subr.mxu0 0.0
  %1753 = vmatpush1.msra.mxu0 0.0
  %1754 = vmatprep.subr.mxu0 0.0
  %1755 = vmatpush1.msra.mxu0 0.0
  %1756 = vmatprep.subr.mxu0 0.0
  %1757 = vmatpush1.msra.mxu0 0.0
  %1758 = vmatprep.subr.mxu0 0.0
  %1759 = vmatpush1.msra.mxu0 0.0
  %1760 = vmatprep.subr.mxu0 0.0
  %1761 = vmatpush1.msra.mxu0 0.0
  %1762 = vmatprep.subr.mxu0 0.0
  %1763 = vmatpush1.msra.mxu0 0.0
  %1764 = vmatprep.subr.mxu0 0.0
  %1765 = vmatpush1.msra.mxu0 0.0
  %1766 = vmatprep.subr.mxu0 0.0
  %1767 = vmatpush1.msra.mxu0 0.0
  %1768 = vmatprep.subr.mxu0 0.0
  %1769 = vmatpush1.msra.mxu0 0.0
  %1770 = vmatprep.subr.mxu0 0.0
  %1771 = vmatpush1.msra.mxu0 0.0
  %1772 = vmatprep.subr.mxu0 0.0
  %1773 = vmatpush1.msra.mxu0 0.0
  %1774 = vmatprep.subr.mxu0 0.0
  %1775 = vmatpush1.msra.mxu0 0.0
  %1776 = vmatprep.subr.mxu0 0.0
  %1777 = vmatpush1.msra.mxu0 0.0
  %v1778 = vand.u32 %v14, 4294901760
  %v1779 = vsub.f32 %v14, %v1778
  %v1780 = vand.u32 %v1779, 4294901760
  %1781 = vmatprep.subr.mxu0 %v1780
  %v1782 = vand.u32 %v13, 4294901760
  %v1783 = vsub.f32 %v13, %v1782
  %v1784 = vand.u32 %v1783, 4294901760
  %1785 = vmatpush1.msra.mxu0 %v1784
  %1786 = vmatprep.subr.mxu0 0.0
  %1787 = vmatpush2.msra.mxu0 0.0
  %1788 = vmatprep.subr.mxu0 0.0
  %1789 = vmatpush2.msra.mxu0 0.0
  %1790 = vmatprep.subr.mxu0 0.0
  %1791 = vmatpush2.msra.mxu0 0.0
  %1792 = vmatprep.subr.mxu0 0.0
  %1793 = vmatpush2.msra.mxu0 0.0
  %1794 = vmatprep.subr.mxu0 0.0
  %1795 = vmatpush2.msra.mxu0 0.0
  %1796 = vmatprep.subr.mxu0 0.0
  %1797 = vmatpush2.msra.mxu0 0.0
  %1798 = vmatprep.subr.mxu0 0.0
  %1799 = vmatpush2.msra.mxu0 0.0
  %1800 = vmatprep.subr.mxu0 0.0
  %1801 = vmatpush2.msra.mxu0 0.0
  %1802 = vmatprep.subr.mxu0 0.0
  %1803 = vmatpush2.msra.mxu0 0.0
  %1804 = vmatprep.subr.mxu0 0.0
  %1805 = vmatpush2.msra.mxu0 0.0
  %1806 = vmatprep.subr.mxu0 0.0
  %1807 = vmatpush2.msra.mxu0 0.0
  %1808 = vmatprep.subr.mxu0 0.0
  %1809 = vmatpush2.msra.mxu0 0.0
  %1810 = vmatprep.subr.mxu0 0.0
  %1811 = vmatpush2.msra.mxu0 0.0
  %1812 = vmatprep.subr.mxu0 0.0
  %1813 = vmatpush2.msra.mxu0 0.0
  %1814 = vmatprep.subr.mxu0 0.0
  %1815 = vmatpush2.msra.mxu0 0.0
  %1816 = vmatprep.subr.mxu0 0.0
  %1817 = vmatpush2.msra.mxu0 0.0
  %1818 = vmatprep.mubr.f32.mxu0 0.0
  %v1819 = vand.u32 %v968, 4294901760
  %1820 = vmatmul.mubr.f32.gmra.mxu0 %v1819
  %v1821 = vpop.f32.mrf.mxu0
  %v1822 = vadd.f32 %v1744, %v1821
  %v1823 = vpop.f32.mrf.mxu0
  %v1824 = vadd.f32 %v1746, %v1823
  %1825 = vdwg.mxu0
  %1826 = vmatprep.subr.mxu0 0.0
  %1827 = vmatpush1.msra.mxu0 0.0
  %1828 = vmatprep.subr.mxu0 0.0
  %1829 = vmatpush1.msra.mxu0 0.0
  %1830 = vmatprep.subr.mxu0 0.0
  %1831 = vmatpush1.msra.mxu0 0.0
  %1832 = vmatprep.subr.mxu0 0.0
  %1833 = vmatpush1.msra.mxu0 0.0
  %1834 = vmatprep.subr.mxu0 0.0
  %1835 = vmatpush1.msra.mxu0 0.0
  %1836 = vmatprep.subr.mxu0 0.0
  %1837 = vmatpush1.msra.mxu0 0.0
  %1838 = vmatprep.subr.mxu0 0.0
  %1839 = vmatpush1.msra.mxu0 0.0
  %1840 = vmatprep.subr.mxu0 0.0
  %1841 = vmatpush1.msra.mxu0 0.0
  %1842 = vmatprep.subr.mxu0 0.0
  %1843 = vmatpush1.msra.mxu0 0.0
  %1844 = vmatprep.subr.mxu0 0.0
  %1845 = vmatpush1.msra.mxu0 0.0
  %1846 = vmatprep.subr.mxu0 0.0
  %1847 = vmatpush1.msra.mxu0 0.0
  %1848 = vmatprep.subr.mxu0 0.0
  %1849 = vmatpush1.msra.mxu0 0.0
  %1850 = vmatprep.subr.mxu0 0.0
  %1851 = vmatpush1.msra.mxu0 0.0
  %1852 = vmatprep.subr.mxu0 0.0
  %1853 = vmatpush1.msra.mxu0 0.0
  %1854 = vmatprep.subr.mxu0 0.0
  %1855 = vmatpush1.msra.mxu0 0.0
  %v1856 = vand.u32 %v14, 4294901760
  %1857 = vmatprep.subr.mxu0 %v1856
  %v1858 = vand.u32 %v13, 4294901760
  %1859 = vmatpush1.msra.mxu0 %v1858
  %1860 = vmatprep.subr.mxu0 0.0
  %1861 = vmatpush2.msra.mxu0 0.0
  %1862 = vmatprep.subr.mxu0 0.0
  %1863 = vmatpush2.msra.mxu0 0.0
  %1864 = vmatprep.subr.mxu0 0.0
  %1865 = vmatpush2.msra.mxu0 0.0
  %1866 = vmatprep.subr.mxu0 0.0
  %1867 = vmatpush2.msra.mxu0 0.0
  %1868 = vmatprep.subr.mxu0 0.0
  %1869 = vmatpush2.msra.mxu0 0.0
  %1870 = vmatprep.subr.mxu0 0.0
  %1871 = vmatpush2.msra.mxu0 0.0
  %1872 = vmatprep.subr.mxu0 0.0
  %1873 = vmatpush2.msra.mxu0 0.0
  %1874 = vmatprep.subr.mxu0 0.0
  %1875 = vmatpush2.msra.mxu0 0.0
  %1876 = vmatprep.subr.mxu0 0.0
  %1877 = vmatpush2.msra.mxu0 0.0
  %1878 = vmatprep.subr.mxu0 0.0
  %1879 = vmatpush2.msra.mxu0 0.0
  %1880 = vmatprep.subr.mxu0 0.0
  %1881 = vmatpush2.msra.mxu0 0.0
  %1882 = vmatprep.subr.mxu0 0.0
  %1883 = vmatpush2.msra.mxu0 0.0
  %1884 = vmatprep.subr.mxu0 0.0
  %1885 = vmatpush2.msra.mxu0 0.0
  %1886 = vmatprep.subr.mxu0 0.0
  %1887 = vmatpush2.msra.mxu0 0.0
  %1888 = vmatprep.subr.mxu0 0.0
  %1889 = vmatpush2.msra.mxu0 0.0
  %1890 = vmatprep.subr.mxu0 0.0
  %1891 = vmatpush2.msra.mxu0 0.0
  %1892 = vmatprep.mubr.f32.mxu0 0.0
  %v1893 = vand.u32 %v968, 4294901760
  %1894 = vmatmul.mubr.f32.gmra.mxu0 %v1893
  %v1895 = vpop.f32.mrf.mxu0
  %v1896 = vadd.f32 %v1822, %v1895
  %v1897 = vpop.f32.mrf.mxu0
  %v1898 = vadd.f32 %v1824, %v1897
  %1899 = vdwg.mxu0
  %1900 = vrot.lane.b32.xlu0 %v11, 112
  %v1901 = vpop.permute.xlu0 %1900
  %1902 = vrot.lane.b32.xlu0 %v12, 112
  %v1903 = vpop.permute.xlu0 %1902
  %1904 = vrot.lane.b32.xlu0 %v13, 112
  %v1905 = vpop.permute.xlu0 %1904
  %1906 = vrot.lane.b32.xlu0 %v14, 112
  %v1907 = vpop.permute.xlu0 %1906
  %vm1908 = vcmp.lt.s32.totalorder %v25, 112
  %v1909 = vsel %vm1908, %v1905, %v1907
  %v1910 = vsel %vm1908, %v1903, %v1905
  %v1911 = vsel %vm1908, %v1901, %v1903
  %v1912 = vsel %vm1908, %v1907, %v1901
  %s1913 = scalar_lea.vmem %s1, 16
  %v1914 = vld [vmem:[%s1913] sm:$0xff]
  %v1916 = vsel %vm33, %v1914, 0
  %1918 = vmatprep.subr.mxu0 0.0
  %1919 = vmatpush1.msra.mxu0 0.0
  %1920 = vmatprep.subr.mxu0 0.0
  %1921 = vmatpush1.msra.mxu0 0.0
  %1922 = vmatprep.subr.mxu0 0.0
  %1923 = vmatpush1.msra.mxu0 0.0
  %1924 = vmatprep.subr.mxu0 0.0
  %1925 = vmatpush1.msra.mxu0 0.0
  %1926 = vmatprep.subr.mxu0 0.0
  %1927 = vmatpush1.msra.mxu0 0.0
  %1928 = vmatprep.subr.mxu0 0.0
  %1929 = vmatpush1.msra.mxu0 0.0
  %1930 = vmatprep.subr.mxu0 0.0
  %1931 = vmatpush1.msra.mxu0 0.0
  %1932 = vmatprep.subr.mxu0 0.0
  %1933 = vmatpush1.msra.mxu0 0.0
  %1934 = vmatprep.subr.mxu0 0.0
  %1935 = vmatpush1.msra.mxu0 0.0
  %1936 = vmatprep.subr.mxu0 0.0
  %1937 = vmatpush1.msra.mxu0 0.0
  %1938 = vmatprep.subr.mxu0 0.0
  %1939 = vmatpush1.msra.mxu0 0.0
  %1940 = vmatprep.subr.mxu0 0.0
  %1941 = vmatpush1.msra.mxu0 0.0
  %1942 = vmatprep.subr.mxu0 0.0
  %1943 = vmatpush1.msra.mxu0 0.0
  %1944 = vmatprep.subr.mxu0 0.0
  %1945 = vmatpush1.msra.mxu0 0.0
  %1946 = vmatprep.subr.mxu0 0.0
  %1947 = vmatpush1.msra.mxu0 0.0
  %v1948 = vand.u32 %v1910, 4294901760
  %1949 = vmatprep.subr.mxu0 %v1948
  %v1950 = vand.u32 %v1911, 4294901760
  %1951 = vmatpush1.msra.mxu0 %v1950
  %1952 = vmatprep.subr.mxu0 0.0
  %1953 = vmatpush2.msra.mxu0 0.0
  %1954 = vmatprep.subr.mxu0 0.0
  %1955 = vmatpush2.msra.mxu0 0.0
  %1956 = vmatprep.subr.mxu0 0.0
  %1957 = vmatpush2.msra.mxu0 0.0
  %1958 = vmatprep.subr.mxu0 0.0
  %1959 = vmatpush2.msra.mxu0 0.0
  %1960 = vmatprep.subr.mxu0 0.0
  %1961 = vmatpush2.msra.mxu0 0.0
  %1962 = vmatprep.subr.mxu0 0.0
  %1963 = vmatpush2.msra.mxu0 0.0
  %1964 = vmatprep.subr.mxu0 0.0
  %1965 = vmatpush2.msra.mxu0 0.0
  %1966 = vmatprep.subr.mxu0 0.0
  %1967 = vmatpush2.msra.mxu0 0.0
  %1968 = vmatprep.subr.mxu0 0.0
  %1969 = vmatpush2.msra.mxu0 0.0
  %1970 = vmatprep.subr.mxu0 0.0
  %1971 = vmatpush2.msra.mxu0 0.0
  %1972 = vmatprep.subr.mxu0 0.0
  %1973 = vmatpush2.msra.mxu0 0.0
  %1974 = vmatprep.subr.mxu0 0.0
  %1975 = vmatpush2.msra.mxu0 0.0
  %1976 = vmatprep.subr.mxu0 0.0
  %1977 = vmatpush2.msra.mxu0 0.0
  %1978 = vmatprep.subr.mxu0 0.0
  %1979 = vmatpush2.msra.mxu0 0.0
  %1980 = vmatprep.subr.mxu0 0.0
  %1981 = vmatpush2.msra.mxu0 0.0
  %1982 = vmatprep.subr.mxu0 0.0
  %1983 = vmatpush2.msra.mxu0 0.0
  %1984 = vmatprep.mubr.f32.mxu0 0.0
  %v1985 = vand.u32 %v1916, 4294901760
  %v1986 = vsub.f32 %v1916, %v1985
  %v1987 = vand.u32 %v1986, 4294901760
  %v1988 = vsub.f32 %v1986, %v1987
  %v1989 = vand.u32 %v1988, 4294901760
  %1990 = vmatmul.mubr.f32.gmra.mxu0 %v1989
  %v1991 = vpop.f32.mrf.mxu0
  %v1992 = vadd.f32 0.0, %v1991
  %v1993 = vpop.f32.mrf.mxu0
  %v1994 = vadd.f32 0.0, %v1993
  %1995 = vdwg.mxu0
  %1996 = vmatprep.subr.mxu0 0.0
  %1997 = vmatpush1.msra.mxu0 0.0
  %1998 = vmatprep.subr.mxu0 0.0
  %1999 = vmatpush1.msra.mxu0 0.0
  %2000 = vmatprep.subr.mxu0 0.0
  %2001 = vmatpush1.msra.mxu0 0.0
  %2002 = vmatprep.subr.mxu0 0.0
  %2003 = vmatpush1.msra.mxu0 0.0
  %2004 = vmatprep.subr.mxu0 0.0
  %2005 = vmatpush1.msra.mxu0 0.0
  %2006 = vmatprep.subr.mxu0 0.0
  %2007 = vmatpush1.msra.mxu0 0.0
  %2008 = vmatprep.subr.mxu0 0.0
  %2009 = vmatpush1.msra.mxu0 0.0
  %2010 = vmatprep.subr.mxu0 0.0
  %2011 = vmatpush1.msra.mxu0 0.0
  %2012 = vmatprep.subr.mxu0 0.0
  %2013 = vmatpush1.msra.mxu0 0.0
  %2014 = vmatprep.subr.mxu0 0.0
  %2015 = vmatpush1.msra.mxu0 0.0
  %2016 = vmatprep.subr.mxu0 0.0
  %2017 = vmatpush1.msra.mxu0 0.0
  %2018 = vmatprep.subr.mxu0 0.0
  %2019 = vmatpush1.msra.mxu0 0.0
  %2020 = vmatprep.subr.mxu0 0.0
  %2021 = vmatpush1.msra.mxu0 0.0
  %2022 = vmatprep.subr.mxu0 0.0
  %2023 = vmatpush1.msra.mxu0 0.0
  %2024 = vmatprep.subr.mxu0 0.0
  %2025 = vmatpush1.msra.mxu0 0.0
  %v2026 = vand.u32 %v1910, 4294901760
  %v2027 = vsub.f32 %v1910, %v2026
  %v2028 = vand.u32 %v2027, 4294901760
  %v2029 = vsub.f32 %v2027, %v2028
  %v2030 = vand.u32 %v2029, 4294901760
  %2031 = vmatprep.subr.mxu0 %v2030
  %v2032 = vand.u32 %v1911, 4294901760
  %v2033 = vsub.f32 %v1911, %v2032
  %v2034 = vand.u32 %v2033, 4294901760
  %v2035 = vsub.f32 %v2033, %v2034
  %v2036 = vand.u32 %v2035, 4294901760
  %2037 = vmatpush1.msra.mxu0 %v2036
  %2038 = vmatprep.subr.mxu0 0.0
  %2039 = vmatpush2.msra.mxu0 0.0
  %2040 = vmatprep.subr.mxu0 0.0
  %2041 = vmatpush2.msra.mxu0 0.0
  %2042 = vmatprep.subr.mxu0 0.0
  %2043 = vmatpush2.msra.mxu0 0.0
  %2044 = vmatprep.subr.mxu0 0.0
  %2045 = vmatpush2.msra.mxu0 0.0
  %2046 = vmatprep.subr.mxu0 0.0
  %2047 = vmatpush2.msra.mxu0 0.0
  %2048 = vmatprep.subr.mxu0 0.0
  %2049 = vmatpush2.msra.mxu0 0.0
  %2050 = vmatprep.subr.mxu0 0.0
  %2051 = vmatpush2.msra.mxu0 0.0
  %2052 = vmatprep.subr.mxu0 0.0
  %2053 = vmatpush2.msra.mxu0 0.0
  %2054 = vmatprep.subr.mxu0 0.0
  %2055 = vmatpush2.msra.mxu0 0.0
  %2056 = vmatprep.subr.mxu0 0.0
  %2057 = vmatpush2.msra.mxu0 0.0
  %2058 = vmatprep.subr.mxu0 0.0
  %2059 = vmatpush2.msra.mxu0 0.0
  %2060 = vmatprep.subr.mxu0 0.0
  %2061 = vmatpush2.msra.mxu0 0.0
  %2062 = vmatprep.subr.mxu0 0.0
  %2063 = vmatpush2.msra.mxu0 0.0
  %2064 = vmatprep.subr.mxu0 0.0
  %2065 = vmatpush2.msra.mxu0 0.0
  %2066 = vmatprep.subr.mxu0 0.0
  %2067 = vmatpush2.msra.mxu0 0.0
  %2068 = vmatprep.subr.mxu0 0.0
  %2069 = vmatpush2.msra.mxu0 0.0
  %2070 = vmatprep.mubr.f32.mxu0 0.0
  %v2071 = vand.u32 %v1916, 4294901760
  %2072 = vmatmul.mubr.f32.gmra.mxu0 %v2071
  %v2073 = vpop.f32.mrf.mxu0
  %v2074 = vadd.f32 %v1992, %v2073
  %v2075 = vpop.f32.mrf.mxu0
  %v2076 = vadd.f32 %v1994, %v2075
  %2077 = vdwg.mxu0
  %2078 = vmatprep.subr.mxu0 0.0
  %2079 = vmatpush1.msra.mxu0 0.0
  %2080 = vmatprep.subr.mxu0 0.0
  %2081 = vmatpush1.msra.mxu0 0.0
  %2082 = vmatprep.subr.mxu0 0.0
  %2083 = vmatpush1.msra.mxu0 0.0
  %2084 = vmatprep.subr.mxu0 0.0
  %2085 = vmatpush1.msra.mxu0 0.0
  %2086 = vmatprep.subr.mxu0 0.0
  %2087 = vmatpush1.msra.mxu0 0.0
  %2088 = vmatprep.subr.mxu0 0.0
  %2089 = vmatpush1.msra.mxu0 0.0
  %2090 = vmatprep.subr.mxu0 0.0
  %2091 = vmatpush1.msra.mxu0 0.0
  %2092 = vmatprep.subr.mxu0 0.0
  %2093 = vmatpush1.msra.mxu0 0.0
  %2094 = vmatprep.subr.mxu0 0.0
  %2095 = vmatpush1.msra.mxu0 0.0
  %2096 = vmatprep.subr.mxu0 0.0
  %2097 = vmatpush1.msra.mxu0 0.0
  %2098 = vmatprep.subr.mxu0 0.0
  %2099 = vmatpush1.msra.mxu0 0.0
  %2100 = vmatprep.subr.mxu0 0.0
  %2101 = vmatpush1.msra.mxu0 0.0
  %2102 = vmatprep.subr.mxu0 0.0
  %2103 = vmatpush1.msra.mxu0 0.0
  %2104 = vmatprep.subr.mxu0 0.0
  %2105 = vmatpush1.msra.mxu0 0.0
  %2106 = vmatprep.subr.mxu0 0.0
  %2107 = vmatpush1.msra.mxu0 0.0
  %v2108 = vand.u32 %v1910, 4294901760
  %v2109 = vsub.f32 %v1910, %v2108
  %2110 = vmatprep.subr.mxu0 %v2109
  %v2111 = vand.u32 %v1911, 4294901760
  %v2112 = vsub.f32 %v1911, %v2111
  %2113 = vmatpush1.msra.mxu0 %v2112
  %2114 = vmatprep.subr.mxu0 0.0
  %2115 = vmatpush2.msra.mxu0 0.0
  %2116 = vmatprep.subr.mxu0 0.0
  %2117 = vmatpush2.msra.mxu0 0.0
  %2118 = vmatprep.subr.mxu0 0.0
  %2119 = vmatpush2.msra.mxu0 0.0
  %2120 = vmatprep.subr.mxu0 0.0
  %2121 = vmatpush2.msra.mxu0 0.0
  %2122 = vmatprep.subr.mxu0 0.0
  %2123 = vmatpush2.msra.mxu0 0.0
  %2124 = vmatprep.subr.mxu0 0.0
  %2125 = vmatpush2.msra.mxu0 0.0
  %2126 = vmatprep.subr.mxu0 0.0
  %2127 = vmatpush2.msra.mxu0 0.0
  %2128 = vmatprep.subr.mxu0 0.0
  %2129 = vmatpush2.msra.mxu0 0.0
  %2130 = vmatprep.subr.mxu0 0.0
  %2131 = vmatpush2.msra.mxu0 0.0
  %2132 = vmatprep.subr.mxu0 0.0
  %2133 = vmatpush2.msra.mxu0 0.0
  %2134 = vmatprep.subr.mxu0 0.0
  %2135 = vmatpush2.msra.mxu0 0.0
  %2136 = vmatprep.subr.mxu0 0.0
  %2137 = vmatpush2.msra.mxu0 0.0
  %2138 = vmatprep.subr.mxu0 0.0
  %2139 = vmatpush2.msra.mxu0 0.0
  %2140 = vmatprep.subr.mxu0 0.0
  %2141 = vmatpush2.msra.mxu0 0.0
  %2142 = vmatprep.subr.mxu0 0.0
  %2143 = vmatpush2.msra.mxu0 0.0
  %2144 = vmatprep.subr.mxu0 0.0
  %2145 = vmatpush2.msra.mxu0 0.0
  %2146 = vmatprep.mubr.f32.mxu0 0.0
  %v2147 = vand.u32 %v1916, 4294901760
  %v2148 = vsub.f32 %v1916, %v2147
  %2149 = vmatmul.mubr.f32.gmra.mxu0 %v2148
  %v2150 = vpop.f32.mrf.mxu0
  %v2151 = vadd.f32 %v2074, %v2150
  %v2152 = vpop.f32.mrf.mxu0
  %v2153 = vadd.f32 %v2076, %v2152
  %2154 = vdwg.mxu0
  %2155 = vmatprep.subr.mxu0 0.0
  %2156 = vmatpush1.msra.mxu0 0.0
  %2157 = vmatprep.subr.mxu0 0.0
  %2158 = vmatpush1.msra.mxu0 0.0
  %2159 = vmatprep.subr.mxu0 0.0
  %2160 = vmatpush1.msra.mxu0 0.0
  %2161 = vmatprep.subr.mxu0 0.0
  %2162 = vmatpush1.msra.mxu0 0.0
  %2163 = vmatprep.subr.mxu0 0.0
  %2164 = vmatpush1.msra.mxu0 0.0
  %2165 = vmatprep.subr.mxu0 0.0
  %2166 = vmatpush1.msra.mxu0 0.0
  %2167 = vmatprep.subr.mxu0 0.0
  %2168 = vmatpush1.msra.mxu0 0.0
  %2169 = vmatprep.subr.mxu0 0.0
  %2170 = vmatpush1.msra.mxu0 0.0
  %2171 = vmatprep.subr.mxu0 0.0
  %2172 = vmatpush1.msra.mxu0 0.0
  %2173 = vmatprep.subr.mxu0 0.0
  %2174 = vmatpush1.msra.mxu0 0.0
  %2175 = vmatprep.subr.mxu0 0.0
  %2176 = vmatpush1.msra.mxu0 0.0
  %2177 = vmatprep.subr.mxu0 0.0
  %2178 = vmatpush1.msra.mxu0 0.0
  %2179 = vmatprep.subr.mxu0 0.0
  %2180 = vmatpush1.msra.mxu0 0.0
  %2181 = vmatprep.subr.mxu0 0.0
  %2182 = vmatpush1.msra.mxu0 0.0
  %2183 = vmatprep.subr.mxu0 0.0
  %2184 = vmatpush1.msra.mxu0 0.0
  %v2185 = vand.u32 %v1910, 4294901760
  %2186 = vmatprep.subr.mxu0 %v2185
  %v2187 = vand.u32 %v1911, 4294901760
  %2188 = vmatpush1.msra.mxu0 %v2187
  %2189 = vmatprep.subr.mxu0 0.0
  %2190 = vmatpush2.msra.mxu0 0.0
  %2191 = vmatprep.subr.mxu0 0.0
  %2192 = vmatpush2.msra.mxu0 0.0
  %2193 = vmatprep.subr.mxu0 0.0
  %2194 = vmatpush2.msra.mxu0 0.0
  %2195 = vmatprep.subr.mxu0 0.0
  %2196 = vmatpush2.msra.mxu0 0.0
  %2197 = vmatprep.subr.mxu0 0.0
  %2198 = vmatpush2.msra.mxu0 0.0
  %2199 = vmatprep.subr.mxu0 0.0
  %2200 = vmatpush2.msra.mxu0 0.0
  %2201 = vmatprep.subr.mxu0 0.0
  %2202 = vmatpush2.msra.mxu0 0.0
  %2203 = vmatprep.subr.mxu0 0.0
  %2204 = vmatpush2.msra.mxu0 0.0
  %2205 = vmatprep.subr.mxu0 0.0
  %2206 = vmatpush2.msra.mxu0 0.0
  %2207 = vmatprep.subr.mxu0 0.0
  %2208 = vmatpush2.msra.mxu0 0.0
  %2209 = vmatprep.subr.mxu0 0.0
  %2210 = vmatpush2.msra.mxu0 0.0
  %2211 = vmatprep.subr.mxu0 0.0
  %2212 = vmatpush2.msra.mxu0 0.0
  %2213 = vmatprep.subr.mxu0 0.0
  %2214 = vmatpush2.msra.mxu0 0.0
  %2215 = vmatprep.subr.mxu0 0.0
  %2216 = vmatpush2.msra.mxu0 0.0
  %2217 = vmatprep.subr.mxu0 0.0
  %2218 = vmatpush2.msra.mxu0 0.0
  %2219 = vmatprep.subr.mxu0 0.0
  %2220 = vmatpush2.msra.mxu0 0.0
  %2221 = vmatprep.mubr.f32.mxu0 0.0
  %v2222 = vand.u32 %v1916, 4294901760
  %v2223 = vsub.f32 %v1916, %v2222
  %v2224 = vand.u32 %v2223, 4294901760
  %2225 = vmatmul.mubr.f32.gmra.mxu0 %v2224
  %v2226 = vpop.f32.mrf.mxu0
  %v2227 = vadd.f32 %v2151, %v2226
  %v2228 = vpop.f32.mrf.mxu0
  %v2229 = vadd.f32 %v2153, %v2228
  %2230 = vdwg.mxu0
  %2231 = vmatprep.subr.mxu0 0.0
  %2232 = vmatpush1.msra.mxu0 0.0
  %2233 = vmatprep.subr.mxu0 0.0
  %2234 = vmatpush1.msra.mxu0 0.0
  %2235 = vmatprep.subr.mxu0 0.0
  %2236 = vmatpush1.msra.mxu0 0.0
  %2237 = vmatprep.subr.mxu0 0.0
  %2238 = vmatpush1.msra.mxu0 0.0
  %2239 = vmatprep.subr.mxu0 0.0
  %2240 = vmatpush1.msra.mxu0 0.0
  %2241 = vmatprep.subr.mxu0 0.0
  %2242 = vmatpush1.msra.mxu0 0.0
  %2243 = vmatprep.subr.mxu0 0.0
  %2244 = vmatpush1.msra.mxu0 0.0
  %2245 = vmatprep.subr.mxu0 0.0
  %2246 = vmatpush1.msra.mxu0 0.0
  %2247 = vmatprep.subr.mxu0 0.0
  %2248 = vmatpush1.msra.mxu0 0.0
  %2249 = vmatprep.subr.mxu0 0.0
  %2250 = vmatpush1.msra.mxu0 0.0
  %2251 = vmatprep.subr.mxu0 0.0
  %2252 = vmatpush1.msra.mxu0 0.0
  %2253 = vmatprep.subr.mxu0 0.0
  %2254 = vmatpush1.msra.mxu0 0.0
  %2255 = vmatprep.subr.mxu0 0.0
  %2256 = vmatpush1.msra.mxu0 0.0
  %2257 = vmatprep.subr.mxu0 0.0
  %2258 = vmatpush1.msra.mxu0 0.0
  %2259 = vmatprep.subr.mxu0 0.0
  %2260 = vmatpush1.msra.mxu0 0.0
  %v2261 = vand.u32 %v1910, 4294901760
  %v2262 = vsub.f32 %v1910, %v2261
  %v2263 = vand.u32 %v2262, 4294901760
  %2264 = vmatprep.subr.mxu0 %v2263
  %v2265 = vand.u32 %v1911, 4294901760
  %v2266 = vsub.f32 %v1911, %v2265
  %v2267 = vand.u32 %v2266, 4294901760
  %2268 = vmatpush1.msra.mxu0 %v2267
  %2269 = vmatprep.subr.mxu0 0.0
  %2270 = vmatpush2.msra.mxu0 0.0
  %2271 = vmatprep.subr.mxu0 0.0
  %2272 = vmatpush2.msra.mxu0 0.0
  %2273 = vmatprep.subr.mxu0 0.0
  %2274 = vmatpush2.msra.mxu0 0.0
  %2275 = vmatprep.subr.mxu0 0.0
  %2276 = vmatpush2.msra.mxu0 0.0
  %2277 = vmatprep.subr.mxu0 0.0
  %2278 = vmatpush2.msra.mxu0 0.0
  %2279 = vmatprep.subr.mxu0 0.0
  %2280 = vmatpush2.msra.mxu0 0.0
  %2281 = vmatprep.subr.mxu0 0.0
  %2282 = vmatpush2.msra.mxu0 0.0
  %2283 = vmatprep.subr.mxu0 0.0
  %2284 = vmatpush2.msra.mxu0 0.0
  %2285 = vmatprep.subr.mxu0 0.0
  %2286 = vmatpush2.msra.mxu0 0.0
  %2287 = vmatprep.subr.mxu0 0.0
  %2288 = vmatpush2.msra.mxu0 0.0
  %2289 = vmatprep.subr.mxu0 0.0
  %2290 = vmatpush2.msra.mxu0 0.0
  %2291 = vmatprep.subr.mxu0 0.0
  %2292 = vmatpush2.msra.mxu0 0.0
  %2293 = vmatprep.subr.mxu0 0.0
  %2294 = vmatpush2.msra.mxu0 0.0
  %2295 = vmatprep.subr.mxu0 0.0
  %2296 = vmatpush2.msra.mxu0 0.0
  %2297 = vmatprep.subr.mxu0 0.0
  %2298 = vmatpush2.msra.mxu0 0.0
  %2299 = vmatprep.subr.mxu0 0.0
  %2300 = vmatpush2.msra.mxu0 0.0
  %2301 = vmatprep.mubr.f32.mxu0 0.0
  %v2302 = vand.u32 %v1916, 4294901760
  %2303 = vmatmul.mubr.f32.gmra.mxu0 %v2302
  %v2304 = vpop.f32.mrf.mxu0
  %v2305 = vadd.f32 %v2227, %v2304
  %v2306 = vpop.f32.mrf.mxu0
  %v2307 = vadd.f32 %v2229, %v2306
  %2308 = vdwg.mxu0
  %2309 = vmatprep.subr.mxu0 0.0
  %2310 = vmatpush1.msra.mxu0 0.0
  %2311 = vmatprep.subr.mxu0 0.0
  %2312 = vmatpush1.msra.mxu0 0.0
  %2313 = vmatprep.subr.mxu0 0.0
  %2314 = vmatpush1.msra.mxu0 0.0
  %2315 = vmatprep.subr.mxu0 0.0
  %2316 = vmatpush1.msra.mxu0 0.0
  %2317 = vmatprep.subr.mxu0 0.0
  %2318 = vmatpush1.msra.mxu0 0.0
  %2319 = vmatprep.subr.mxu0 0.0
  %2320 = vmatpush1.msra.mxu0 0.0
  %2321 = vmatprep.subr.mxu0 0.0
  %2322 = vmatpush1.msra.mxu0 0.0
  %2323 = vmatprep.subr.mxu0 0.0
  %2324 = vmatpush1.msra.mxu0 0.0
  %2325 = vmatprep.subr.mxu0 0.0
  %2326 = vmatpush1.msra.mxu0 0.0
  %2327 = vmatprep.subr.mxu0 0.0
  %2328 = vmatpush1.msra.mxu0 0.0
  %2329 = vmatprep.subr.mxu0 0.0
  %2330 = vmatpush1.msra.mxu0 0.0
  %2331 = vmatprep.subr.mxu0 0.0
  %2332 = vmatpush1.msra.mxu0 0.0
  %2333 = vmatprep.subr.mxu0 0.0
  %2334 = vmatpush1.msra.mxu0 0.0
  %2335 = vmatprep.subr.mxu0 0.0
  %2336 = vmatpush1.msra.mxu0 0.0
  %2337 = vmatprep.subr.mxu0 0.0
  %2338 = vmatpush1.msra.mxu0 0.0
  %v2339 = vand.u32 %v1910, 4294901760
  %2340 = vmatprep.subr.mxu0 %v2339
  %v2341 = vand.u32 %v1911, 4294901760
  %2342 = vmatpush1.msra.mxu0 %v2341
  %2343 = vmatprep.subr.mxu0 0.0
  %2344 = vmatpush2.msra.mxu0 0.0
  %2345 = vmatprep.subr.mxu0 0.0
  %2346 = vmatpush2.msra.mxu0 0.0
  %2347 = vmatprep.subr.mxu0 0.0
  %2348 = vmatpush2.msra.mxu0 0.0
  %2349 = vmatprep.subr.mxu0 0.0
  %2350 = vmatpush2.msra.mxu0 0.0
  %2351 = vmatprep.subr.mxu0 0.0
  %2352 = vmatpush2.msra.mxu0 0.0
  %2353 = vmatprep.subr.mxu0 0.0
  %2354 = vmatpush2.msra.mxu0 0.0
  %2355 = vmatprep.subr.mxu0 0.0
  %2356 = vmatpush2.msra.mxu0 0.0
  %2357 = vmatprep.subr.mxu0 0.0
  %2358 = vmatpush2.msra.mxu0 0.0
  %2359 = vmatprep.subr.mxu0 0.0
  %2360 = vmatpush2.msra.mxu0 0.0
  %2361 = vmatprep.subr.mxu0 0.0
  %2362 = vmatpush2.msra.mxu0 0.0
  %2363 = vmatprep.subr.mxu0 0.0
  %2364 = vmatpush2.msra.mxu0 0.0
  %2365 = vmatprep.subr.mxu0 0.0
  %2366 = vmatpush2.msra.mxu0 0.0
  %2367 = vmatprep.subr.mxu0 0.0
  %2368 = vmatpush2.msra.mxu0 0.0
  %2369 = vmatprep.subr.mxu0 0.0
  %2370 = vmatpush2.msra.mxu0 0.0
  %2371 = vmatprep.subr.mxu0 0.0
  %2372 = vmatpush2.msra.mxu0 0.0
  %2373 = vmatprep.subr.mxu0 0.0
  %2374 = vmatpush2.msra.mxu0 0.0
  %2375 = vmatprep.mubr.f32.mxu0 0.0
  %v2376 = vand.u32 %v1916, 4294901760
  %2377 = vmatmul.mubr.f32.gmra.mxu0 %v2376
  %v2378 = vpop.f32.mrf.mxu0
  %v2379 = vadd.f32 %v2305, %v2378
  %v2380 = vpop.f32.mrf.mxu0
  %v2381 = vadd.f32 %v2307, %v2380
  %2382 = vdwg.mxu0
  %2383 = vmatprep.subr.mxu0 0.0
  %2384 = vmatpush1.msra.mxu0 0.0
  %2385 = vmatprep.subr.mxu0 0.0
  %2386 = vmatpush1.msra.mxu0 0.0
  %2387 = vmatprep.subr.mxu0 0.0
  %2388 = vmatpush1.msra.mxu0 0.0
  %2389 = vmatprep.subr.mxu0 0.0
  %2390 = vmatpush1.msra.mxu0 0.0
  %2391 = vmatprep.subr.mxu0 0.0
  %2392 = vmatpush1.msra.mxu0 0.0
  %2393 = vmatprep.subr.mxu0 0.0
  %2394 = vmatpush1.msra.mxu0 0.0
  %2395 = vmatprep.subr.mxu0 0.0
  %2396 = vmatpush1.msra.mxu0 0.0
  %2397 = vmatprep.subr.mxu0 0.0
  %2398 = vmatpush1.msra.mxu0 0.0
  %2399 = vmatprep.subr.mxu0 0.0
  %2400 = vmatpush1.msra.mxu0 0.0
  %2401 = vmatprep.subr.mxu0 0.0
  %2402 = vmatpush1.msra.mxu0 0.0
  %2403 = vmatprep.subr.mxu0 0.0
  %2404 = vmatpush1.msra.mxu0 0.0
  %2405 = vmatprep.subr.mxu0 0.0
  %2406 = vmatpush1.msra.mxu0 0.0
  %2407 = vmatprep.subr.mxu0 0.0
  %2408 = vmatpush1.msra.mxu0 0.0
  %2409 = vmatprep.subr.mxu0 0.0
  %2410 = vmatpush1.msra.mxu0 0.0
  %2411 = vmatprep.subr.mxu0 0.0
  %2412 = vmatpush1.msra.mxu0 0.0
  %v2413 = vand.u32 %v1912, 4294901760
  %2414 = vmatprep.subr.mxu0 %v2413
  %v2415 = vand.u32 %v1909, 4294901760
  %2416 = vmatpush1.msra.mxu0 %v2415
  %2417 = vmatprep.subr.mxu0 0.0
  %2418 = vmatpush2.msra.mxu0 0.0
  %2419 = vmatprep.subr.mxu0 0.0
  %2420 = vmatpush2.msra.mxu0 0.0
  %2421 = vmatprep.subr.mxu0 0.0
  %2422 = vmatpush2.msra.mxu0 0.0
  %2423 = vmatprep.subr.mxu0 0.0
  %2424 = vmatpush2.msra.mxu0 0.0
  %2425 = vmatprep.subr.mxu0 0.0
  %2426 = vmatpush2.msra.mxu0 0.0
  %2427 = vmatprep.subr.mxu0 0.0
  %2428 = vmatpush2.msra.mxu0 0.0
  %2429 = vmatprep.subr.mxu0 0.0
  %2430 = vmatpush2.msra.mxu0 0.0
  %2431 = vmatprep.subr.mxu0 0.0
  %2432 = vmatpush2.msra.mxu0 0.0
  %2433 = vmatprep.subr.mxu0 0.0
  %2434 = vmatpush2.msra.mxu0 0.0
  %2435 = vmatprep.subr.mxu0 0.0
  %2436 = vmatpush2.msra.mxu0 0.0
  %2437 = vmatprep.subr.mxu0 0.0
  %2438 = vmatpush2.msra.mxu0 0.0
  %2439 = vmatprep.subr.mxu0 0.0
  %2440 = vmatpush2.msra.mxu0 0.0
  %2441 = vmatprep.subr.mxu0 0.0
  %2442 = vmatpush2.msra.mxu0 0.0
  %2443 = vmatprep.subr.mxu0 0.0
  %2444 = vmatpush2.msra.mxu0 0.0
  %2445 = vmatprep.subr.mxu0 0.0
  %2446 = vmatpush2.msra.mxu0 0.0
  %2447 = vmatprep.subr.mxu0 0.0
  %2448 = vmatpush2.msra.mxu0 0.0
  %2449 = vmatprep.mubr.f32.mxu0 0.0
  %v2450 = vand.u32 %v1916, 4294901760
  %v2451 = vsub.f32 %v1916, %v2450
  %v2452 = vand.u32 %v2451, 4294901760
  %v2453 = vsub.f32 %v2451, %v2452
  %v2454 = vand.u32 %v2453, 4294901760
  %2455 = vmatmul.mubr.f32.gmra.mxu0 %v2454
  %v2456 = vpop.f32.mrf.mxu0
  %v2457 = vadd.f32 0.0, %v2456
  %v2458 = vpop.f32.mrf.mxu0
  %v2459 = vadd.f32 0.0, %v2458
  %2460 = vdwg.mxu0
  %2461 = vmatprep.subr.mxu0 0.0
  %2462 = vmatpush1.msra.mxu0 0.0
  %2463 = vmatprep.subr.mxu0 0.0
  %2464 = vmatpush1.msra.mxu0 0.0
  %2465 = vmatprep.subr.mxu0 0.0
  %2466 = vmatpush1.msra.mxu0 0.0
  %2467 = vmatprep.subr.mxu0 0.0
  %2468 = vmatpush1.msra.mxu0 0.0
  %2469 = vmatprep.subr.mxu0 0.0
  %2470 = vmatpush1.msra.mxu0 0.0
  %2471 = vmatprep.subr.mxu0 0.0
  %2472 = vmatpush1.msra.mxu0 0.0
  %2473 = vmatprep.subr.mxu0 0.0
  %2474 = vmatpush1.msra.mxu0 0.0
  %2475 = vmatprep.subr.mxu0 0.0
  %2476 = vmatpush1.msra.mxu0 0.0
  %2477 = vmatprep.subr.mxu0 0.0
  %2478 = vmatpush1.msra.mxu0 0.0
  %2479 = vmatprep.subr.mxu0 0.0
  %2480 = vmatpush1.msra.mxu0 0.0
  %2481 = vmatprep.subr.mxu0 0.0
  %2482 = vmatpush1.msra.mxu0 0.0
  %2483 = vmatprep.subr.mxu0 0.0
  %2484 = vmatpush1.msra.mxu0 0.0
  %2485 = vmatprep.subr.mxu0 0.0
  %2486 = vmatpush1.msra.mxu0 0.0
  %2487 = vmatprep.subr.mxu0 0.0
  %2488 = vmatpush1.msra.mxu0 0.0
  %2489 = vmatprep.subr.mxu0 0.0
  %2490 = vmatpush1.msra.mxu0 0.0
  %v2491 = vand.u32 %v1912, 4294901760
  %v2492 = vsub.f32 %v1912, %v2491
  %v2493 = vand.u32 %v2492, 4294901760
  %v2494 = vsub.f32 %v2492, %v2493
  %v2495 = vand.u32 %v2494, 4294901760
  %2496 = vmatprep.subr.mxu0 %v2495
  %v2497 = vand.u32 %v1909, 4294901760
  %v2498 = vsub.f32 %v1909, %v2497
  %v2499 = vand.u32 %v2498, 4294901760
  %v2500 = vsub.f32 %v2498, %v2499
  %v2501 = vand.u32 %v2500, 4294901760
  %2502 = vmatpush1.msra.mxu0 %v2501
  %2503 = vmatprep.subr.mxu0 0.0
  %2504 = vmatpush2.msra.mxu0 0.0
  %2505 = vmatprep.subr.mxu0 0.0
  %2506 = vmatpush2.msra.mxu0 0.0
  %2507 = vmatprep.subr.mxu0 0.0
  %2508 = vmatpush2.msra.mxu0 0.0
  %2509 = vmatprep.subr.mxu0 0.0
  %2510 = vmatpush2.msra.mxu0 0.0
  %2511 = vmatprep.subr.mxu0 0.0
  %2512 = vmatpush2.msra.mxu0 0.0
  %2513 = vmatprep.subr.mxu0 0.0
  %2514 = vmatpush2.msra.mxu0 0.0
  %2515 = vmatprep.subr.mxu0 0.0
  %2516 = vmatpush2.msra.mxu0 0.0
  %2517 = vmatprep.subr.mxu0 0.0
  %2518 = vmatpush2.msra.mxu0 0.0
  %2519 = vmatprep.subr.mxu0 0.0
  %2520 = vmatpush2.msra.mxu0 0.0
  %2521 = vmatprep.subr.mxu0 0.0
  %2522 = vmatpush2.msra.mxu0 0.0
  %2523 = vmatprep.subr.mxu0 0.0
  %2524 = vmatpush2.msra.mxu0 0.0
  %2525 = vmatprep.subr.mxu0 0.0
  %2526 = vmatpush2.msra.mxu0 0.0
  %2527 = vmatprep.subr.mxu0 0.0
  %2528 = vmatpush2.msra.mxu0 0.0
  %2529 = vmatprep.subr.mxu0 0.0
  %2530 = vmatpush2.msra.mxu0 0.0
  %2531 = vmatprep.subr.mxu0 0.0
  %2532 = vmatpush2.msra.mxu0 0.0
  %2533 = vmatprep.subr.mxu0 0.0
  %2534 = vmatpush2.msra.mxu0 0.0
  %2535 = vmatprep.mubr.f32.mxu0 0.0
  %v2536 = vand.u32 %v1916, 4294901760
  %2537 = vmatmul.mubr.f32.gmra.mxu0 %v2536
  %v2538 = vpop.f32.mrf.mxu0
  %v2539 = vadd.f32 %v2457, %v2538
  %v2540 = vpop.f32.mrf.mxu0
  %v2541 = vadd.f32 %v2459, %v2540
  %2542 = vdwg.mxu0
  %2543 = vmatprep.subr.mxu0 0.0
  %2544 = vmatpush1.msra.mxu0 0.0
  %2545 = vmatprep.subr.mxu0 0.0
  %2546 = vmatpush1.msra.mxu0 0.0
  %2547 = vmatprep.subr.mxu0 0.0
  %2548 = vmatpush1.msra.mxu0 0.0
  %2549 = vmatprep.subr.mxu0 0.0
  %2550 = vmatpush1.msra.mxu0 0.0
  %2551 = vmatprep.subr.mxu0 0.0
  %2552 = vmatpush1.msra.mxu0 0.0
  %2553 = vmatprep.subr.mxu0 0.0
  %2554 = vmatpush1.msra.mxu0 0.0
  %2555 = vmatprep.subr.mxu0 0.0
  %2556 = vmatpush1.msra.mxu0 0.0
  %2557 = vmatprep.subr.mxu0 0.0
  %2558 = vmatpush1.msra.mxu0 0.0
  %2559 = vmatprep.subr.mxu0 0.0
  %2560 = vmatpush1.msra.mxu0 0.0
  %2561 = vmatprep.subr.mxu0 0.0
  %2562 = vmatpush1.msra.mxu0 0.0
  %2563 = vmatprep.subr.mxu0 0.0
  %2564 = vmatpush1.msra.mxu0 0.0
  %2565 = vmatprep.subr.mxu0 0.0
  %2566 = vmatpush1.msra.mxu0 0.0
  %2567 = vmatprep.subr.mxu0 0.0
  %2568 = vmatpush1.msra.mxu0 0.0
  %2569 = vmatprep.subr.mxu0 0.0
  %2570 = vmatpush1.msra.mxu0 0.0
  %2571 = vmatprep.subr.mxu0 0.0
  %2572 = vmatpush1.msra.mxu0 0.0
  %v2573 = vand.u32 %v1912, 4294901760
  %v2574 = vsub.f32 %v1912, %v2573
  %2575 = vmatprep.subr.mxu0 %v2574
  %v2576 = vand.u32 %v1909, 4294901760
  %v2577 = vsub.f32 %v1909, %v2576
  %2578 = vmatpush1.msra.mxu0 %v2577
  %2579 = vmatprep.subr.mxu0 0.0
  %2580 = vmatpush2.msra.mxu0 0.0
  %2581 = vmatprep.subr.mxu0 0.0
  %2582 = vmatpush2.msra.mxu0 0.0
  %2583 = vmatprep.subr.mxu0 0.0
  %2584 = vmatpush2.msra.mxu0 0.0
  %2585 = vmatprep.subr.mxu0 0.0
  %2586 = vmatpush2.msra.mxu0 0.0
  %2587 = vmatprep.subr.mxu0 0.0
  %2588 = vmatpush2.msra.mxu0 0.0
  %2589 = vmatprep.subr.mxu0 0.0
  %2590 = vmatpush2.msra.mxu0 0.0
  %2591 = vmatprep.subr.mxu0 0.0
  %2592 = vmatpush2.msra.mxu0 0.0
  %2593 = vmatprep.subr.mxu0 0.0
  %2594 = vmatpush2.msra.mxu0 0.0
  %2595 = vmatprep.subr.mxu0 0.0
  %2596 = vmatpush2.msra.mxu0 0.0
  %2597 = vmatprep.subr.mxu0 0.0
  %2598 = vmatpush2.msra.mxu0 0.0
  %2599 = vmatprep.subr.mxu0 0.0
  %2600 = vmatpush2.msra.mxu0 0.0
  %2601 = vmatprep.subr.mxu0 0.0
  %2602 = vmatpush2.msra.mxu0 0.0
  %2603 = vmatprep.subr.mxu0 0.0
  %2604 = vmatpush2.msra.mxu0 0.0
  %2605 = vmatprep.subr.mxu0 0.0
  %2606 = vmatpush2.msra.mxu0 0.0
  %2607 = vmatprep.subr.mxu0 0.0
  %2608 = vmatpush2.msra.mxu0 0.0
  %2609 = vmatprep.subr.mxu0 0.0
  %2610 = vmatpush2.msra.mxu0 0.0
  %2611 = vmatprep.mubr.f32.mxu0 0.0
  %v2612 = vand.u32 %v1916, 4294901760
  %v2613 = vsub.f32 %v1916, %v2612
  %2614 = vmatmul.mubr.f32.gmra.mxu0 %v2613
  %v2615 = vpop.f32.mrf.mxu0
  %v2616 = vadd.f32 %v2539, %v2615
  %v2617 = vpop.f32.mrf.mxu0
  %v2618 = vadd.f32 %v2541, %v2617
  %2619 = vdwg.mxu0
  %2620 = vmatprep.subr.mxu0 0.0
  %2621 = vmatpush1.msra.mxu0 0.0
  %2622 = vmatprep.subr.mxu0 0.0
  %2623 = vmatpush1.msra.mxu0 0.0
  %2624 = vmatprep.subr.mxu0 0.0
  %2625 = vmatpush1.msra.mxu0 0.0
  %2626 = vmatprep.subr.mxu0 0.0
  %2627 = vmatpush1.msra.mxu0 0.0
  %2628 = vmatprep.subr.mxu0 0.0
  %2629 = vmatpush1.msra.mxu0 0.0
  %2630 = vmatprep.subr.mxu0 0.0
  %2631 = vmatpush1.msra.mxu0 0.0
  %2632 = vmatprep.subr.mxu0 0.0
  %2633 = vmatpush1.msra.mxu0 0.0
  %2634 = vmatprep.subr.mxu0 0.0
  %2635 = vmatpush1.msra.mxu0 0.0
  %2636 = vmatprep.subr.mxu0 0.0
  %2637 = vmatpush1.msra.mxu0 0.0
  %2638 = vmatprep.subr.mxu0 0.0
  %2639 = vmatpush1.msra.mxu0 0.0
  %2640 = vmatprep.subr.mxu0 0.0
  %2641 = vmatpush1.msra.mxu0 0.0
  %2642 = vmatprep.subr.mxu0 0.0
  %2643 = vmatpush1.msra.mxu0 0.0
  %2644 = vmatprep.subr.mxu0 0.0
  %2645 = vmatpush1.msra.mxu0 0.0
  %2646 = vmatprep.subr.mxu0 0.0
  %2647 = vmatpush1.msra.mxu0 0.0
  %2648 = vmatprep.subr.mxu0 0.0
  %2649 = vmatpush1.msra.mxu0 0.0
  %v2650 = vand.u32 %v1912, 4294901760
  %2651 = vmatprep.subr.mxu0 %v2650
  %v2652 = vand.u32 %v1909, 4294901760
  %2653 = vmatpush1.msra.mxu0 %v2652
  %2654 = vmatprep.subr.mxu0 0.0
  %2655 = vmatpush2.msra.mxu0 0.0
  %2656 = vmatprep.subr.mxu0 0.0
  %2657 = vmatpush2.msra.mxu0 0.0
  %2658 = vmatprep.subr.mxu0 0.0
  %2659 = vmatpush2.msra.mxu0 0.0
  %2660 = vmatprep.subr.mxu0 0.0
  %2661 = vmatpush2.msra.mxu0 0.0
  %2662 = vmatprep.subr.mxu0 0.0
  %2663 = vmatpush2.msra.mxu0 0.0
  %2664 = vmatprep.subr.mxu0 0.0
  %2665 = vmatpush2.msra.mxu0 0.0
  %2666 = vmatprep.subr.mxu0 0.0
  %2667 = vmatpush2.msra.mxu0 0.0
  %2668 = vmatprep.subr.mxu0 0.0
  %2669 = vmatpush2.msra.mxu0 0.0
  %2670 = vmatprep.subr.mxu0 0.0
  %2671 = vmatpush2.msra.mxu0 0.0
  %2672 = vmatprep.subr.mxu0 0.0
  %2673 = vmatpush2.msra.mxu0 0.0
  %2674 = vmatprep.subr.mxu0 0.0
  %2675 = vmatpush2.msra.mxu0 0.0
  %2676 = vmatprep.subr.mxu0 0.0
  %2677 = vmatpush2.msra.mxu0 0.0
  %2678 = vmatprep.subr.mxu0 0.0
  %2679 = vmatpush2.msra.mxu0 0.0
  %2680 = vmatprep.subr.mxu0 0.0
  %2681 = vmatpush2.msra.mxu0 0.0
  %2682 = vmatprep.subr.mxu0 0.0
  %2683 = vmatpush2.msra.mxu0 0.0
  %2684 = vmatprep.subr.mxu0 0.0
  %2685 = vmatpush2.msra.mxu0 0.0
  %2686 = vmatprep.mubr.f32.mxu0 0.0
  %v2687 = vand.u32 %v1916, 4294901760
  %v2688 = vsub.f32 %v1916, %v2687
  %v2689 = vand.u32 %v2688, 4294901760
  %2690 = vmatmul.mubr.f32.gmra.mxu0 %v2689
  %v2691 = vpop.f32.mrf.mxu0
  %v2692 = vadd.f32 %v2616, %v2691
  %v2693 = vpop.f32.mrf.mxu0
  %v2694 = vadd.f32 %v2618, %v2693
  %2695 = vdwg.mxu0
  %2696 = vmatprep.subr.mxu0 0.0
  %2697 = vmatpush1.msra.mxu0 0.0
  %2698 = vmatprep.subr.mxu0 0.0
  %2699 = vmatpush1.msra.mxu0 0.0
  %2700 = vmatprep.subr.mxu0 0.0
  %2701 = vmatpush1.msra.mxu0 0.0
  %2702 = vmatprep.subr.mxu0 0.0
  %2703 = vmatpush1.msra.mxu0 0.0
  %2704 = vmatprep.subr.mxu0 0.0
  %2705 = vmatpush1.msra.mxu0 0.0
  %2706 = vmatprep.subr.mxu0 0.0
  %2707 = vmatpush1.msra.mxu0 0.0
  %2708 = vmatprep.subr.mxu0 0.0
  %2709 = vmatpush1.msra.mxu0 0.0
  %2710 = vmatprep.subr.mxu0 0.0
  %2711 = vmatpush1.msra.mxu0 0.0
  %2712 = vmatprep.subr.mxu0 0.0
  %2713 = vmatpush1.msra.mxu0 0.0
  %2714 = vmatprep.subr.mxu0 0.0
  %2715 = vmatpush1.msra.mxu0 0.0
  %2716 = vmatprep.subr.mxu0 0.0
  %2717 = vmatpush1.msra.mxu0 0.0
  %2718 = vmatprep.subr.mxu0 0.0
  %2719 = vmatpush1.msra.mxu0 0.0
  %2720 = vmatprep.subr.mxu0 0.0
  %2721 = vmatpush1.msra.mxu0 0.0
  %2722 = vmatprep.subr.mxu0 0.0
  %2723 = vmatpush1.msra.mxu0 0.0
  %2724 = vmatprep.subr.mxu0 0.0
  %2725 = vmatpush1.msra.mxu0 0.0
  %v2726 = vand.u32 %v1912, 4294901760
  %v2727 = vsub.f32 %v1912, %v2726
  %v2728 = vand.u32 %v2727, 4294901760
  %2729 = vmatprep.subr.mxu0 %v2728
  %v2730 = vand.u32 %v1909, 4294901760
  %v2731 = vsub.f32 %v1909, %v2730
  %v2732 = vand.u32 %v2731, 4294901760
  %2733 = vmatpush1.msra.mxu0 %v2732
  %2734 = vmatprep.subr.mxu0 0.0
  %2735 = vmatpush2.msra.mxu0 0.0
  %2736 = vmatprep.subr.mxu0 0.0
  %2737 = vmatpush2.msra.mxu0 0.0
  %2738 = vmatprep.subr.mxu0 0.0
  %2739 = vmatpush2.msra.mxu0 0.0
  %2740 = vmatprep.subr.mxu0 0.0
  %2741 = vmatpush2.msra.mxu0 0.0
  %2742 = vmatprep.subr.mxu0 0.0
  %2743 = vmatpush2.msra.mxu0 0.0
  %2744 = vmatprep.subr.mxu0 0.0
  %2745 = vmatpush2.msra.mxu0 0.0
  %2746 = vmatprep.subr.mxu0 0.0
  %2747 = vmatpush2.msra.mxu0 0.0
  %2748 = vmatprep.subr.mxu0 0.0
  %2749 = vmatpush2.msra.mxu0 0.0
  %2750 = vmatprep.subr.mxu0 0.0
  %2751 = vmatpush2.msra.mxu0 0.0
  %2752 = vmatprep.subr.mxu0 0.0
  %2753 = vmatpush2.msra.mxu0 0.0
  %2754 = vmatprep.subr.mxu0 0.0
  %2755 = vmatpush2.msra.mxu0 0.0
  %2756 = vmatprep.subr.mxu0 0.0
  %2757 = vmatpush2.msra.mxu0 0.0
  %2758 = vmatprep.subr.mxu0 0.0
  %2759 = vmatpush2.msra.mxu0 0.0
  %2760 = vmatprep.subr.mxu0 0.0
  %2761 = vmatpush2.msra.mxu0 0.0
  %2762 = vmatprep.subr.mxu0 0.0
  %2763 = vmatpush2.msra.mxu0 0.0
  %2764 = vmatprep.subr.mxu0 0.0
  %2765 = vmatpush2.msra.mxu0 0.0
  %2766 = vmatprep.mubr.f32.mxu0 0.0
  %v2767 = vand.u32 %v1916, 4294901760
  %2768 = vmatmul.mubr.f32.gmra.mxu0 %v2767
  %v2769 = vpop.f32.mrf.mxu0
  %v2770 = vadd.f32 %v2692, %v2769
  %v2771 = vpop.f32.mrf.mxu0
  %v2772 = vadd.f32 %v2694, %v2771
  %2773 = vdwg.mxu0
  %2774 = vmatprep.subr.mxu0 0.0
  %2775 = vmatpush1.msra.mxu0 0.0
  %2776 = vmatprep.subr.mxu0 0.0
  %2777 = vmatpush1.msra.mxu0 0.0
  %2778 = vmatprep.subr.mxu0 0.0
  %2779 = vmatpush1.msra.mxu0 0.0
  %2780 = vmatprep.subr.mxu0 0.0
  %2781 = vmatpush1.msra.mxu0 0.0
  %2782 = vmatprep.subr.mxu0 0.0
  %2783 = vmatpush1.msra.mxu0 0.0
  %2784 = vmatprep.subr.mxu0 0.0
  %2785 = vmatpush1.msra.mxu0 0.0
  %2786 = vmatprep.subr.mxu0 0.0
  %2787 = vmatpush1.msra.mxu0 0.0
  %2788 = vmatprep.subr.mxu0 0.0
  %2789 = vmatpush1.msra.mxu0 0.0
  %2790 = vmatprep.subr.mxu0 0.0
  %2791 = vmatpush1.msra.mxu0 0.0
  %2792 = vmatprep.subr.mxu0 0.0
  %2793 = vmatpush1.msra.mxu0 0.0
  %2794 = vmatprep.subr.mxu0 0.0
  %2795 = vmatpush1.msra.mxu0 0.0
  %2796 = vmatprep.subr.mxu0 0.0
  %2797 = vmatpush1.msra.mxu0 0.0
  %2798 = vmatprep.subr.mxu0 0.0
  %2799 = vmatpush1.msra.mxu0 0.0
  %2800 = vmatprep.subr.mxu0 0.0
  %2801 = vmatpush1.msra.mxu0 0.0
  %2802 = vmatprep.subr.mxu0 0.0
  %2803 = vmatpush1.msra.mxu0 0.0
  %v2804 = vand.u32 %v1912, 4294901760
  %2805 = vmatprep.subr.mxu0 %v2804
  %v2806 = vand.u32 %v1909, 4294901760
  %2807 = vmatpush1.msra.mxu0 %v2806
  %2808 = vmatprep.subr.mxu0 0.0
  %2809 = vmatpush2.msra.mxu0 0.0
  %2810 = vmatprep.subr.mxu0 0.0
  %2811 = vmatpush2.msra.mxu0 0.0
  %2812 = vmatprep.subr.mxu0 0.0
  %2813 = vmatpush2.msra.mxu0 0.0
  %2814 = vmatprep.subr.mxu0 0.0
  %2815 = vmatpush2.msra.mxu0 0.0
  %2816 = vmatprep.subr.mxu0 0.0
  %2817 = vmatpush2.msra.mxu0 0.0
  %2818 = vmatprep.subr.mxu0 0.0
  %2819 = vmatpush2.msra.mxu0 0.0
  %2820 = vmatprep.subr.mxu0 0.0
  %2821 = vmatpush2.msra.mxu0 0.0
  %2822 = vmatprep.subr.mxu0 0.0
  %2823 = vmatpush2.msra.mxu0 0.0
  %2824 = vmatprep.subr.mxu0 0.0
  %2825 = vmatpush2.msra.mxu0 0.0
  %2826 = vmatprep.subr.mxu0 0.0
  %2827 = vmatpush2.msra.mxu0 0.0
  %2828 = vmatprep.subr.mxu0 0.0
  %2829 = vmatpush2.msra.mxu0 0.0
  %2830 = vmatprep.subr.mxu0 0.0
  %2831 = vmatpush2.msra.mxu0 0.0
  %2832 = vmatprep.subr.mxu0 0.0
  %2833 = vmatpush2.msra.mxu0 0.0
  %2834 = vmatprep.subr.mxu0 0.0
  %2835 = vmatpush2.msra.mxu0 0.0
  %2836 = vmatprep.subr.mxu0 0.0
  %2837 = vmatpush2.msra.mxu0 0.0
  %2838 = vmatprep.subr.mxu0 0.0
  %2839 = vmatpush2.msra.mxu0 0.0
  %2840 = vmatprep.mubr.f32.mxu0 0.0
  %v2841 = vand.u32 %v1916, 4294901760
  %2842 = vmatmul.mubr.f32.gmra.mxu0 %v2841
  %v2843 = vpop.f32.mrf.mxu0
  %v2844 = vadd.f32 %v2770, %v2843
  %v2845 = vpop.f32.mrf.mxu0
  %v2846 = vadd.f32 %v2772, %v2845
  %2847 = vdwg.mxu0
  %v2848 = vadd.f32 %v1431, %v2379
  %v2849 = vadd.f32 %v1433, %v2381
  %v2850 = vadd.f32 %v1896, %v2844
  %v2851 = vadd.f32 %v1898, %v2846
  %2852 = vrot.lane.b32.xlu0 %v11, 111
  %v2853 = vpop.permute.xlu0 %2852
  %2854 = vrot.lane.b32.xlu0 %v12, 111
  %v2855 = vpop.permute.xlu0 %2854
  %2856 = vrot.lane.b32.xlu0 %v13, 111
  %v2857 = vpop.permute.xlu0 %2856
  %2858 = vrot.lane.b32.xlu0 %v14, 111
  %v2859 = vpop.permute.xlu0 %2858
  %vm2860 = vcmp.lt.s32.totalorder %v25, 111
  %v2861 = vsel %vm2860, %v2857, %v2859
  %v2862 = vsel %vm2860, %v2855, %v2857
  %v2863 = vsel %vm2860, %v2853, %v2855
  %v2864 = vsel %vm2860, %v2859, %v2853
  %s2865 = scalar_lea.vmem %s1, 24
  %v2866 = vld [vmem:[%s2865] sm:$0xff]
  %v2868 = vsel %vm33, %v2866, 0
  %2870 = vmatprep.subr.mxu0 0.0
  %2871 = vmatpush1.msra.mxu0 0.0
  %2872 = vmatprep.subr.mxu0 0.0
  %2873 = vmatpush1.msra.mxu0 0.0
  %2874 = vmatprep.subr.mxu0 0.0
  %2875 = vmatpush1.msra.mxu0 0.0
  %2876 = vmatprep.subr.mxu0 0.0
  %2877 = vmatpush1.msra.mxu0 0.0
  %2878 = vmatprep.subr.mxu0 0.0
  %2879 = vmatpush1.msra.mxu0 0.0
  %2880 = vmatprep.subr.mxu0 0.0
  %2881 = vmatpush1.msra.mxu0 0.0
  %2882 = vmatprep.subr.mxu0 0.0
  %2883 = vmatpush1.msra.mxu0 0.0
  %2884 = vmatprep.subr.mxu0 0.0
  %2885 = vmatpush1.msra.mxu0 0.0
  %2886 = vmatprep.subr.mxu0 0.0
  %2887 = vmatpush1.msra.mxu0 0.0
  %2888 = vmatprep.subr.mxu0 0.0
  %2889 = vmatpush1.msra.mxu0 0.0
  %2890 = vmatprep.subr.mxu0 0.0
  %2891 = vmatpush1.msra.mxu0 0.0
  %2892 = vmatprep.subr.mxu0 0.0
  %2893 = vmatpush1.msra.mxu0 0.0
  %2894 = vmatprep.subr.mxu0 0.0
  %2895 = vmatpush1.msra.mxu0 0.0
  %2896 = vmatprep.subr.mxu0 0.0
  %2897 = vmatpush1.msra.mxu0 0.0
  %2898 = vmatprep.subr.mxu0 0.0
  %2899 = vmatpush1.msra.mxu0 0.0
  %v2900 = vand.u32 %v2862, 4294901760
  %2901 = vmatprep.subr.mxu0 %v2900
  %v2902 = vand.u32 %v2863, 4294901760
  %2903 = vmatpush1.msra.mxu0 %v2902
  %2904 = vmatprep.subr.mxu0 0.0
  %2905 = vmatpush2.msra.mxu0 0.0
  %2906 = vmatprep.subr.mxu0 0.0
  %2907 = vmatpush2.msra.mxu0 0.0
  %2908 = vmatprep.subr.mxu0 0.0
  %2909 = vmatpush2.msra.mxu0 0.0
  %2910 = vmatprep.subr.mxu0 0.0
  %2911 = vmatpush2.msra.mxu0 0.0
  %2912 = vmatprep.subr.mxu0 0.0
  %2913 = vmatpush2.msra.mxu0 0.0
  %2914 = vmatprep.subr.mxu0 0.0
  %2915 = vmatpush2.msra.mxu0 0.0
  %2916 = vmatprep.subr.mxu0 0.0
  %2917 = vmatpush2.msra.mxu0 0.0
  %2918 = vmatprep.subr.mxu0 0.0
  %2919 = vmatpush2.msra.mxu0 0.0
  %2920 = vmatprep.subr.mxu0 0.0
  %2921 = vmatpush2.msra.mxu0 0.0
  %2922 = vmatprep.subr.mxu0 0.0
  %2923 = vmatpush2.msra.mxu0 0.0
  %2924 = vmatprep.subr.mxu0 0.0
  %2925 = vmatpush2.msra.mxu0 0.0
  %2926 = vmatprep.subr.mxu0 0.0
  %2927 = vmatpush2.msra.mxu0 0.0
  %2928 = vmatprep.subr.mxu0 0.0
  %2929 = vmatpush2.msra.mxu0 0.0
  %2930 = vmatprep.subr.mxu0 0.0
  %2931 = vmatpush2.msra.mxu0 0.0
  %2932 = vmatprep.subr.mxu0 0.0
  %2933 = vmatpush2.msra.mxu0 0.0
  %2934 = vmatprep.subr.mxu0 0.0
  %2935 = vmatpush2.msra.mxu0 0.0
  %2936 = vmatprep.mubr.f32.mxu0 0.0
  %v2937 = vand.u32 %v2868, 4294901760
  %v2938 = vsub.f32 %v2868, %v2937
  %v2939 = vand.u32 %v2938, 4294901760
  %v2940 = vsub.f32 %v2938, %v2939
  %v2941 = vand.u32 %v2940, 4294901760
  %2942 = vmatmul.mubr.f32.gmra.mxu0 %v2941
  %v2943 = vpop.f32.mrf.mxu0
  %v2944 = vadd.f32 0.0, %v2943
  %v2945 = vpop.f32.mrf.mxu0
  %v2946 = vadd.f32 0.0, %v2945
  %2947 = vdwg.mxu0
  %2948 = vmatprep.subr.mxu0 0.0
  %2949 = vmatpush1.msra.mxu0 0.0
  %2950 = vmatprep.subr.mxu0 0.0
  %2951 = vmatpush1.msra.mxu0 0.0
  %2952 = vmatprep.subr.mxu0 0.0
  %2953 = vmatpush1.msra.mxu0 0.0
  %2954 = vmatprep.subr.mxu0 0.0
  %2955 = vmatpush1.msra.mxu0 0.0
  %2956 = vmatprep.subr.mxu0 0.0
  %2957 = vmatpush1.msra.mxu0 0.0
  %2958 = vmatprep.subr.mxu0 0.0
  %2959 = vmatpush1.msra.mxu0 0.0
  %2960 = vmatprep.subr.mxu0 0.0
  %2961 = vmatpush1.msra.mxu0 0.0
  %2962 = vmatprep.subr.mxu0 0.0
  %2963 = vmatpush1.msra.mxu0 0.0
  %2964 = vmatprep.subr.mxu0 0.0
  %2965 = vmatpush1.msra.mxu0 0.0
  %2966 = vmatprep.subr.mxu0 0.0
  %2967 = vmatpush1.msra.mxu0 0.0
  %2968 = vmatprep.subr.mxu0 0.0
  %2969 = vmatpush1.msra.mxu0 0.0
  %2970 = vmatprep.subr.mxu0 0.0
  %2971 = vmatpush1.msra.mxu0 0.0
  %2972 = vmatprep.subr.mxu0 0.0
  %2973 = vmatpush1.msra.mxu0 0.0
  %2974 = vmatprep.subr.mxu0 0.0
  %2975 = vmatpush1.msra.mxu0 0.0
  %2976 = vmatprep.subr.mxu0 0.0
  %2977 = vmatpush1.msra.mxu0 0.0
  %v2978 = vand.u32 %v2862, 4294901760
  %v2979 = vsub.f32 %v2862, %v2978
  %v2980 = vand.u32 %v2979, 4294901760
  %v2981 = vsub.f32 %v2979, %v2980
  %v2982 = vand.u32 %v2981, 4294901760
  %2983 = vmatprep.subr.mxu0 %v2982
  %v2984 = vand.u32 %v2863, 4294901760
  %v2985 = vsub.f32 %v2863, %v2984
  %v2986 = vand.u32 %v2985, 4294901760
  %v2987 = vsub.f32 %v2985, %v2986
  %v2988 = vand.u32 %v2987, 4294901760
  %2989 = vmatpush1.msra.mxu0 %v2988
  %2990 = vmatprep.subr.mxu0 0.0
  %2991 = vmatpush2.msra.mxu0 0.0
  %2992 = vmatprep.subr.mxu0 0.0
  %2993 = vmatpush2.msra.mxu0 0.0
  %2994 = vmatprep.subr.mxu0 0.0
  %2995 = vmatpush2.msra.mxu0 0.0
  %2996 = vmatprep.subr.mxu0 0.0
  %2997 = vmatpush2.msra.mxu0 0.0
  %2998 = vmatprep.subr.mxu0 0.0
  %2999 = vmatpush2.msra.mxu0 0.0
  %3000 = vmatprep.subr.mxu0 0.0
  %3001 = vmatpush2.msra.mxu0 0.0
  %3002 = vmatprep.subr.mxu0 0.0
  %3003 = vmatpush2.msra.mxu0 0.0
  %3004 = vmatprep.subr.mxu0 0.0
  %3005 = vmatpush2.msra.mxu0 0.0
  %3006 = vmatprep.subr.mxu0 0.0
  %3007 = vmatpush2.msra.mxu0 0.0
  %3008 = vmatprep.subr.mxu0 0.0
  %3009 = vmatpush2.msra.mxu0 0.0
  %3010 = vmatprep.subr.mxu0 0.0
  %3011 = vmatpush2.msra.mxu0 0.0
  %3012 = vmatprep.subr.mxu0 0.0
  %3013 = vmatpush2.msra.mxu0 0.0
  %3014 = vmatprep.subr.mxu0 0.0
  %3015 = vmatpush2.msra.mxu0 0.0
  %3016 = vmatprep.subr.mxu0 0.0
  %3017 = vmatpush2.msra.mxu0 0.0
  %3018 = vmatprep.subr.mxu0 0.0
  %3019 = vmatpush2.msra.mxu0 0.0
  %3020 = vmatprep.subr.mxu0 0.0
  %3021 = vmatpush2.msra.mxu0 0.0
  %3022 = vmatprep.mubr.f32.mxu0 0.0
  %v3023 = vand.u32 %v2868, 4294901760
  %3024 = vmatmul.mubr.f32.gmra.mxu0 %v3023
  %v3025 = vpop.f32.mrf.mxu0
  %v3026 = vadd.f32 %v2944, %v3025
  %v3027 = vpop.f32.mrf.mxu0
  %v3028 = vadd.f32 %v2946, %v3027
  %3029 = vdwg.mxu0
  %3030 = vmatprep.subr.mxu0 0.0
  %3031 = vmatpush1.msra.mxu0 0.0
  %3032 = vmatprep.subr.mxu0 0.0
  %3033 = vmatpush1.msra.mxu0 0.0
  %3034 = vmatprep.subr.mxu0 0.0
  %3035 = vmatpush1.msra.mxu0 0.0
  %3036 = vmatprep.subr.mxu0 0.0
  %3037 = vmatpush1.msra.mxu0 0.0
  %3038 = vmatprep.subr.mxu0 0.0
  %3039 = vmatpush1.msra.mxu0 0.0
  %3040 = vmatprep.subr.mxu0 0.0
  %3041 = vmatpush1.msra.mxu0 0.0
  %3042 = vmatprep.subr.mxu0 0.0
  %3043 = vmatpush1.msra.mxu0 0.0
  %3044 = vmatprep.subr.mxu0 0.0
  %3045 = vmatpush1.msra.mxu0 0.0
  %3046 = vmatprep.subr.mxu0 0.0
  %3047 = vmatpush1.msra.mxu0 0.0
  %3048 = vmatprep.subr.mxu0 0.0
  %3049 = vmatpush1.msra.mxu0 0.0
  %3050 = vmatprep.subr.mxu0 0.0
  %3051 = vmatpush1.msra.mxu0 0.0
  %3052 = vmatprep.subr.mxu0 0.0
  %3053 = vmatpush1.msra.mxu0 0.0
  %3054 = vmatprep.subr.mxu0 0.0
  %3055 = vmatpush1.msra.mxu0 0.0
  %3056 = vmatprep.subr.mxu0 0.0
  %3057 = vmatpush1.msra.mxu0 0.0
  %3058 = vmatprep.subr.mxu0 0.0
  %3059 = vmatpush1.msra.mxu0 0.0
  %v3060 = vand.u32 %v2862, 4294901760
  %v3061 = vsub.f32 %v2862, %v3060
  %3062 = vmatprep.subr.mxu0 %v3061
  %v3063 = vand.u32 %v2863, 4294901760
  %v3064 = vsub.f32 %v2863, %v3063
  %3065 = vmatpush1.msra.mxu0 %v3064
  %3066 = vmatprep.subr.mxu0 0.0
  %3067 = vmatpush2.msra.mxu0 0.0
  %3068 = vmatprep.subr.mxu0 0.0
  %3069 = vmatpush2.msra.mxu0 0.0
  %3070 = vmatprep.subr.mxu0 0.0
  %3071 = vmatpush2.msra.mxu0 0.0
  %3072 = vmatprep.subr.mxu0 0.0
  %3073 = vmatpush2.msra.mxu0 0.0
  %3074 = vmatprep.subr.mxu0 0.0
  %3075 = vmatpush2.msra.mxu0 0.0
  %3076 = vmatprep.subr.mxu0 0.0
  %3077 = vmatpush2.msra.mxu0 0.0
  %3078 = vmatprep.subr.mxu0 0.0
  %3079 = vmatpush2.msra.mxu0 0.0
  %3080 = vmatprep.subr.mxu0 0.0
  %3081 = vmatpush2.msra.mxu0 0.0
  %3082 = vmatprep.subr.mxu0 0.0
  %3083 = vmatpush2.msra.mxu0 0.0
  %3084 = vmatprep.subr.mxu0 0.0
  %3085 = vmatpush2.msra.mxu0 0.0
  %3086 = vmatprep.subr.mxu0 0.0
  %3087 = vmatpush2.msra.mxu0 0.0
  %3088 = vmatprep.subr.mxu0 0.0
  %3089 = vmatpush2.msra.mxu0 0.0
  %3090 = vmatprep.subr.mxu0 0.0
  %3091 = vmatpush2.msra.mxu0 0.0
  %3092 = vmatprep.subr.mxu0 0.0
  %3093 = vmatpush2.msra.mxu0 0.0
  %3094 = vmatprep.subr.mxu0 0.0
  %3095 = vmatpush2.msra.mxu0 0.0
  %3096 = vmatprep.subr.mxu0 0.0
  %3097 = vmatpush2.msra.mxu0 0.0
  %3098 = vmatprep.mubr.f32.mxu0 0.0
  %v3099 = vand.u32 %v2868, 4294901760
  %v3100 = vsub.f32 %v2868, %v3099
  %3101 = vmatmul.mubr.f32.gmra.mxu0 %v3100
  %v3102 = vpop.f32.mrf.mxu0
  %v3103 = vadd.f32 %v3026, %v3102
  %v3104 = vpop.f32.mrf.mxu0
  %v3105 = vadd.f32 %v3028, %v3104
  %3106 = vdwg.mxu0
  %3107 = vmatprep.subr.mxu0 0.0
  %3108 = vmatpush1.msra.mxu0 0.0
  %3109 = vmatprep.subr.mxu0 0.0
  %3110 = vmatpush1.msra.mxu0 0.0
  %3111 = vmatprep.subr.mxu0 0.0
  %3112 = vmatpush1.msra.mxu0 0.0
  %3113 = vmatprep.subr.mxu0 0.0
  %3114 = vmatpush1.msra.mxu0 0.0
  %3115 = vmatprep.subr.mxu0 0.0
  %3116 = vmatpush1.msra.mxu0 0.0
  %3117 = vmatprep.subr.mxu0 0.0
  %3118 = vmatpush1.msra.mxu0 0.0
  %3119 = vmatprep.subr.mxu0 0.0
  %3120 = vmatpush1.msra.mxu0 0.0
  %3121 = vmatprep.subr.mxu0 0.0
  %3122 = vmatpush1.msra.mxu0 0.0
  %3123 = vmatprep.subr.mxu0 0.0
  %3124 = vmatpush1.msra.mxu0 0.0
  %3125 = vmatprep.subr.mxu0 0.0
  %3126 = vmatpush1.msra.mxu0 0.0
  %3127 = vmatprep.subr.mxu0 0.0
  %3128 = vmatpush1.msra.mxu0 0.0
  %3129 = vmatprep.subr.mxu0 0.0
  %3130 = vmatpush1.msra.mxu0 0.0
  %3131 = vmatprep.subr.mxu0 0.0
  %3132 = vmatpush1.msra.mxu0 0.0
  %3133 = vmatprep.subr.mxu0 0.0
  %3134 = vmatpush1.msra.mxu0 0.0
  %3135 = vmatprep.subr.mxu0 0.0
  %3136 = vmatpush1.msra.mxu0 0.0
  %v3137 = vand.u32 %v2862, 4294901760
  %3138 = vmatprep.subr.mxu0 %v3137
  %v3139 = vand.u32 %v2863, 4294901760
  %3140 = vmatpush1.msra.mxu0 %v3139
  %3141 = vmatprep.subr.mxu0 0.0
  %3142 = vmatpush2.msra.mxu0 0.0
  %3143 = vmatprep.subr.mxu0 0.0
  %3144 = vmatpush2.msra.mxu0 0.0
  %3145 = vmatprep.subr.mxu0 0.0
  %3146 = vmatpush2.msra.mxu0 0.0
  %3147 = vmatprep.subr.mxu0 0.0
  %3148 = vmatpush2.msra.mxu0 0.0
  %3149 = vmatprep.subr.mxu0 0.0
  %3150 = vmatpush2.msra.mxu0 0.0
  %3151 = vmatprep.subr.mxu0 0.0
  %3152 = vmatpush2.msra.mxu0 0.0
  %3153 = vmatprep.subr.mxu0 0.0
  %3154 = vmatpush2.msra.mxu0 0.0
  %3155 = vmatprep.subr.mxu0 0.0
  %3156 = vmatpush2.msra.mxu0 0.0
  %3157 = vmatprep.subr.mxu0 0.0
  %3158 = vmatpush2.msra.mxu0 0.0
  %3159 = vmatprep.subr.mxu0 0.0
  %3160 = vmatpush2.msra.mxu0 0.0
  %3161 = vmatprep.subr.mxu0 0.0
  %3162 = vmatpush2.msra.mxu0 0.0
  %3163 = vmatprep.subr.mxu0 0.0
  %3164 = vmatpush2.msra.mxu0 0.0
  %3165 = vmatprep.subr.mxu0 0.0
  %3166 = vmatpush2.msra.mxu0 0.0
  %3167 = vmatprep.subr.mxu0 0.0
  %3168 = vmatpush2.msra.mxu0 0.0
  %3169 = vmatprep.subr.mxu0 0.0
  %3170 = vmatpush2.msra.mxu0 0.0
  %3171 = vmatprep.subr.mxu0 0.0
  %3172 = vmatpush2.msra.mxu0 0.0
  %3173 = vmatprep.mubr.f32.mxu0 0.0
  %v3174 = vand.u32 %v2868, 4294901760
  %v3175 = vsub.f32 %v2868, %v3174
  %v3176 = vand.u32 %v3175, 4294901760
  %3177 = vmatmul.mubr.f32.gmra.mxu0 %v3176
  %v3178 = vpop.f32.mrf.mxu0
  %v3179 = vadd.f32 %v3103, %v3178
  %v3180 = vpop.f32.mrf.mxu0
  %v3181 = vadd.f32 %v3105, %v3180
  %3182 = vdwg.mxu0
  %3183 = vmatprep.subr.mxu0 0.0
  %3184 = vmatpush1.msra.mxu0 0.0
  %3185 = vmatprep.subr.mxu0 0.0
  %3186 = vmatpush1.msra.mxu0 0.0
  %3187 = vmatprep.subr.mxu0 0.0
  %3188 = vmatpush1.msra.mxu0 0.0
  %3189 = vmatprep.subr.mxu0 0.0
  %3190 = vmatpush1.msra.mxu0 0.0
  %3191 = vmatprep.subr.mxu0 0.0
  %3192 = vmatpush1.msra.mxu0 0.0
  %3193 = vmatprep.subr.mxu0 0.0
  %3194 = vmatpush1.msra.mxu0 0.0
  %3195 = vmatprep.subr.mxu0 0.0
  %3196 = vmatpush1.msra.mxu0 0.0
  %3197 = vmatprep.subr.mxu0 0.0
  %3198 = vmatpush1.msra.mxu0 0.0
  %3199 = vmatprep.subr.mxu0 0.0
  %3200 = vmatpush1.msra.mxu0 0.0
  %3201 = vmatprep.subr.mxu0 0.0
  %3202 = vmatpush1.msra.mxu0 0.0
  %3203 = vmatprep.subr.mxu0 0.0
  %3204 = vmatpush1.msra.mxu0 0.0
  %3205 = vmatprep.subr.mxu0 0.0
  %3206 = vmatpush1.msra.mxu0 0.0
  %3207 = vmatprep.subr.mxu0 0.0
  %3208 = vmatpush1.msra.mxu0 0.0
  %3209 = vmatprep.subr.mxu0 0.0
  %3210 = vmatpush1.msra.mxu0 0.0
  %3211 = vmatprep.subr.mxu0 0.0
  %3212 = vmatpush1.msra.mxu0 0.0
  %v3213 = vand.u32 %v2862, 4294901760
  %v3214 = vsub.f32 %v2862, %v3213
  %v3215 = vand.u32 %v3214, 4294901760
  %3216 = vmatprep.subr.mxu0 %v3215
  %v3217 = vand.u32 %v2863, 4294901760
  %v3218 = vsub.f32 %v2863, %v3217
  %v3219 = vand.u32 %v3218, 4294901760
  %3220 = vmatpush1.msra.mxu0 %v3219
  %3221 = vmatprep.subr.mxu0 0.0
  %3222 = vmatpush2.msra.mxu0 0.0
  %3223 = vmatprep.subr.mxu0 0.0
  %3224 = vmatpush2.msra.mxu0 0.0
  %3225 = vmatprep.subr.mxu0 0.0
  %3226 = vmatpush2.msra.mxu0 0.0
  %3227 = vmatprep.subr.mxu0 0.0
  %3228 = vmatpush2.msra.mxu0 0.0
  %3229 = vmatprep.subr.mxu0 0.0
  %3230 = vmatpush2.msra.mxu0 0.0
  %3231 = vmatprep.subr.mxu0 0.0
  %3232 = vmatpush2.msra.mxu0 0.0
  %3233 = vmatprep.subr.mxu0 0.0
  %3234 = vmatpush2.msra.mxu0 0.0
  %3235 = vmatprep.subr.mxu0 0.0
  %3236 = vmatpush2.msra.mxu0 0.0
  %3237 = vmatprep.subr.mxu0 0.0
  %3238 = vmatpush2.msra.mxu0 0.0
  %3239 = vmatprep.subr.mxu0 0.0
  %3240 = vmatpush2.msra.mxu0 0.0
  %3241 = vmatprep.subr.mxu0 0.0
  %3242 = vmatpush2.msra.mxu0 0.0
  %3243 = vmatprep.subr.mxu0 0.0
  %3244 = vmatpush2.msra.mxu0 0.0
  %3245 = vmatprep.subr.mxu0 0.0
  %3246 = vmatpush2.msra.mxu0 0.0
  %3247 = vmatprep.subr.mxu0 0.0
  %3248 = vmatpush2.msra.mxu0 0.0
  %3249 = vmatprep.subr.mxu0 0.0
  %3250 = vmatpush2.msra.mxu0 0.0
  %3251 = vmatprep.subr.mxu0 0.0
  %3252 = vmatpush2.msra.mxu0 0.0
  %3253 = vmatprep.mubr.f32.mxu0 0.0
  %v3254 = vand.u32 %v2868, 4294901760
  %3255 = vmatmul.mubr.f32.gmra.mxu0 %v3254
  %v3256 = vpop.f32.mrf.mxu0
  %v3257 = vadd.f32 %v3179, %v3256
  %v3258 = vpop.f32.mrf.mxu0
  %v3259 = vadd.f32 %v3181, %v3258
  %3260 = vdwg.mxu0
  %3261 = vmatprep.subr.mxu0 0.0
  %3262 = vmatpush1.msra.mxu0 0.0
  %3263 = vmatprep.subr.mxu0 0.0
  %3264 = vmatpush1.msra.mxu0 0.0
  %3265 = vmatprep.subr.mxu0 0.0
  %3266 = vmatpush1.msra.mxu0 0.0
  %3267 = vmatprep.subr.mxu0 0.0
  %3268 = vmatpush1.msra.mxu0 0.0
  %3269 = vmatprep.subr.mxu0 0.0
  %3270 = vmatpush1.msra.mxu0 0.0
  %3271 = vmatprep.subr.mxu0 0.0
  %3272 = vmatpush1.msra.mxu0 0.0
  %3273 = vmatprep.subr.mxu0 0.0
  %3274 = vmatpush1.msra.mxu0 0.0
  %3275 = vmatprep.subr.mxu0 0.0
  %3276 = vmatpush1.msra.mxu0 0.0
  %3277 = vmatprep.subr.mxu0 0.0
  %3278 = vmatpush1.msra.mxu0 0.0
  %3279 = vmatprep.subr.mxu0 0.0
  %3280 = vmatpush1.msra.mxu0 0.0
  %3281 = vmatprep.subr.mxu0 0.0
  %3282 = vmatpush1.msra.mxu0 0.0
  %3283 = vmatprep.subr.mxu0 0.0
  %3284 = vmatpush1.msra.mxu0 0.0
  %3285 = vmatprep.subr.mxu0 0.0
  %3286 = vmatpush1.msra.mxu0 0.0
  %3287 = vmatprep.subr.mxu0 0.0
  %3288 = vmatpush1.msra.mxu0 0.0
  %3289 = vmatprep.subr.mxu0 0.0
  %3290 = vmatpush1.msra.mxu0 0.0
  %v3291 = vand.u32 %v2862, 4294901760
  %3292 = vmatprep.subr.mxu0 %v3291
  %v3293 = vand.u32 %v2863, 4294901760
  %3294 = vmatpush1.msra.mxu0 %v3293
  %3295 = vmatprep.subr.mxu0 0.0
  %3296 = vmatpush2.msra.mxu0 0.0
  %3297 = vmatprep.subr.mxu0 0.0
  %3298 = vmatpush2.msra.mxu0 0.0
  %3299 = vmatprep.subr.mxu0 0.0
  %3300 = vmatpush2.msra.mxu0 0.0
  %3301 = vmatprep.subr.mxu0 0.0
  %3302 = vmatpush2.msra.mxu0 0.0
  %3303 = vmatprep.subr.mxu0 0.0
  %3304 = vmatpush2.msra.mxu0 0.0
  %3305 = vmatprep.subr.mxu0 0.0
  %3306 = vmatpush2.msra.mxu0 0.0
  %3307 = vmatprep.subr.mxu0 0.0
  %3308 = vmatpush2.msra.mxu0 0.0
  %3309 = vmatprep.subr.mxu0 0.0
  %3310 = vmatpush2.msra.mxu0 0.0
  %3311 = vmatprep.subr.mxu0 0.0
  %3312 = vmatpush2.msra.mxu0 0.0
  %3313 = vmatprep.subr.mxu0 0.0
  %3314 = vmatpush2.msra.mxu0 0.0
  %3315 = vmatprep.subr.mxu0 0.0
  %3316 = vmatpush2.msra.mxu0 0.0
  %3317 = vmatprep.subr.mxu0 0.0
  %3318 = vmatpush2.msra.mxu0 0.0
  %3319 = vmatprep.subr.mxu0 0.0
  %3320 = vmatpush2.msra.mxu0 0.0
  %3321 = vmatprep.subr.mxu0 0.0
  %3322 = vmatpush2.msra.mxu0 0.0
  %3323 = vmatprep.subr.mxu0 0.0
  %3324 = vmatpush2.msra.mxu0 0.0
  %3325 = vmatprep.subr.mxu0 0.0
  %3326 = vmatpush2.msra.mxu0 0.0
  %3327 = vmatprep.mubr.f32.mxu0 0.0
  %v3328 = vand.u32 %v2868, 4294901760
  %3329 = vmatmul.mubr.f32.gmra.mxu0 %v3328
  %v3330 = vpop.f32.mrf.mxu0
  %v3331 = vadd.f32 %v3257, %v3330
  %v3332 = vpop.f32.mrf.mxu0
  %v3333 = vadd.f32 %v3259, %v3332
  %3334 = vdwg.mxu0
  %3335 = vmatprep.subr.mxu0 0.0
  %3336 = vmatpush1.msra.mxu0 0.0
  %3337 = vmatprep.subr.mxu0 0.0
  %3338 = vmatpush1.msra.mxu0 0.0
  %3339 = vmatprep.subr.mxu0 0.0
  %3340 = vmatpush1.msra.mxu0 0.0
  %3341 = vmatprep.subr.mxu0 0.0
  %3342 = vmatpush1.msra.mxu0 0.0
  %3343 = vmatprep.subr.mxu0 0.0
  %3344 = vmatpush1.msra.mxu0 0.0
  %3345 = vmatprep.subr.mxu0 0.0
  %3346 = vmatpush1.msra.mxu0 0.0
  %3347 = vmatprep.subr.mxu0 0.0
  %3348 = vmatpush1.msra.mxu0 0.0
  %3349 = vmatprep.subr.mxu0 0.0
  %3350 = vmatpush1.msra.mxu0 0.0
  %3351 = vmatprep.subr.mxu0 0.0
  %3352 = vmatpush1.msra.mxu0 0.0
  %3353 = vmatprep.subr.mxu0 0.0
  %3354 = vmatpush1.msra.mxu0 0.0
  %3355 = vmatprep.subr.mxu0 0.0
  %3356 = vmatpush1.msra.mxu0 0.0
  %3357 = vmatprep.subr.mxu0 0.0
  %3358 = vmatpush1.msra.mxu0 0.0
  %3359 = vmatprep.subr.mxu0 0.0
  %3360 = vmatpush1.msra.mxu0 0.0
  %3361 = vmatprep.subr.mxu0 0.0
  %3362 = vmatpush1.msra.mxu0 0.0
  %3363 = vmatprep.subr.mxu0 0.0
  %3364 = vmatpush1.msra.mxu0 0.0
  %v3365 = vand.u32 %v2864, 4294901760
  %3366 = vmatprep.subr.mxu0 %v3365
  %v3367 = vand.u32 %v2861, 4294901760
  %3368 = vmatpush1.msra.mxu0 %v3367
  %3369 = vmatprep.subr.mxu0 0.0
  %3370 = vmatpush2.msra.mxu0 0.0
  %3371 = vmatprep.subr.mxu0 0.0
  %3372 = vmatpush2.msra.mxu0 0.0
  %3373 = vmatprep.subr.mxu0 0.0
  %3374 = vmatpush2.msra.mxu0 0.0
  %3375 = vmatprep.subr.mxu0 0.0
  %3376 = vmatpush2.msra.mxu0 0.0
  %3377 = vmatprep.subr.mxu0 0.0
  %3378 = vmatpush2.msra.mxu0 0.0
  %3379 = vmatprep.subr.mxu0 0.0
  %3380 = vmatpush2.msra.mxu0 0.0
  %3381 = vmatprep.subr.mxu0 0.0
  %3382 = vmatpush2.msra.mxu0 0.0
  %3383 = vmatprep.subr.mxu0 0.0
  %3384 = vmatpush2.msra.mxu0 0.0
  %3385 = vmatprep.subr.mxu0 0.0
  %3386 = vmatpush2.msra.mxu0 0.0
  %3387 = vmatprep.subr.mxu0 0.0
  %3388 = vmatpush2.msra.mxu0 0.0
  %3389 = vmatprep.subr.mxu0 0.0
  %3390 = vmatpush2.msra.mxu0 0.0
  %3391 = vmatprep.subr.mxu0 0.0
  %3392 = vmatpush2.msra.mxu0 0.0
  %3393 = vmatprep.subr.mxu0 0.0
  %3394 = vmatpush2.msra.mxu0 0.0
  %3395 = vmatprep.subr.mxu0 0.0
  %3396 = vmatpush2.msra.mxu0 0.0
  %3397 = vmatprep.subr.mxu0 0.0
  %3398 = vmatpush2.msra.mxu0 0.0
  %3399 = vmatprep.subr.mxu0 0.0
  %3400 = vmatpush2.msra.mxu0 0.0
  %3401 = vmatprep.mubr.f32.mxu0 0.0
  %v3402 = vand.u32 %v2868, 4294901760
  %v3403 = vsub.f32 %v2868, %v3402
  %v3404 = vand.u32 %v3403, 4294901760
  %v3405 = vsub.f32 %v3403, %v3404
  %v3406 = vand.u32 %v3405, 4294901760
  %3407 = vmatmul.mubr.f32.gmra.mxu0 %v3406
  %v3408 = vpop.f32.mrf.mxu0
  %v3409 = vadd.f32 0.0, %v3408
  %v3410 = vpop.f32.mrf.mxu0
  %v3411 = vadd.f32 0.0, %v3410
  %3412 = vdwg.mxu0
  %3413 = vmatprep.subr.mxu0 0.0
  %3414 = vmatpush1.msra.mxu0 0.0
  %3415 = vmatprep.subr.mxu0 0.0
  %3416 = vmatpush1.msra.mxu0 0.0
  %3417 = vmatprep.subr.mxu0 0.0
  %3418 = vmatpush1.msra.mxu0 0.0
  %3419 = vmatprep.subr.mxu0 0.0
  %3420 = vmatpush1.msra.mxu0 0.0
  %3421 = vmatprep.subr.mxu0 0.0
  %3422 = vmatpush1.msra.mxu0 0.0
  %3423 = vmatprep.subr.mxu0 0.0
  %3424 = vmatpush1.msra.mxu0 0.0
  %3425 = vmatprep.subr.mxu0 0.0
  %3426 = vmatpush1.msra.mxu0 0.0
  %3427 = vmatprep.subr.mxu0 0.0
  %3428 = vmatpush1.msra.mxu0 0.0
  %3429 = vmatprep.subr.mxu0 0.0
  %3430 = vmatpush1.msra.mxu0 0.0
  %3431 = vmatprep.subr.mxu0 0.0
  %3432 = vmatpush1.msra.mxu0 0.0
  %3433 = vmatprep.subr.mxu0 0.0
  %3434 = vmatpush1.msra.mxu0 0.0
  %3435 = vmatprep.subr.mxu0 0.0
  %3436 = vmatpush1.msra.mxu0 0.0
  %3437 = vmatprep.subr.mxu0 0.0
  %3438 = vmatpush1.msra.mxu0 0.0
  %3439 = vmatprep.subr.mxu0 0.0
  %3440 = vmatpush1.msra.mxu0 0.0
  %3441 = vmatprep.subr.mxu0 0.0
  %3442 = vmatpush1.msra.mxu0 0.0
  %v3443 = vand.u32 %v2864, 4294901760
  %v3444 = vsub.f32 %v2864, %v3443
  %v3445 = vand.u32 %v3444, 4294901760
  %v3446 = vsub.f32 %v3444, %v3445
  %v3447 = vand.u32 %v3446, 4294901760
  %3448 = vmatprep.subr.mxu0 %v3447
  %v3449 = vand.u32 %v2861, 4294901760
  %v3450 = vsub.f32 %v2861, %v3449
  %v3451 = vand.u32 %v3450, 4294901760
  %v3452 = vsub.f32 %v3450, %v3451
  %v3453 = vand.u32 %v3452, 4294901760
  %3454 = vmatpush1.msra.mxu0 %v3453
  %3455 = vmatprep.subr.mxu0 0.0
  %3456 = vmatpush2.msra.mxu0 0.0
  %3457 = vmatprep.subr.mxu0 0.0
  %3458 = vmatpush2.msra.mxu0 0.0
  %3459 = vmatprep.subr.mxu0 0.0
  %3460 = vmatpush2.msra.mxu0 0.0
  %3461 = vmatprep.subr.mxu0 0.0
  %3462 = vmatpush2.msra.mxu0 0.0
  %3463 = vmatprep.subr.mxu0 0.0
  %3464 = vmatpush2.msra.mxu0 0.0
  %3465 = vmatprep.subr.mxu0 0.0
  %3466 = vmatpush2.msra.mxu0 0.0
  %3467 = vmatprep.subr.mxu0 0.0
  %3468 = vmatpush2.msra.mxu0 0.0
  %3469 = vmatprep.subr.mxu0 0.0
  %3470 = vmatpush2.msra.mxu0 0.0
  %3471 = vmatprep.subr.mxu0 0.0
  %3472 = vmatpush2.msra.mxu0 0.0
  %3473 = vmatprep.subr.mxu0 0.0
  %3474 = vmatpush2.msra.mxu0 0.0
  %3475 = vmatprep.subr.mxu0 0.0
  %3476 = vmatpush2.msra.mxu0 0.0
  %3477 = vmatprep.subr.mxu0 0.0
  %3478 = vmatpush2.msra.mxu0 0.0
  %3479 = vmatprep.subr.mxu0 0.0
  %3480 = vmatpush2.msra.mxu0 0.0
  %3481 = vmatprep.subr.mxu0 0.0
  %3482 = vmatpush2.msra.mxu0 0.0
  %3483 = vmatprep.subr.mxu0 0.0
  %3484 = vmatpush2.msra.mxu0 0.0
  %3485 = vmatprep.subr.mxu0 0.0
  %3486 = vmatpush2.msra.mxu0 0.0
  %3487 = vmatprep.mubr.f32.mxu0 0.0
  %v3488 = vand.u32 %v2868, 4294901760
  %3489 = vmatmul.mubr.f32.gmra.mxu0 %v3488
  %v3490 = vpop.f32.mrf.mxu0
  %v3491 = vadd.f32 %v3409, %v3490
  %v3492 = vpop.f32.mrf.mxu0
  %v3493 = vadd.f32 %v3411, %v3492
  %3494 = vdwg.mxu0
  %3495 = vmatprep.subr.mxu0 0.0
  %3496 = vmatpush1.msra.mxu0 0.0
  %3497 = vmatprep.subr.mxu0 0.0
  %3498 = vmatpush1.msra.mxu0 0.0
  %3499 = vmatprep.subr.mxu0 0.0
  %3500 = vmatpush1.msra.mxu0 0.0
  %3501 = vmatprep.subr.mxu0 0.0
  %3502 = vmatpush1.msra.mxu0 0.0
  %3503 = vmatprep.subr.mxu0 0.0
  %3504 = vmatpush1.msra.mxu0 0.0
  %3505 = vmatprep.subr.mxu0 0.0
  %3506 = vmatpush1.msra.mxu0 0.0
  %3507 = vmatprep.subr.mxu0 0.0
  %3508 = vmatpush1.msra.mxu0 0.0
  %3509 = vmatprep.subr.mxu0 0.0
  %3510 = vmatpush1.msra.mxu0 0.0
  %3511 = vmatprep.subr.mxu0 0.0
  %3512 = vmatpush1.msra.mxu0 0.0
  %3513 = vmatprep.subr.mxu0 0.0
  %3514 = vmatpush1.msra.mxu0 0.0
  %3515 = vmatprep.subr.mxu0 0.0
  %3516 = vmatpush1.msra.mxu0 0.0
  %3517 = vmatprep.subr.mxu0 0.0
  %3518 = vmatpush1.msra.mxu0 0.0
  %3519 = vmatprep.subr.mxu0 0.0
  %3520 = vmatpush1.msra.mxu0 0.0
  %3521 = vmatprep.subr.mxu0 0.0
  %3522 = vmatpush1.msra.mxu0 0.0
  %3523 = vmatprep.subr.mxu0 0.0
  %3524 = vmatpush1.msra.mxu0 0.0
  %v3525 = vand.u32 %v2864, 4294901760
  %v3526 = vsub.f32 %v2864, %v3525
  %3527 = vmatprep.subr.mxu0 %v3526
  %v3528 = vand.u32 %v2861, 4294901760
  %v3529 = vsub.f32 %v2861, %v3528
  %3530 = vmatpush1.msra.mxu0 %v3529
  %3531 = vmatprep.subr.mxu0 0.0
  %3532 = vmatpush2.msra.mxu0 0.0
  %3533 = vmatprep.subr.mxu0 0.0
  %3534 = vmatpush2.msra.mxu0 0.0
  %3535 = vmatprep.subr.mxu0 0.0
  %3536 = vmatpush2.msra.mxu0 0.0
  %3537 = vmatprep.subr.mxu0 0.0
  %3538 = vmatpush2.msra.mxu0 0.0
  %3539 = vmatprep.subr.mxu0 0.0
  %3540 = vmatpush2.msra.mxu0 0.0
  %3541 = vmatprep.subr.mxu0 0.0
  %3542 = vmatpush2.msra.mxu0 0.0
  %3543 = vmatprep.subr.mxu0 0.0
  %3544 = vmatpush2.msra.mxu0 0.0
  %3545 = vmatprep.subr.mxu0 0.0
  %3546 = vmatpush2.msra.mxu0 0.0
  %3547 = vmatprep.subr.mxu0 0.0
  %3548 = vmatpush2.msra.mxu0 0.0
  %3549 = vmatprep.subr.mxu0 0.0
  %3550 = vmatpush2.msra.mxu0 0.0
  %3551 = vmatprep.subr.mxu0 0.0
  %3552 = vmatpush2.msra.mxu0 0.0
  %3553 = vmatprep.subr.mxu0 0.0
  %3554 = vmatpush2.msra.mxu0 0.0
  %3555 = vmatprep.subr.mxu0 0.0
  %3556 = vmatpush2.msra.mxu0 0.0
  %3557 = vmatprep.subr.mxu0 0.0
  %3558 = vmatpush2.msra.mxu0 0.0
  %3559 = vmatprep.subr.mxu0 0.0
  %3560 = vmatpush2.msra.mxu0 0.0
  %3561 = vmatprep.subr.mxu0 0.0
  %3562 = vmatpush2.msra.mxu0 0.0
  %3563 = vmatprep.mubr.f32.mxu0 0.0
  %v3564 = vand.u32 %v2868, 4294901760
  %v3565 = vsub.f32 %v2868, %v3564
  %3566 = vmatmul.mubr.f32.gmra.mxu0 %v3565
  %v3567 = vpop.f32.mrf.mxu0
  %v3568 = vadd.f32 %v3491, %v3567
  %v3569 = vpop.f32.mrf.mxu0
  %v3570 = vadd.f32 %v3493, %v3569
  %3571 = vdwg.mxu0
  %3572 = vmatprep.subr.mxu0 0.0
  %3573 = vmatpush1.msra.mxu0 0.0
  %3574 = vmatprep.subr.mxu0 0.0
  %3575 = vmatpush1.msra.mxu0 0.0
  %3576 = vmatprep.subr.mxu0 0.0
  %3577 = vmatpush1.msra.mxu0 0.0
  %3578 = vmatprep.subr.mxu0 0.0
  %3579 = vmatpush1.msra.mxu0 0.0
  %3580 = vmatprep.subr.mxu0 0.0
  %3581 = vmatpush1.msra.mxu0 0.0
  %3582 = vmatprep.subr.mxu0 0.0
  %3583 = vmatpush1.msra.mxu0 0.0
  %3584 = vmatprep.subr.mxu0 0.0
  %3585 = vmatpush1.msra.mxu0 0.0
  %3586 = vmatprep.subr.mxu0 0.0
  %3587 = vmatpush1.msra.mxu0 0.0
  %3588 = vmatprep.subr.mxu0 0.0
  %3589 = vmatpush1.msra.mxu0 0.0
  %3590 = vmatprep.subr.mxu0 0.0
  %3591 = vmatpush1.msra.mxu0 0.0
  %3592 = vmatprep.subr.mxu0 0.0
  %3593 = vmatpush1.msra.mxu0 0.0
  %3594 = vmatprep.subr.mxu0 0.0
  %3595 = vmatpush1.msra.mxu0 0.0
  %3596 = vmatprep.subr.mxu0 0.0
  %3597 = vmatpush1.msra.mxu0 0.0
  %3598 = vmatprep.subr.mxu0 0.0
  %3599 = vmatpush1.msra.mxu0 0.0
  %3600 = vmatprep.subr.mxu0 0.0
  %3601 = vmatpush1.msra.mxu0 0.0
  %v3602 = vand.u32 %v2864, 4294901760
  %3603 = vmatprep.subr.mxu0 %v3602
  %v3604 = vand.u32 %v2861, 4294901760
  %3605 = vmatpush1.msra.mxu0 %v3604
  %3606 = vmatprep.subr.mxu0 0.0
  %3607 = vmatpush2.msra.mxu0 0.0
  %3608 = vmatprep.subr.mxu0 0.0
  %3609 = vmatpush2.msra.mxu0 0.0
  %3610 = vmatprep.subr.mxu0 0.0
  %3611 = vmatpush2.msra.mxu0 0.0
  %3612 = vmatprep.subr.mxu0 0.0
  %3613 = vmatpush2.msra.mxu0 0.0
  %3614 = vmatprep.subr.mxu0 0.0
  %3615 = vmatpush2.msra.mxu0 0.0
  %3616 = vmatprep.subr.mxu0 0.0
  %3617 = vmatpush2.msra.mxu0 0.0
  %3618 = vmatprep.subr.mxu0 0.0
  %3619 = vmatpush2.msra.mxu0 0.0
  %3620 = vmatprep.subr.mxu0 0.0
  %3621 = vmatpush2.msra.mxu0 0.0
  %3622 = vmatprep.subr.mxu0 0.0
  %3623 = vmatpush2.msra.mxu0 0.0
  %3624 = vmatprep.subr.mxu0 0.0
  %3625 = vmatpush2.msra.mxu0 0.0
  %3626 = vmatprep.subr.mxu0 0.0
  %3627 = vmatpush2.msra.mxu0 0.0
  %3628 = vmatprep.subr.mxu0 0.0
  %3629 = vmatpush2.msra.mxu0 0.0
  %3630 = vmatprep.subr.mxu0 0.0
  %3631 = vmatpush2.msra.mxu0 0.0
  %3632 = vmatprep.subr.mxu0 0.0
  %3633 = vmatpush2.msra.mxu0 0.0
  %3634 = vmatprep.subr.mxu0 0.0
  %3635 = vmatpush2.msra.mxu0 0.0
  %3636 = vmatprep.subr.mxu0 0.0
  %3637 = vmatpush2.msra.mxu0 0.0
  %3638 = vmatprep.mubr.f32.mxu0 0.0
  %v3639 = vand.u32 %v2868, 4294901760
  %v3640 = vsub.f32 %v2868, %v3639
  %v3641 = vand.u32 %v3640, 4294901760
  %3642 = vmatmul.mubr.f32.gmra.mxu0 %v3641
  %v3643 = vpop.f32.mrf.mxu0
  %v3644 = vadd.f32 %v3568, %v3643
  %v3645 = vpop.f32.mrf.mxu0
  %v3646 = vadd.f32 %v3570, %v3645
  %3647 = vdwg.mxu0
  %3648 = vmatprep.subr.mxu0 0.0
  %3649 = vmatpush1.msra.mxu0 0.0
  %3650 = vmatprep.subr.mxu0 0.0
  %3651 = vmatpush1.msra.mxu0 0.0
  %3652 = vmatprep.subr.mxu0 0.0
  %3653 = vmatpush1.msra.mxu0 0.0
  %3654 = vmatprep.subr.mxu0 0.0
  %3655 = vmatpush1.msra.mxu0 0.0
  %3656 = vmatprep.subr.mxu0 0.0
  %3657 = vmatpush1.msra.mxu0 0.0
  %3658 = vmatprep.subr.mxu0 0.0
  %3659 = vmatpush1.msra.mxu0 0.0
  %3660 = vmatprep.subr.mxu0 0.0
  %3661 = vmatpush1.msra.mxu0 0.0
  %3662 = vmatprep.subr.mxu0 0.0
  %3663 = vmatpush1.msra.mxu0 0.0
  %3664 = vmatprep.subr.mxu0 0.0
  %3665 = vmatpush1.msra.mxu0 0.0
  %3666 = vmatprep.subr.mxu0 0.0
  %3667 = vmatpush1.msra.mxu0 0.0
  %3668 = vmatprep.subr.mxu0 0.0
  %3669 = vmatpush1.msra.mxu0 0.0
  %3670 = vmatprep.subr.mxu0 0.0
  %3671 = vmatpush1.msra.mxu0 0.0
  %3672 = vmatprep.subr.mxu0 0.0
  %3673 = vmatpush1.msra.mxu0 0.0
  %3674 = vmatprep.subr.mxu0 0.0
  %3675 = vmatpush1.msra.mxu0 0.0
  %3676 = vmatprep.subr.mxu0 0.0
  %3677 = vmatpush1.msra.mxu0 0.0
  %v3678 = vand.u32 %v2864, 4294901760
  %v3679 = vsub.f32 %v2864, %v3678
  %v3680 = vand.u32 %v3679, 4294901760
  %3681 = vmatprep.subr.mxu0 %v3680
  %v3682 = vand.u32 %v2861, 4294901760
  %v3683 = vsub.f32 %v2861, %v3682
  %v3684 = vand.u32 %v3683, 4294901760
  %3685 = vmatpush1.msra.mxu0 %v3684
  %3686 = vmatprep.subr.mxu0 0.0
  %3687 = vmatpush2.msra.mxu0 0.0
  %3688 = vmatprep.subr.mxu0 0.0
  %3689 = vmatpush2.msra.mxu0 0.0
  %3690 = vmatprep.subr.mxu0 0.0
  %3691 = vmatpush2.msra.mxu0 0.0
  %3692 = vmatprep.subr.mxu0 0.0
  %3693 = vmatpush2.msra.mxu0 0.0
  %3694 = vmatprep.subr.mxu0 0.0
  %3695 = vmatpush2.msra.mxu0 0.0
  %3696 = vmatprep.subr.mxu0 0.0
  %3697 = vmatpush2.msra.mxu0 0.0
  %3698 = vmatprep.subr.mxu0 0.0
  %3699 = vmatpush2.msra.mxu0 0.0
  %3700 = vmatprep.subr.mxu0 0.0
  %3701 = vmatpush2.msra.mxu0 0.0
  %3702 = vmatprep.subr.mxu0 0.0
  %3703 = vmatpush2.msra.mxu0 0.0
  %3704 = vmatprep.subr.mxu0 0.0
  %3705 = vmatpush2.msra.mxu0 0.0
  %3706 = vmatprep.subr.mxu0 0.0
  %3707 = vmatpush2.msra.mxu0 0.0
  %3708 = vmatprep.subr.mxu0 0.0
  %3709 = vmatpush2.msra.mxu0 0.0
  %3710 = vmatprep.subr.mxu0 0.0
  %3711 = vmatpush2.msra.mxu0 0.0
  %3712 = vmatprep.subr.mxu0 0.0
  %3713 = vmatpush2.msra.mxu0 0.0
  %3714 = vmatprep.subr.mxu0 0.0
  %3715 = vmatpush2.msra.mxu0 0.0
  %3716 = vmatprep.subr.mxu0 0.0
  %3717 = vmatpush2.msra.mxu0 0.0
  %3718 = vmatprep.mubr.f32.mxu0 0.0
  %v3719 = vand.u32 %v2868, 4294901760
  %3720 = vmatmul.mubr.f32.gmra.mxu0 %v3719
  %v3721 = vpop.f32.mrf.mxu0
  %v3722 = vadd.f32 %v3644, %v3721
  %v3723 = vpop.f32.mrf.mxu0
  %v3724 = vadd.f32 %v3646, %v3723
  %3725 = vdwg.mxu0
  %3726 = vmatprep.subr.mxu0 0.0
  %3727 = vmatpush1.msra.mxu0 0.0
  %3728 = vmatprep.subr.mxu0 0.0
  %3729 = vmatpush1.msra.mxu0 0.0
  %3730 = vmatprep.subr.mxu0 0.0
  %3731 = vmatpush1.msra.mxu0 0.0
  %3732 = vmatprep.subr.mxu0 0.0
  %3733 = vmatpush1.msra.mxu0 0.0
  %3734 = vmatprep.subr.mxu0 0.0
  %3735 = vmatpush1.msra.mxu0 0.0
  %3736 = vmatprep.subr.mxu0 0.0
  %3737 = vmatpush1.msra.mxu0 0.0
  %3738 = vmatprep.subr.mxu0 0.0
  %3739 = vmatpush1.msra.mxu0 0.0
  %3740 = vmatprep.subr.mxu0 0.0
  %3741 = vmatpush1.msra.mxu0 0.0
  %3742 = vmatprep.subr.mxu0 0.0
  %3743 = vmatpush1.msra.mxu0 0.0
  %3744 = vmatprep.subr.mxu0 0.0
  %3745 = vmatpush1.msra.mxu0 0.0
  %3746 = vmatprep.subr.mxu0 0.0
  %3747 = vmatpush1.msra.mxu0 0.0
  %3748 = vmatprep.subr.mxu0 0.0
  %3749 = vmatpush1.msra.mxu0 0.0
  %3750 = vmatprep.subr.mxu0 0.0
  %3751 = vmatpush1.msra.mxu0 0.0
  %3752 = vmatprep.subr.mxu0 0.0
  %3753 = vmatpush1.msra.mxu0 0.0
  %3754 = vmatprep.subr.mxu0 0.0
  %3755 = vmatpush1.msra.mxu0 0.0
  %v3756 = vand.u32 %v2864, 4294901760
  %3757 = vmatprep.subr.mxu0 %v3756
  %v3758 = vand.u32 %v2861, 4294901760
  %3759 = vmatpush1.msra.mxu0 %v3758
  %3760 = vmatprep.subr.mxu0 0.0
  %3761 = vmatpush2.msra.mxu0 0.0
  %3762 = vmatprep.subr.mxu0 0.0
  %3763 = vmatpush2.msra.mxu0 0.0
  %3764 = vmatprep.subr.mxu0 0.0
  %3765 = vmatpush2.msra.mxu0 0.0
  %3766 = vmatprep.subr.mxu0 0.0
  %3767 = vmatpush2.msra.mxu0 0.0
  %3768 = vmatprep.subr.mxu0 0.0
  %3769 = vmatpush2.msra.mxu0 0.0
  %3770 = vmatprep.subr.mxu0 0.0
  %3771 = vmatpush2.msra.mxu0 0.0
  %3772 = vmatprep.subr.mxu0 0.0
  %3773 = vmatpush2.msra.mxu0 0.0
  %3774 = vmatprep.subr.mxu0 0.0
  %3775 = vmatpush2.msra.mxu0 0.0
  %3776 = vmatprep.subr.mxu0 0.0
  %3777 = vmatpush2.msra.mxu0 0.0
  %3778 = vmatprep.subr.mxu0 0.0
  %3779 = vmatpush2.msra.mxu0 0.0
  %3780 = vmatprep.subr.mxu0 0.0
  %3781 = vmatpush2.msra.mxu0 0.0
  %3782 = vmatprep.subr.mxu0 0.0
  %3783 = vmatpush2.msra.mxu0 0.0
  %3784 = vmatprep.subr.mxu0 0.0
  %3785 = vmatpush2.msra.mxu0 0.0
  %3786 = vmatprep.subr.mxu0 0.0
  %3787 = vmatpush2.msra.mxu0 0.0
  %3788 = vmatprep.subr.mxu0 0.0
  %3789 = vmatpush2.msra.mxu0 0.0
  %3790 = vmatprep.subr.mxu0 0.0
  %3791 = vmatpush2.msra.mxu0 0.0
  %3792 = vmatprep.mubr.f32.mxu0 0.0
  %v3793 = vand.u32 %v2868, 4294901760
  %3794 = vmatmul.mubr.f32.gmra.mxu0 %v3793
  %v3795 = vpop.f32.mrf.mxu0
  %v3796 = vadd.f32 %v3722, %v3795
  %v3797 = vpop.f32.mrf.mxu0
  %v3798 = vadd.f32 %v3724, %v3797
  %3799 = vdwg.mxu0
  %v3800 = vadd.f32 %v2848, %v3331
  %v3801 = vadd.f32 %v2849, %v3333
  %v3802 = vadd.f32 %v2850, %v3796
  %v3803 = vadd.f32 %v2851, %v3798
  %3804 = vst [vmem:[%s2] sm:$0xff] %v3800
  %3805 = vst [vmem:[%s2 + $0x8] sm:$0xff] %v3801
  %3806 = vst [vmem:[%s2 + $0x10] sm:$0xff] %v3802
  %3807 = vst [vmem:[%s2 + $0x18] sm:$0xff] %v3803
  // Predicated region
  $region10: #{conv2d_permute_pallas.1} parent=0 // pred_check
    _
  $region11: #{conv2d_permute_pallas.1} parent=0 // pred_check_branch
    %3809 = sbr.rel (0) target = $region13
  $region12: #{conv2d_permute_pallas.1} parent=0 // pred_region
    _
  $region13: #{conv2d_permute_pallas.1} parent=0 // pred_fallthru
    _
  // Predicated region
  $region14: #{conv2d_permute_pallas.1} parent=0 // pred_check
    _
  $region15: #{conv2d_permute_pallas.1} parent=0 // pred_check_branch
    %3811 = sbr.rel (0) target = $region17
  $region16: #{conv2d_permute_pallas.1} parent=0 // pred_region
    _
  $region17: #{conv2d_permute_pallas.1} parent=0 // pred_fallthru
    _

</llo_original>
